<compile_context>
chip_gen: v6e
topology: v6e:2x2x1
jax: 0.10.0
libtpu: 0.0.40
codegen_flags: <defaults>
</compile_context>

<pallas_src>
import math
from functools import partial

import jax
import jax.numpy as jnp
from jax import lax
from jax.experimental import pallas as pl
from jax.experimental.pallas import tpu as pltpu

TILE = 128  # (8,128)-friendly tile in both sublane and lane dims
_VMEM_LIMIT = 32 << 20  # conservative scoped-VMEM budget (fits v5e/v6e/v7x)


def _round_up(x, m):
    return (x + m - 1) // m * m


# ---------------------------------------------------------------------------
# Kernel 1: dense "support" matmul   support = x @ W    (small K / N dims)
# ---------------------------------------------------------------------------
def _dense_kernel(x_ref, w_ref, o_ref):
    o_ref[...] = jnp.dot(
        x_ref[...], w_ref[...], preferred_element_type=jnp.float32
    ).astype(o_ref.dtype)


def dense_matmul(x, w, *, tm=TILE, out_dtype=jnp.bfloat16):
    M, K = x.shape
    _, N = w.shape
    return pl.pallas_call(
        _dense_kernel,
        out_shape=jax.ShapeDtypeStruct((M, N), out_dtype),
        grid=(M // tm,),
        in_specs=[
            pl.BlockSpec((tm, K), lambda i: (i, 0)),
            pl.BlockSpec((K, N), lambda i: (0, 0)),   # weight resident
        ],
        out_specs=pl.BlockSpec((tm, N), lambda i: (i, 0)),
        compiler_params=pltpu.CompilerParams(
            dimension_semantics=("parallel",),
            vmem_limit_bytes=_VMEM_LIMIT,
        ),
        cost_estimate=pl.CostEstimate(
            flops=2 * M * K * N,
            transcendentals=0,
            bytes_accessed=M * K * x.dtype.itemsize
            + K * N * w.dtype.itemsize
            + M * N * jnp.dtype(out_dtype).itemsize,
        ),
    )(x, w)


# ---------------------------------------------------------------------------
# Kernel 2: GCN mix   out = relu(adj @ support + b)   tiled over (rows, K)
# ---------------------------------------------------------------------------
def _gcn_mix_kernel(adj_ref, sup_ref, b_ref, o_ref, acc_ref):
    k = pl.program_id(1)

    @pl.when(k == 0)
    def _():
        acc_ref[...] = jnp.zeros_like(acc_ref)

    # bf16 operands, f32 accumulation on the MXU.
    acc_ref[...] += jnp.dot(
        adj_ref[...], sup_ref[...], preferred_element_type=jnp.float32
    )

    @pl.when(k == pl.num_programs(1) - 1)
    def _():
        # One-time VPU epilogue: bias + ReLU in f32, then store.
        o_ref[...] = jnp.maximum(acc_ref[...] + b_ref[...], 0.0).astype(o_ref.dtype)


def gcn_mix(adj, support, bias, *, tm=TILE, tk=TILE, out_dtype=jnp.bfloat16):
    M, K = adj.shape
    _, H = support.shape
    return pl.pallas_call(
        _gcn_mix_kernel,
        out_shape=jax.ShapeDtypeStruct((M, H), out_dtype),
        grid=(M // tm, K // tk),
        in_specs=[
            pl.BlockSpec((tm, tk), lambda i, k: (i, k)),
            pl.BlockSpec((tk, H), lambda i, k: (k, 0)),
            pl.BlockSpec((1, H), lambda i, k: (0, 0)),   # bias resident
        ],
        out_specs=pl.BlockSpec((tm, H), lambda i, k: (i, 0)),
        scratch_shapes=[pltpu.VMEM((tm, H), jnp.float32)],
        compiler_params=pltpu.CompilerParams(
            dimension_semantics=("parallel", "arbitrary"),
            vmem_limit_bytes=_VMEM_LIMIT,
        ),
        cost_estimate=pl.CostEstimate(
            flops=2 * M * K * H,
            transcendentals=0,
            bytes_accessed=M * K * adj.dtype.itemsize
            + K * H * support.dtype.itemsize
            + M * H * jnp.dtype(out_dtype).itemsize,
        ),
    )(adj, support, bias)


# ---------------------------------------------------------------------------
# Kernel 3: dot-product decoder   A_pred[i, j] = sigmoid(h_i @ h_j^T)
# ---------------------------------------------------------------------------
def _decoder_kernel(hi_ref, hj_ref, o_ref):
    # Contract on the last dim of both operands: no transpose materialized.
    logits = lax.dot_general(
        hi_ref[...],
        hj_ref[...],
        dimension_numbers=(((1,), (1,)), ((), ())),
        preferred_element_type=jnp.float32,
    )
    o_ref[...] = jax.nn.sigmoid(logits).astype(o_ref.dtype)


def dot_product_decode(h, *, ti=TILE, tj=TILE):
    N, H = h.shape
    return pl.pallas_call(
        _decoder_kernel,
        out_shape=jax.ShapeDtypeStruct((N, N), jnp.float32),
        grid=(N // ti, N // tj),
        in_specs=[
            pl.BlockSpec((ti, H), lambda i, j: (i, 0)),
            pl.BlockSpec((tj, H), lambda i, j: (j, 0)),
        ],
        out_specs=pl.BlockSpec((ti, tj), lambda i, j: (i, j)),
        compiler_params=pltpu.CompilerParams(
            dimension_semantics=("parallel", "parallel"),
            vmem_limit_bytes=_VMEM_LIMIT,
        ),
        cost_estimate=pl.CostEstimate(
            flops=2 * N * N * H,
            transcendentals=N * N,
            bytes_accessed=2 * N * H * h.dtype.itemsize + N * N * 4,
        ),
    )(h, h)


# ---------------------------------------------------------------------------
# Wrapper: pad -> GCN layer 1 -> GCN layer 2 -> decoder -> slice
# ---------------------------------------------------------------------------
@partial(jax.jit, static_argnames=("tile",))
def gae_forward(x, adj, w1, b1, w2, b2, *, tile=TILE):
    N, nfeat = x.shape
    nhid1 = w1.shape[1]
    nhid2 = w2.shape[1]

    # Zero-pad every dim to a multiple of `tile` (128): zero adj rows/cols,
    # zero weight rows/cols and zero bias entries leave the first N / nhid
    # rows/cols of every result unchanged, so slicing at the end is exact.
    Np = _round_up(N, tile)
    Fp = _round_up(nfeat, tile)
    H1p = _round_up(nhid1, tile)
    H2p = _round_up(nhid2, tile)

    xf = jnp.zeros((Np, Fp), jnp.float32).at[:N, :nfeat].set(x)
    adj_bf = jnp.zeros((Np, Np), jnp.bfloat16).at[:N, :N].set(adj.astype(jnp.bfloat16))
    w1p = jnp.zeros((Fp, H1p), jnp.float32).at[:nfeat, :nhid1].set(w1)
    b1p = jnp.zeros((1, H1p), jnp.float32).at[:, :nhid1].set(b1.reshape(1, -1))
    w2p = jnp.zeros((H1p, H2p), jnp.float32).at[:nhid1, :nhid2].set(w2)
    b2p = jnp.zeros((1, H2p), jnp.float32).at[:, :nhid2].set(b2.reshape(1, -1))

    # ---- GCN layer 1: h1 = relu(adj @ (x @ W1) + b1) ----
    sup1 = dense_matmul(xf, w1p, tm=tile, out_dtype=jnp.bfloat16)
    h1 = gcn_mix(adj_bf, sup1, b1p, tm=tile, tk=tile, out_dtype=jnp.bfloat16)
    # Outer F.relu(relu(.)) is idempotent; dropout is identity at inference.

    # ---- GCN layer 2: h = relu(adj @ (h1 @ W2) + b2) ----
    sup2 = dense_matmul(h1, w2p, tm=tile, out_dtype=jnp.bfloat16)
    h_pad = gcn_mix(adj_bf, sup2, b2p, tm=tile, tk=tile, out_dtype=jnp.float32)

    # ---- decoder: A_pred = sigmoid(h @ h.T) ----
    a_pad = dot_product_decode(h_pad.astype(jnp.bfloat16), ti=tile, tj=tile)

    return h_pad[:N, :nhid2], a_pad[:N, :N]


def init_gc_params(key, in_features, out_features):
    """Matches GraphConvolution.reset_parameters: U(-stdv, stdv), stdv = 1/sqrt(out)."""
    stdv = 1.0 / math.sqrt(out_features)
    kw, kb = jax.random.split(key)
    w = jax.random.uniform(kw, (in_features, out_features), jnp.float32, -stdv, stdv)
    b = jax.random.uniform(kb, (out_features,), jnp.float32, -stdv, stdv)
    return w, b


if __name__ == "__main__":
    # Small shapes consistent with the module (N nodes, nfeat -> nhid1 -> nhid2);
    # non-multiples of 128 to exercise the padding path and multi-tile grids.
    N, nfeat, nhid1, nhid2 = 200, 96, 48, 24

    key = jax.random.PRNGKey(0)
    kx, kadj, k1, k2 = jax.random.split(key, 4)

    x = jax.random.normal(kx, (N, nfeat), jnp.float32)

    # Symmetric, row-normalized dense adjacency.
    a_raw = (jax.random.uniform(kadj, (N, N)) > 0.9).astype(jnp.float32)
    adj = a_raw + a_raw.T + jnp.eye(N, dtype=jnp.float32)
    adj = adj / jnp.sum(adj, axis=1, keepdims=True)

    w1, b1 = init_gc_params(k1, nfeat, nhid1)
    w2, b2 = init_gc_params(k2, nhid1, nhid2)

    h, a_pred = gae_forward(x, adj, w1, b1, w2, b2)
    jax.block_until_ready((h, a_pred))

    # Reference in plain f32 JAX.  The kernel uses bf16 MXU operands with f32
    # accumulation, so compare with a bf16-appropriate tolerance.
    h1_ref = jnp.maximum(adj @ (x @ w1) + b1.reshape(1, -1), 0.0)
    h_ref = jnp.maximum(adj @ (h1_ref @ w2) + b2.reshape(1, -1), 0.0)
    a_ref = jax.nn.sigmoid(h_ref @ h_ref.T)

    assert h.shape == (N, nhid2) and a_pred.shape == (N, N)
    assert jnp.allclose(h, h_ref, atol=3e-2, rtol=3e-2), (
        "h mismatch: max abs err %.3e" % float(jnp.max(jnp.abs(h - h_ref)))
    )
    assert jnp.allclose(a_pred, a_ref, atol=3e-2, rtol=3e-2), (
        "A_pred mismatch: max abs err %.3e" % float(jnp.max(jnp.abs(a_pred - a_ref)))
    )

    print("KERNEL_OK")
</pallas_src>

<mosaic_0001>
module attributes {stable_mosaic.version = 11 : i64} {
  func.func @_dense_kernel(%arg0: i32, %arg1: memref<128x128xbf16, #tpu.memory_space<vmem>>, %arg2: memref<128x128xf32, #tpu.memory_space<vmem>>, %arg3: memref<128x128xbf16, #tpu.memory_space<vmem>>) attributes {dimension_semantics = [#tpu.dimension_semantics<parallel>], iteration_bounds = array<i64: 2>, scalar_prefetch = 0 : i64, scratch_operands = 0 : i64, tpu.core_type = #tpu.core_type<tc>, window_params = [{transform_indices = @transform_0, window_bounds = array<i64: 128, 128>}, {pipeline_mode = #tpu.pipeline_mode<synchronous>, transform_indices = @transform_1, window_bounds = array<i64: 128, 128>}, {transform_indices = @transform_2, window_bounds = array<i64: 128, 128>}]} {
    %c0 = arith.constant 0 : index
    %c0_0 = arith.constant 0 : index
    %0 = vector.load %arg1[%c0, %c0_0] : memref<128x128xbf16, #tpu.memory_space<vmem>>, vector<128x128xbf16>
    %c0_1 = arith.constant 0 : index
    %c0_2 = arith.constant 0 : index
    %1 = vector.load %arg2[%c0_1, %c0_2] : memref<128x128xf32, #tpu.memory_space<vmem>>, vector<128x128xf32>
    %cst = arith.constant dense<0.000000e+00> : vector<128x128xf32>
    %2 = tpu.matmul %0, %1, %cst {dimension_numbers = #tpu.dot_dimension_numbers<[1], [0], [0], [1], [0, 0, 1, 1], [], []>} : vector<128x128xbf16>, vector<128x128xf32>, vector<128x128xf32> -> vector<128x128xf32>
    %3 = arith.truncf %2 : vector<128x128xf32> to vector<128x128xbf16>
    %c0_3 = arith.constant 0 : index
    %c0_4 = arith.constant 0 : index
    %4 = vector.load %arg3[%c0_3, %c0_4] : memref<128x128xbf16, #tpu.memory_space<vmem>>, vector<128x128xbf16>
    tpu.vector_store %arg3[%c0_3, %c0_4], %3 {strides = array<i32>} : memref<128x128xbf16, #tpu.memory_space<vmem>>, vector<128x128xbf16>,
    return
  }
  func.func @transform_0(%arg0: i32) -> (i32, i32) {
    %c0_i32 = arith.constant 0 : i32
    %c0_i32_0 = arith.constant 0 : i32
    return %arg0, %c0_i32 : i32, i32
  }
  func.func @transform_1(%arg0: i32) -> (i32, i32) {
    %c0_i32 = arith.constant 0 : i32
    %c0_i32_0 = arith.constant 0 : i32
    %c0_i32_1 = arith.constant 0 : i32
    return %c0_i32, %c0_i32_0 : i32, i32
  }
  func.func @transform_2(%arg0: i32) -> (i32, i32) {
    %c0_i32 = arith.constant 0 : i32
    %c0_i32_0 = arith.constant 0 : i32
    return %arg0, %c0_i32 : i32, i32
  }
}

module attributes {stable_mosaic.version = 11 : i64} {
  func.func @_dense_kernel(%arg0: i32, %arg1: memref<128x128xf32, #tpu.memory_space<vmem>>, %arg2: memref<128x128xf32, #tpu.memory_space<vmem>>, %arg3: memref<128x128xbf16, #tpu.memory_space<vmem>>) attributes {dimension_semantics = [#tpu.dimension_semantics<parallel>], iteration_bounds = array<i64: 2>, scalar_prefetch = 0 : i64, scratch_operands = 0 : i64, tpu.core_type = #tpu.core_type<tc>, window_params = [{transform_indices = @transform_0, window_bounds = array<i64: 128, 128>}, {pipeline_mode = #tpu.pipeline_mode<synchronous>, transform_indices = @transform_1, window_bounds = array<i64: 128, 128>}, {transform_indices = @transform_2, window_bounds = array<i64: 128, 128>}]} {
    %c0 = arith.constant 0 : index
    %c0_0 = arith.constant 0 : index
    %0 = vector.load %arg1[%c0, %c0_0] : memref<128x128xf32, #tpu.memory_space<vmem>>, vector<128x128xf32>
    %c0_1 = arith.constant 0 : index
    %c0_2 = arith.constant 0 : index
    %1 = vector.load %arg2[%c0_1, %c0_2] : memref<128x128xf32, #tpu.memory_space<vmem>>, vector<128x128xf32>
    %cst = arith.constant dense<0.000000e+00> : vector<128x128xf32>
    %2 = tpu.matmul %0, %1, %cst {dimension_numbers = #tpu.dot_dimension_numbers<[1], [0], [0], [1], [0, 0, 1, 1], [], []>} : vector<128x128xf32>, vector<128x128xf32>, vector<128x128xf32> -> vector<128x128xf32>
    %3 = arith.truncf %2 : vector<128x128xf32> to vector<128x128xbf16>
    %c0_3 = arith.constant 0 : index
    %c0_4 = arith.constant 0 : index
    %4 = vector.load %arg3[%c0_3, %c0_4] : memref<128x128xbf16, #tpu.memory_space<vmem>>, vector<128x128xbf16>
    tpu.vector_store %arg3[%c0_3, %c0_4], %3 {strides = array<i32>} : memref<128x128xbf16, #tpu.memory_space<vmem>>, vector<128x128xbf16>,
    return
  }
  func.func @transform_0(%arg0: i32) -> (i32, i32) {
    %c0_i32 = arith.constant 0 : i32
    %c0_i32_0 = arith.constant 0 : i32
    return %arg0, %c0_i32 : i32, i32
  }
  func.func @transform_1(%arg0: i32) -> (i32, i32) {
    %c0_i32 = arith.constant 0 : i32
    %c0_i32_0 = arith.constant 0 : i32
    %c0_i32_1 = arith.constant 0 : i32
    return %c0_i32, %c0_i32_0 : i32, i32
  }
  func.func @transform_2(%arg0: i32) -> (i32, i32) {
    %c0_i32 = arith.constant 0 : i32
    %c0_i32_0 = arith.constant 0 : i32
    return %arg0, %c0_i32 : i32, i32
  }
}

module attributes {stable_mosaic.version = 11 : i64} {
  func.func @_gcn_mix_kernel(%arg0: i32, %arg1: i32, %arg2: memref<128x128xbf16, #tpu.memory_space<vmem>>, %arg3: memref<128x128xbf16, #tpu.memory_space<vmem>>, %arg4: memref<1x128xf32, #tpu.memory_space<vmem>>, %arg5: memref<128x128xbf16, #tpu.memory_space<vmem>>, %arg6: memref<128x128xf32, #tpu.memory_space<vmem>>) attributes {dimension_semantics = [#tpu.dimension_semantics<parallel>, #tpu.dimension_semantics<arbitrary>], iteration_bounds = array<i64: 2, 2>, scalar_prefetch = 0 : i64, scratch_operands = 1 : i64, tpu.core_type = #tpu.core_type<tc>, window_params = [{transform_indices = @transform_0, window_bounds = array<i64: 128, 128>}, {transform_indices = @transform_1, window_bounds = array<i64: 128, 128>}, {pipeline_mode = #tpu.pipeline_mode<synchronous>, transform_indices = @transform_2, window_bounds = array<i64: 1, 128>}, {transform_indices = @transform_3, window_bounds = array<i64: 128, 128>}]} {
    %c0_i32 = arith.constant 0 : i32
    %0 = arith.cmpi eq, %arg1, %c0_i32 : i32
    %1 = arith.extui %0 : i1 to i32
    %c0_i32_0 = arith.constant 0 : i32
    %2 = arith.cmpi ne, %1, %c0_i32_0 : i32
    scf.if %2 {
      %cst_9 = arith.constant 0.000000e+00 : f32
      %12 = vector.broadcast %cst_9 : f32 to vector<128x128xf32>
      %c0_10 = arith.constant 0 : index
      %c0_11 = arith.constant 0 : index
      %13 = vector.load %arg6[%c0_10, %c0_11] : memref<128x128xf32, #tpu.memory_space<vmem>>, vector<128x128xf32>
      tpu.vector_store %arg6[%c0_10, %c0_11], %12 {strides = array<i32>} : memref<128x128xf32, #tpu.memory_space<vmem>>, vector<128x128xf32>,
    } else {
    }
    %c0 = arith.constant 0 : index
    %c0_1 = arith.constant 0 : index
    %3 = vector.load %arg6[%c0, %c0_1] : memref<128x128xf32, #tpu.memory_space<vmem>>, vector<128x128xf32>
    %c0_2 = arith.constant 0 : index
    %c0_3 = arith.constant 0 : index
    %4 = vector.load %arg2[%c0_2, %c0_3] : memref<128x128xbf16, #tpu.memory_space<vmem>>, vector<128x128xbf16>
    %c0_4 = arith.constant 0 : index
    %c0_5 = arith.constant 0 : index
    %5 = vector.load %arg3[%c0_4, %c0_5] : memref<128x128xbf16, #tpu.memory_space<vmem>>, vector<128x128xbf16>
    %cst = arith.constant dense<0.000000e+00> : vector<128x128xf32>
    %6 = tpu.matmul %4, %5, %cst {dimension_numbers = #tpu.dot_dimension_numbers<[1], [0], [0], [1], [0, 0, 1, 1], [], []>} : vector<128x128xbf16>, vector<128x128xbf16>, vector<128x128xf32> -> vector<128x128xf32>
    %7 = arith.addf %3, %6 : vector<128x128xf32>
    %c0_6 = arith.constant 0 : index
    %c0_7 = arith.constant 0 : index
    %8 = vector.load %arg6[%c0_6, %c0_7] : memref<128x128xf32, #tpu.memory_space<vmem>>, vector<128x128xf32>
    tpu.vector_store %arg6[%c0_6, %c0_7], %7 {strides = array<i32>} : memref<128x128xf32, #tpu.memory_space<vmem>>, vector<128x128xf32>,
    %c1_i32 = arith.constant 1 : i32
    %9 = arith.cmpi eq, %arg1, %c1_i32 : i32
    %10 = arith.extui %9 : i1 to i32
    %c0_i32_8 = arith.constant 0 : i32
    %11 = arith.cmpi ne, %10, %c0_i32_8 : i32
    scf.if %11 {
      %c0_9 = arith.constant 0 : index
      %c0_10 = arith.constant 0 : index
      %12 = vector.load %arg6[%c0_9, %c0_10] : memref<128x128xf32, #tpu.memory_space<vmem>>, vector<128x128xf32>
      %c0_11 = arith.constant 0 : index
      %c0_12 = arith.constant 0 : index
      %13 = vector.load %arg4[%c0_11, %c0_12] : memref<1x128xf32, #tpu.memory_space<vmem>>, vector<1x128xf32>
      %14 = vector.broadcast %13 : vector<1x128xf32> to vector<128x128xf32>
      %15 = arith.addf %12, %14 : vector<128x128xf32>
      %cst_13 = arith.constant 0.000000e+00 : f32
      %16 = vector.broadcast %cst_13 : f32 to vector<128x128xf32>
      %17 = arith.maximumf %15, %16 : vector<128x128xf32>
      %18 = arith.truncf %17 : vector<128x128xf32> to vector<128x128xbf16>
      %c0_14 = arith.constant 0 : index
      %c0_15 = arith.constant 0 : index
      %19 = vector.load %arg5[%c0_14, %c0_15] : memref<128x128xbf16, #tpu.memory_space<vmem>>, vector<128x128xbf16>
      tpu.vector_store %arg5[%c0_14, %c0_15], %18 {strides = array<i32>} : memref<128x128xbf16, #tpu.memory_space<vmem>>, vector<128x128xbf16>,
    } else {
    }
    return
  }
  func.func @transform_0(%arg0: i32, %arg1: i32) -> (i32, i32) {
    %c0_i32 = arith.constant 0 : i32
    return %arg0, %arg1 : i32, i32
  }
  func.func @transform_1(%arg0: i32, %arg1: i32) -> (i32, i32) {
    %c0_i32 = arith.constant 0 : i32
    %c0_i32_0 = arith.constant 0 : i32
    return %arg1, %c0_i32 : i32, i32
  }
  func.func @transform_2(%arg0: i32, %arg1: i32) -> (i32, i32) {
    %c0_i32 = arith.constant 0 : i32
    %c0_i32_0 = arith.constant 0 : i32
    %c0_i32_1 = arith.constant 0 : i32
    return %c0_i32, %c0_i32_0 : i32, i32
  }
  func.func @transform_3(%arg0: i32, %arg1: i32) -> (i32, i32) {
    %c0_i32 = arith.constant 0 : i32
    %c0_i32_0 = arith.constant 0 : i32
    return %arg0, %c0_i32 : i32, i32
  }
}

module attributes {stable_mosaic.version = 11 : i64} {
  func.func @_gcn_mix_kernel(%arg0: i32, %arg1: i32, %arg2: memref<128x128xbf16, #tpu.memory_space<vmem>>, %arg3: memref<128x128xbf16, #tpu.memory_space<vmem>>, %arg4: memref<1x128xf32, #tpu.memory_space<vmem>>, %arg5: memref<128x128xf32, #tpu.memory_space<vmem>>, %arg6: memref<128x128xf32, #tpu.memory_space<vmem>>) attributes {dimension_semantics = [#tpu.dimension_semantics<parallel>, #tpu.dimension_semantics<arbitrary>], iteration_bounds = array<i64: 2, 2>, scalar_prefetch = 0 : i64, scratch_operands = 1 : i64, tpu.core_type = #tpu.core_type<tc>, window_params = [{transform_indices = @transform_0, window_bounds = array<i64: 128, 128>}, {transform_indices = @transform_1, window_bounds = array<i64: 128, 128>}, {pipeline_mode = #tpu.pipeline_mode<synchronous>, transform_indices = @transform_2, window_bounds = array<i64: 1, 128>}, {transform_indices = @transform_3, window_bounds = array<i64: 128, 128>}]} {
    %c0_i32 = arith.constant 0 : i32
    %0 = arith.cmpi eq, %arg1, %c0_i32 : i32
    %1 = arith.extui %0 : i1 to i32
    %c0_i32_0 = arith.constant 0 : i32
    %2 = arith.cmpi ne, %1, %c0_i32_0 : i32
    scf.if %2 {
      %cst_9 = arith.constant 0.000000e+00 : f32
      %12 = vector.broadcast %cst_9 : f32 to vector<128x128xf32>
      %c0_10 = arith.constant 0 : index
      %c0_11 = arith.constant 0 : index
      %13 = vector.load %arg6[%c0_10, %c0_11] : memref<128x128xf32, #tpu.memory_space<vmem>>, vector<128x128xf32>
      tpu.vector_store %arg6[%c0_10, %c0_11], %12 {strides = array<i32>} : memref<128x128xf32, #tpu.memory_space<vmem>>, vector<128x128xf32>,
    } else {
    }
    %c0 = arith.constant 0 : index
    %c0_1 = arith.constant 0 : index
    %3 = vector.load %arg6[%c0, %c0_1] : memref<128x128xf32, #tpu.memory_space<vmem>>, vector<128x128xf32>
    %c0_2 = arith.constant 0 : index
    %c0_3 = arith.constant 0 : index
    %4 = vector.load %arg2[%c0_2, %c0_3] : memref<128x128xbf16, #tpu.memory_space<vmem>>, vector<128x128xbf16>
    %c0_4 = arith.constant 0 : index
    %c0_5 = arith.constant 0 : index
    %5 = vector.load %arg3[%c0_4, %c0_5] : memref<128x128xbf16, #tpu.memory_space<vmem>>, vector<128x128xbf16>
    %cst = arith.constant dense<0.000000e+00> : vector<128x128xf32>
    %6 = tpu.matmul %4, %5, %cst {dimension_numbers = #tpu.dot_dimension_numbers<[1], [0], [0], [1], [0, 0, 1, 1], [], []>} : vector<128x128xbf16>, vector<128x128xbf16>, vector<128x128xf32> -> vector<128x128xf32>
    %7 = arith.addf %3, %6 : vector<128x128xf32>
    %c0_6 = arith.constant 0 : index
    %c0_7 = arith.constant 0 : index
    %8 = vector.load %arg6[%c0_6, %c0_7] : memref<128x128xf32, #tpu.memory_space<vmem>>, vector<128x128xf32>
    tpu.vector_store %arg6[%c0_6, %c0_7], %7 {strides = array<i32>} : memref<128x128xf32, #tpu.memory_space<vmem>>, vector<128x128xf32>,
    %c1_i32 = arith.constant 1 : i32
    %9 = arith.cmpi eq, %arg1, %c1_i32 : i32
    %10 = arith.extui %9 : i1 to i32
    %c0_i32_8 = arith.constant 0 : i32
    %11 = arith.cmpi ne, %10, %c0_i32_8 : i32
    scf.if %11 {
      %c0_9 = arith.constant 0 : index
      %c0_10 = arith.constant 0 : index
      %12 = vector.load %arg6[%c0_9, %c0_10] : memref<128x128xf32, #tpu.memory_space<vmem>>, vector<128x128xf32>
      %c0_11 = arith.constant 0 : index
      %c0_12 = arith.constant 0 : index
      %13 = vector.load %arg4[%c0_11, %c0_12] : memref<1x128xf32, #tpu.memory_space<vmem>>, vector<1x128xf32>
      %14 = vector.broadcast %13 : vector<1x128xf32> to vector<128x128xf32>
      %15 = arith.addf %12, %14 : vector<128x128xf32>
      %cst_13 = arith.constant 0.000000e+00 : f32
      %16 = vector.broadcast %cst_13 : f32 to vector<128x128xf32>
      %17 = arith.maximumf %15, %16 : vector<128x128xf32>
      %c0_14 = arith.constant 0 : index
      %c0_15 = arith.constant 0 : index
      %18 = vector.load %arg5[%c0_14, %c0_15] : memref<128x128xf32, #tpu.memory_space<vmem>>, vector<128x128xf32>
      tpu.vector_store %arg5[%c0_14, %c0_15], %17 {strides = array<i32>} : memref<128x128xf32, #tpu.memory_space<vmem>>, vector<128x128xf32>,
    } else {
    }
    return
  }
  func.func @transform_0(%arg0: i32, %arg1: i32) -> (i32, i32) {
    %c0_i32 = arith.constant 0 : i32
    return %arg0, %arg1 : i32, i32
  }
  func.func @transform_1(%arg0: i32, %arg1: i32) -> (i32, i32) {
    %c0_i32 = arith.constant 0 : i32
    %c0_i32_0 = arith.constant 0 : i32
    return %arg1, %c0_i32 : i32, i32
  }
  func.func @transform_2(%arg0: i32, %arg1: i32) -> (i32, i32) {
    %c0_i32 = arith.constant 0 : i32
    %c0_i32_0 = arith.constant 0 : i32
    %c0_i32_1 = arith.constant 0 : i32
    return %c0_i32, %c0_i32_0 : i32, i32
  }
  func.func @transform_3(%arg0: i32, %arg1: i32) -> (i32, i32) {
    %c0_i32 = arith.constant 0 : i32
    %c0_i32_0 = arith.constant 0 : i32
    return %arg0, %c0_i32 : i32, i32
  }
}

module attributes {stable_mosaic.version = 11 : i64} {
  func.func @_decoder_kernel(%arg0: i32, %arg1: i32, %arg2: memref<128x128xbf16, #tpu.memory_space<vmem>>, %arg3: memref<128x128xbf16, #tpu.memory_space<vmem>>, %arg4: memref<128x128xf32, #tpu.memory_space<vmem>>) attributes {dimension_semantics = [#tpu.dimension_semantics<parallel>, #tpu.dimension_semantics<parallel>], iteration_bounds = array<i64: 2, 2>, scalar_prefetch = 0 : i64, scratch_operands = 0 : i64, tpu.core_type = #tpu.core_type<tc>, window_params = [{transform_indices = @transform_0, window_bounds = array<i64: 128, 128>}, {transform_indices = @transform_1, window_bounds = array<i64: 128, 128>}, {transform_indices = @transform_2, window_bounds = array<i64: 128, 128>}]} {
    %c0 = arith.constant 0 : index
    %c0_0 = arith.constant 0 : index
    %0 = vector.load %arg2[%c0, %c0_0] : memref<128x128xbf16, #tpu.memory_space<vmem>>, vector<128x128xbf16>
    %c0_1 = arith.constant 0 : index
    %c0_2 = arith.constant 0 : index
    %1 = vector.load %arg3[%c0_1, %c0_2] : memref<128x128xbf16, #tpu.memory_space<vmem>>, vector<128x128xbf16>
    %cst = arith.constant dense<0.000000e+00> : vector<128x128xf32>
    %2 = tpu.matmul %0, %1, %cst {dimension_numbers = #tpu.dot_dimension_numbers<[1], [1], [0], [0], [0, 0, 1, 0], [], []>} : vector<128x128xbf16>, vector<128x128xbf16>, vector<128x128xf32> -> vector<128x128xf32>
    %3 = arith.negf %2 : vector<128x128xf32>
    %4 = math.exp %3 : vector<128x128xf32>
    %cst_3 = arith.constant 1.000000e+00 : f32
    %5 = vector.broadcast %cst_3 : f32 to vector<128x128xf32>
    %6 = arith.addf %5, %4 : vector<128x128xf32>
    %7 = arith.divf %5, %6 : vector<128x128xf32>
    %c0_4 = arith.constant 0 : index
    %c0_5 = arith.constant 0 : index
    %8 = vector.load %arg4[%c0_4, %c0_5] : memref<128x128xf32, #tpu.memory_space<vmem>>, vector<128x128xf32>
    tpu.vector_store %arg4[%c0_4, %c0_5], %7 {strides = array<i32>} : memref<128x128xf32, #tpu.memory_space<vmem>>, vector<128x128xf32>,
    return
  }
  func.func @transform_0(%arg0: i32, %arg1: i32) -> (i32, i32) {
    %c0_i32 = arith.constant 0 : i32
    %c0_i32_0 = arith.constant 0 : i32
    return %arg0, %c0_i32 : i32, i32
  }
  func.func @transform_1(%arg0: i32, %arg1: i32) -> (i32, i32) {
    %c0_i32 = arith.constant 0 : i32
    %c0_i32_0 = arith.constant 0 : i32
    return %arg1, %c0_i32 : i32, i32
  }
  func.func @transform_2(%arg0: i32, %arg1: i32) -> (i32, i32) {
    %c0_i32 = arith.constant 0 : i32
    return %arg0, %arg1 : i32, i32
  }
}

</mosaic_0001>

<llo_original>
// kernel: gae_forward.5
$region0: #{gae_forward.5}
  #allocation0 [shape = 'u32[]', space=smem, size = 0x4, offset = 0x4, fixed_abs, tag = 'smem constant byte address 0x4 - core index']
  #allocation1 [shape = 'u32[144,128]{1,0:T(1,128)}', space=vmem, size = 0x12000, scoped, tag = 'internal scratch']
  %s0 = inlined_call_operand.vmem [shape: f32[256,128], index: 0, kind: input, shape index: {}]
  %s1 = inlined_call_operand.vmem [shape: f32[128,128], index: 1, kind: input, shape index: {}]
  %s2 = inlined_call_operand.vmem [shape: bf16[256,128], index: 2, kind: output, shape index: {}]
  %s3 = sld [smem:[#allocation0]]
  $region41: #{gae_forward.5} parent=0
    _
  %s5 = ssub.s32 1, %s3
  %s6 = scalar_select 0, %s5, %s3
  loop: start=0, step=1, limit=4
  $region2: #{gae_forward.5} parent=0 // loop_pre_header
    _
  $region3: #{gae_forward.5} parent=0 // loop_header
    %s8 = sphi 0, %s12
    %p9 = scmp.ge.s32.totalorder %s8, 4
    %s18 = sphi 0, %s20
    %s21 = sphi 0, %s18
    %s22 = sphi 0, %s21
    %s38 = sphi 0, %s22
    %s42 = sphi 0, %s42
    %s44 = sphi 0, %s42
    %s45 = sphi 0, %s44
    %s59 = sphi 0, %s45
    %s65 = sphi 0, %s67
    %s68 = sphi 0, %s65
    %s69 = sphi 0, %s68
    %s85 = sphi 0, %s69
  $region4: #{gae_forward.5} parent=0 // loop_header_branch
    %11 = sbr.rel (%p9) target = $region8
  $region5: #{gae_forward.5} parent=0 // loop_body
    %s13 = ssub.s32 %s8, 1
    %s14 = ssub.s32 %s8, 2
    %s15 = sadd.s32 %s8, 1
    %s16 = ssub.s32 %s8, %s15
    %p17 = scmp.eq.s32.totalorder %s16, 0
    %s19 = sadd.s32 %s18, 1
    %s20 = scalar_select %p17, %s18, %s19
    %p23 = pneg %p17
    %p24 = scmp.eq.s32.totalorder %s8, 1
    %p25 = por %p23, %p24
    %p26 = scmp.ne.s32.totalorder %s18, %s21
    %p27 = scmp.eq.s32.totalorder %s8, 0
    %p28 = por %p26, %p27
    %p29 = scmp.ne.s32.totalorder %s18, %s21
    %p30 = scmp.eq.s32.totalorder %s13, 1
    %p31 = por %p29, %p30
    %p32 = scmp.ne.s32.totalorder %s21, %s22
    %p33 = scmp.eq.s32.totalorder %s13, 0
    %p34 = por %p32, %p33
    %p35 = scmp.ne.s32.totalorder %s21, %s22
    %p36 = scmp.eq.s32.totalorder %s14, 1
    %p37 = por %p35, %p36
    %p39 = scmp.ne.s32.totalorder %s22, %s38
    %p40 = scmp.eq.s32.totalorder %s14, 0
    %p41 = por %p39, %p40
    %s43 = sadd.s32 %s42, 1
    %p46 = scmp.eq.s32.totalorder %s8, 1
    %p47 = scmp.ne.s32.totalorder %s42, %s44
    %p48 = scmp.eq.s32.totalorder %s8, 0
    %p49 = por %p47, %p48
    %p50 = scmp.ne.s32.totalorder %s42, %s44
    %p51 = scmp.eq.s32.totalorder %s13, 1
    %p52 = por %p50, %p51
    %p53 = scmp.ne.s32.totalorder %s44, %s45
    %p54 = scmp.eq.s32.totalorder %s13, 0
    %p55 = por %p53, %p54
    %p56 = scmp.ne.s32.totalorder %s44, %s45
    %p57 = scmp.eq.s32.totalorder %s14, 1
    %p58 = por %p56, %p57
    %p60 = scmp.ne.s32.totalorder %s45, %s59
    %p61 = scmp.eq.s32.totalorder %s14, 0
    %p62 = por %p60, %p61
    %s63 = ssub.s32 %s8, %s15
    %p64 = scmp.eq.s32.totalorder %s63, 0
    %s66 = sadd.s32 %s65, 1
    %s67 = scalar_select %p64, %s65, %s66
    %p70 = pneg %p64
    %p71 = scmp.eq.s32.totalorder %s8, 1
    %p72 = por %p70, %p71
    %p73 = scmp.ne.s32.totalorder %s65, %s68
    %p74 = scmp.eq.s32.totalorder %s8, 0
    %p75 = por %p73, %p74
    %p76 = scmp.ne.s32.totalorder %s65, %s68
    %p77 = scmp.eq.s32.totalorder %s13, 1
    %p78 = por %p76, %p77
    %p79 = scmp.ne.s32.totalorder %s68, %s69
    %p80 = scmp.eq.s32.totalorder %s13, 0
    %p81 = por %p79, %p80
    %p82 = scmp.ne.s32.totalorder %s68, %s69
    %p83 = scmp.eq.s32.totalorder %s14, 1
    %p84 = por %p82, %p83
    %p86 = scmp.ne.s32.totalorder %s69, %s85
    %p87 = scmp.eq.s32.totalorder %s14, 0
    %p88 = por %p86, %p87
    %p89 = scmp.le.s32.totalorder 1, %s8
    %p90 = scmp.lt.s32.totalorder %s8, 3
    %p91 = pnand %p89, %p90
    %p92 = pneg %p91
    // Predicated region
    $region9: #{gae_forward.5} parent=5 // pred_check
      _
    $region10: #{gae_forward.5} parent=5 // pred_check_branch
      %94 = sbr.rel (%p91) target = $region12
    $region11: #{gae_forward.5} parent=5 // pred_region
      %s95 = ssub.s32 %s8, 1
      // Predicated region
      $region13: #{gae_forward.5} parent=11 // pred_check
        %p96 = pneg %p55
      $region14: #{gae_forward.5} parent=11 // pred_check_branch
        %98 = sbr.rel (%p96) target = $region16
      $region15: #{gae_forward.5} parent=11 // pred_region
        _
      $region16: #{gae_forward.5} parent=11 // pred_fallthru
        _
    $region12: #{gae_forward.5} parent=5 // pred_fallthru
      _
    %p99 = scmp.lt.s32.totalorder %s8, 2
    // Predicated region
    $region17: #{gae_forward.5} parent=5 // pred_check
      %p100 = pneg %p99
    $region18: #{gae_forward.5} parent=5 // pred_check_branch
      %102 = sbr.rel (%p100) target = $region20
    $region19: #{gae_forward.5} parent=5 // pred_region
      // Predicated region
      $region21: #{gae_forward.5} parent=19 // pred_check
        %p103 = pneg %p28
      $region22: #{gae_forward.5} parent=19 // pred_check_branch
        %105 = sbr.rel (%p103) target = $region24
      $region23: #{gae_forward.5} parent=19 // pred_region
        %s106 = smul.u32 16, %s8
        %p107 = scmp.lt.s32.totalorder %s106, 31
        %s108 = scalar_select %p107, %s106, 31
        %s109 = smul.addr %s108, 8
        %s110 = scalar_lea.vmem %s0, %s109
        %s111 = smul.u32 16, %s8
      $region24: #{gae_forward.5} parent=19 // pred_fallthru
        _
    $region20: #{gae_forward.5} parent=5 // pred_fallthru
      _
    %p112 = scmp.le.s32.totalorder 1, %s8
    %p113 = scmp.lt.s32.totalorder %s8, 3
    %p114 = pnand %p112, %p113
    %p115 = pneg %p114
    // Predicated region
    $region25: #{gae_forward.5} parent=5 // pred_check
      _
    $region26: #{gae_forward.5} parent=5 // pred_check_branch
      %117 = sbr.rel (%p114) target = $region28
    $region27: #{gae_forward.5} parent=5 // pred_region
      %s118 = ssub.s32 %s8, 1
      %s119 = smul.u32 16, %s13
      %p120 = scmp.lt.s32.totalorder %s119, 31
      %s121 = scalar_select %p120, %s119, 31
      %s122 = smul.addr %s121, 8
      %s123 = scalar_lea.vmem %s0, %s122
      %p124 = pneg %p34
      %p125 = pneg %p31
      %p126 = pneg %p55
      %p127 = pneg %p52
      %p128 = pneg %p81
      %p129 = pneg %p78
      %s130 = smul.u32 16, %s13
      %p131 = scmp.lt.s32.totalorder %s130, 31
      %s132 = scalar_select %p131, %s130, 31
      %s133 = smul.addr %s132, 4
      %s134 = scalar_lea.vmem %s2, %s133
      %s135 = smul.u32 16, %s13
      %p136 = scmp.lt.s32.totalorder %s135, 31
      %s137 = scalar_select %p136, %s135, 31
      %s138 = smul.addr %s137, 8
      %s139 = scalar_lea.vmem %s0, %s138
      %s140 = smul.u32 16, %s13
      %s141 = smul.u32 16, %s13
      %p142 = scmp.lt.s32.totalorder %s141, 31
      %s143 = scalar_select %p142, %s141, 31
      %s144 = smul.addr %s143, 4
      %s145 = scalar_lea.vmem %s2, %s144
      %s146 = smul.u32 16, %s13
      %v147 = vld [vmem:[%s139] sm:$0xff]
      %v148 = vld [vmem:[%s139 + $0x8] sm:$0xff]
      %v149 = vld [vmem:[%s139 + $0x10] sm:$0xff]
      %v150 = vld [vmem:[%s139 + $0x18] sm:$0xff]
      %v151 = vld [vmem:[%s139 + $0x20] sm:$0xff]
      %v152 = vld [vmem:[%s139 + $0x28] sm:$0xff]
      %v153 = vld [vmem:[%s139 + $0x30] sm:$0xff]
      %v154 = vld [vmem:[%s139 + $0x38] sm:$0xff]
      %v155 = vld [vmem:[%s139 + $0x40] sm:$0xff]
      %v156 = vld [vmem:[%s139 + $0x48] sm:$0xff]
      %v157 = vld [vmem:[%s139 + $0x50] sm:$0xff]
      %v158 = vld [vmem:[%s139 + $0x58] sm:$0xff]
      %v159 = vld [vmem:[%s139 + $0x60] sm:$0xff]
      %v160 = vld [vmem:[%s139 + $0x68] sm:$0xff]
      %v161 = vld [vmem:[%s139 + $0x70] sm:$0xff]
      %v162 = vld [vmem:[%s139 + $0x78] sm:$0xff]
      %v163 = vld [vmem:[%s1] sm:$0xff]
      %v164 = vld [vmem:[%s1 + $0x8] sm:$0xff]
      %v165 = vld [vmem:[%s1 + $0x10] sm:$0xff]
      %v166 = vld [vmem:[%s1 + $0x18] sm:$0xff]
      %v167 = vld [vmem:[%s1 + $0x20] sm:$0xff]
      %v168 = vld [vmem:[%s1 + $0x28] sm:$0xff]
      %v169 = vld [vmem:[%s1 + $0x30] sm:$0xff]
      %v170 = vld [vmem:[%s1 + $0x38] sm:$0xff]
      %v171 = vld [vmem:[%s1 + $0x40] sm:$0xff]
      %v172 = vld [vmem:[%s1 + $0x48] sm:$0xff]
      %v173 = vld [vmem:[%s1 + $0x50] sm:$0xff]
      %v174 = vld [vmem:[%s1 + $0x58] sm:$0xff]
      %v175 = vld [vmem:[%s1 + $0x60] sm:$0xff]
      %v176 = vld [vmem:[%s1 + $0x68] sm:$0xff]
      %v177 = vld [vmem:[%s1 + $0x70] sm:$0xff]
      %v178 = vld [vmem:[%s1 + $0x78] sm:$0xff]
      %179 = vmatprep.subr.mxu0 0.0
      %180 = vmatpush1.msra.mxu0 %v178
      %181 = vmatprep.subr.mxu0 0.0
      %182 = vmatpush1.msra.mxu0 %v177
      %183 = vmatprep.subr.mxu0 0.0
      %184 = vmatpush1.msra.mxu0 %v176
      %185 = vmatprep.subr.mxu0 0.0
      %186 = vmatpush1.msra.mxu0 %v175
      %187 = vmatprep.subr.mxu0 0.0
      %188 = vmatpush1.msra.mxu0 %v174
      %189 = vmatprep.subr.mxu0 0.0
      %190 = vmatpush1.msra.mxu0 %v173
      %191 = vmatprep.subr.mxu0 0.0
      %192 = vmatpush1.msra.mxu0 %v172
      %193 = vmatprep.subr.mxu0 0.0
      %194 = vmatpush1.msra.mxu0 %v171
      %195 = vmatprep.subr.mxu0 0.0
      %196 = vmatpush1.msra.mxu0 %v170
      %197 = vmatprep.subr.mxu0 0.0
      %198 = vmatpush1.msra.mxu0 %v169
      %199 = vmatprep.subr.mxu0 0.0
      %200 = vmatpush1.msra.mxu0 %v168
      %201 = vmatprep.subr.mxu0 0.0
      %202 = vmatpush1.msra.mxu0 %v167
      %203 = vmatprep.subr.mxu0 0.0
      %204 = vmatpush1.msra.mxu0 %v166
      %205 = vmatprep.subr.mxu0 0.0
      %206 = vmatpush1.msra.mxu0 %v165
      %207 = vmatprep.subr.mxu0 0.0
      %208 = vmatpush1.msra.mxu0 %v164
      %209 = vmatprep.subr.mxu0 0.0
      %210 = vmatpush1.msra.mxu0 %v163
      %211 = vmatprep.subr.mxu0 0.0
      %212 = vmatpush2.msra.mxu0 0.0
      %213 = vmatprep.subr.mxu0 0.0
      %214 = vmatpush2.msra.mxu0 0.0
      %215 = vmatprep.subr.mxu0 0.0
      %216 = vmatpush2.msra.mxu0 0.0
      %217 = vmatprep.subr.mxu0 0.0
      %218 = vmatpush2.msra.mxu0 0.0
      %219 = vmatprep.subr.mxu0 0.0
      %220 = vmatpush2.msra.mxu0 0.0
      %221 = vmatprep.subr.mxu0 0.0
      %222 = vmatpush2.msra.mxu0 0.0
      %223 = vmatprep.subr.mxu0 0.0
      %224 = vmatpush2.msra.mxu0 0.0
      %225 = vmatprep.subr.mxu0 0.0
      %226 = vmatpush2.msra.mxu0 0.0
      %227 = vmatprep.subr.mxu0 0.0
      %228 = vmatpush2.msra.mxu0 0.0
      %229 = vmatprep.subr.mxu0 0.0
      %230 = vmatpush2.msra.mxu0 0.0
      %231 = vmatprep.subr.mxu0 0.0
      %232 = vmatpush2.msra.mxu0 0.0
      %233 = vmatprep.subr.mxu0 0.0
      %234 = vmatpush2.msra.mxu0 0.0
      %235 = vmatprep.subr.mxu0 0.0
      %236 = vmatpush2.msra.mxu0 0.0
      %237 = vmatprep.subr.mxu0 0.0
      %238 = vmatpush2.msra.mxu0 0.0
      %239 = vmatprep.subr.mxu0 0.0
      %240 = vmatpush2.msra.mxu0 0.0
      %241 = vmatprep.subr.mxu0 0.0
      %242 = vmatpush2.msra.mxu0 0.0
      %243 = vmatprep.mubr.f32.mxu0 0.0
      %244 = vmatmul.mubr.f32.gmra.mxu0 %v147
      %v245 = vpop.f32.mrf.mxu0
      %v246 = vadd.f32 0.0, %v245
      %v247 = vpop.f32.mrf.mxu0
      %248 = vmatprep.mubr.f32.mxu0 0.0
      %249 = vmatmul.mubr.f32.gmra.mxu0 %v148
      %v250 = vpop.f32.mrf.mxu0
      %v251 = vadd.f32 0.0, %v250
      %v252 = vpop.f32.mrf.mxu0
      %253 = vmatprep.mubr.f32.mxu0 0.0
      %254 = vmatmul.mubr.f32.gmra.mxu0 %v149
      %v255 = vpop.f32.mrf.mxu0
      %v256 = vadd.f32 0.0, %v255
      %v257 = vpop.f32.mrf.mxu0
      %258 = vmatprep.mubr.f32.mxu0 0.0
      %259 = vmatmul.mubr.f32.gmra.mxu0 %v150
      %v260 = vpop.f32.mrf.mxu0
      %v261 = vadd.f32 0.0, %v260
      %v262 = vpop.f32.mrf.mxu0
      %263 = vmatprep.mubr.f32.mxu0 0.0
      %264 = vmatmul.mubr.f32.gmra.mxu0 %v151
      %v265 = vpop.f32.mrf.mxu0
      %v266 = vadd.f32 0.0, %v265
      %v267 = vpop.f32.mrf.mxu0
      %268 = vmatprep.mubr.f32.mxu0 0.0
      %269 = vmatmul.mubr.f32.gmra.mxu0 %v152
      %v270 = vpop.f32.mrf.mxu0
      %v271 = vadd.f32 0.0, %v270
      %v272 = vpop.f32.mrf.mxu0
      %273 = vmatprep.mubr.f32.mxu0 0.0
      %274 = vmatmul.mubr.f32.gmra.mxu0 %v153
      %v275 = vpop.f32.mrf.mxu0
      %v276 = vadd.f32 0.0, %v275
      %v277 = vpop.f32.mrf.mxu0
      %278 = vmatprep.mubr.f32.mxu0 0.0
      %279 = vmatmul.mubr.f32.gmra.mxu0 %v154
      %v280 = vpop.f32.mrf.mxu0
      %v281 = vadd.f32 0.0, %v280
      %v282 = vpop.f32.mrf.mxu0
      %283 = vmatprep.mubr.f32.mxu0 0.0
      %284 = vmatmul.mubr.f32.gmra.mxu0 %v155
      %v285 = vpop.f32.mrf.mxu0
      %v286 = vadd.f32 0.0, %v285
      %v287 = vpop.f32.mrf.mxu0
      %288 = vmatprep.mubr.f32.mxu0 0.0
      %289 = vmatmul.mubr.f32.gmra.mxu0 %v156
      %v290 = vpop.f32.mrf.mxu0
      %v291 = vadd.f32 0.0, %v290
      %v292 = vpop.f32.mrf.mxu0
      %293 = vmatprep.mubr.f32.mxu0 0.0
      %294 = vmatmul.mubr.f32.gmra.mxu0 %v157
      %v295 = vpop.f32.mrf.mxu0
      %v296 = vadd.f32 0.0, %v295
      %v297 = vpop.f32.mrf.mxu0
      %298 = vmatprep.mubr.f32.mxu0 0.0
      %299 = vmatmul.mubr.f32.gmra.mxu0 %v158
      %v300 = vpop.f32.mrf.mxu0
      %v301 = vadd.f32 0.0, %v300
      %v302 = vpop.f32.mrf.mxu0
      %303 = vmatprep.mubr.f32.mxu0 0.0
      %304 = vmatmul.mubr.f32.gmra.mxu0 %v159
      %v305 = vpop.f32.mrf.mxu0
      %v306 = vadd.f32 0.0, %v305
      %v307 = vpop.f32.mrf.mxu0
      %308 = vmatprep.mubr.f32.mxu0 0.0
      %309 = vmatmul.mubr.f32.gmra.mxu0 %v160
      %v310 = vpop.f32.mrf.mxu0
      %v311 = vadd.f32 0.0, %v310
      %v312 = vpop.f32.mrf.mxu0
      %313 = vmatprep.mubr.f32.mxu0 0.0
      %314 = vmatmul.mubr.f32.gmra.mxu0 %v161
      %v315 = vpop.f32.mrf.mxu0
      %v316 = vadd.f32 0.0, %v315
      %v317 = vpop.f32.mrf.mxu0
      %318 = vmatprep.mubr.f32.mxu0 0.0
      %319 = vmatmul.mubr.f32.gmra.mxu0 %v162
      %v320 = vpop.f32.mrf.mxu0
      %v321 = vadd.f32 0.0, %v320
      %v322 = vpop.f32.mrf.mxu0
      %323 = vdwg.mxu0
      %v324 = vpack.c.bf16 %v251, %v246
      %v325 = vpack.c.bf16 %v261, %v256
      %v326 = vpack.c.bf16 %v271, %v266
      %v327 = vpack.c.bf16 %v281, %v276
      %v328 = vpack.c.bf16 %v291, %v286
      %v329 = vpack.c.bf16 %v301, %v296
      %v330 = vpack.c.bf16 %v311, %v306
      %v331 = vpack.c.bf16 %v321, %v316
      %v340 = vunpack.c.l.b16 %v324
      %v341 = vunpack.c.h.b16 %v324
      %v342 = vunpack.c.l.b16 %v325
      %v343 = vunpack.c.h.b16 %v325
      %v344 = vunpack.c.l.b16 %v326
      %v345 = vunpack.c.h.b16 %v326
      %v346 = vunpack.c.l.b16 %v327
      %v347 = vunpack.c.h.b16 %v327
      %v348 = vunpack.c.l.b16 %v328
      %v349 = vunpack.c.h.b16 %v328
      %v350 = vunpack.c.l.b16 %v329
      %v351 = vunpack.c.h.b16 %v329
      %v352 = vunpack.c.l.b16 %v330
      %v353 = vunpack.c.h.b16 %v330
      %v354 = vunpack.c.l.b16 %v331
      %v355 = vunpack.c.h.b16 %v331
      %v356 = vpack.c.b16 %v340, %v340
      %v357 = vpack.c.b16 %v341, %v341
      %v358 = vpack.c.b16 %v342, %v342
      %v359 = vpack.c.b16 %v343, %v343
      %v360 = vpack.c.b16 %v344, %v344
      %v361 = vpack.c.b16 %v345, %v345
      %v362 = vpack.c.b16 %v346, %v346
      %v363 = vpack.c.b16 %v347, %v347
      %v364 = vpack.c.b16 %v348, %v348
      %v365 = vpack.c.b16 %v349, %v349
      %v366 = vpack.c.b16 %v350, %v350
      %v367 = vpack.c.b16 %v351, %v351
      %v368 = vpack.c.b16 %v352, %v352
      %v369 = vpack.c.b16 %v353, %v353
      %v370 = vpack.c.b16 %v354, %v354
      %v371 = vpack.c.b16 %v355, %v355
      %388 = vst [vmem:[%s145] sm:$0xf] %v356
      %389 = vst [vmem:[%s145 + $0x4] sm:$0xf] %v357
      %390 = vst [vmem:[%s145 + $0x8] sm:$0xf] %v358
      %391 = vst [vmem:[%s145 + $0xc] sm:$0xf] %v359
      %392 = vst [vmem:[%s145 + $0x10] sm:$0xf] %v360
      %393 = vst [vmem:[%s145 + $0x14] sm:$0xf] %v361
      %394 = vst [vmem:[%s145 + $0x18] sm:$0xf] %v362
      %395 = vst [vmem:[%s145 + $0x1c] sm:$0xf] %v363
      %396 = vst [vmem:[%s145 + $0x20] sm:$0xf] %v364
      %397 = vst [vmem:[%s145 + $0x24] sm:$0xf] %v365
      %398 = vst [vmem:[%s145 + $0x28] sm:$0xf] %v366
      %399 = vst [vmem:[%s145 + $0x2c] sm:$0xf] %v367
      %400 = vst [vmem:[%s145 + $0x30] sm:$0xf] %v368
      %401 = vst [vmem:[%s145 + $0x34] sm:$0xf] %v369
      %402 = vst [vmem:[%s145 + $0x38] sm:$0xf] %v370
      %403 = vst [vmem:[%s145 + $0x3c] sm:$0xf] %v371
      %s404 = smul.u32 16, %s13
      %p405 = scmp.lt.s32.totalorder %s404, 31
      %s406 = scalar_select %p405, %s404, 31
      %s407 = smul.addr %s406, 4
      %s408 = scalar_lea.vmem %s2, %s407
      // Predicated region
      $region29: #{gae_forward.5} parent=27 // pred_check
        %p409 = pneg %p78
      $region30: #{gae_forward.5} parent=27 // pred_check_branch
        %411 = sbr.rel (%p409) target = $region32
      $region31: #{gae_forward.5} parent=27 // pred_region
        %s412 = smul.u32 16, %s13
      $region32: #{gae_forward.5} parent=27 // pred_fallthru
        _
    $region28: #{gae_forward.5} parent=5 // pred_fallthru
      _
    %p413 = scmp.le.s32.totalorder 2, %s8
    // Predicated region
    $region33: #{gae_forward.5} parent=5 // pred_check
      %p414 = pneg %p413
    $region34: #{gae_forward.5} parent=5 // pred_check_branch
      %416 = sbr.rel (%p414) target = $region36
    $region35: #{gae_forward.5} parent=5 // pred_region
      %s417 = ssub.s32 %s8, 2
      // Predicated region
      $region37: #{gae_forward.5} parent=35 // pred_check
        %p418 = pneg %p84
      $region38: #{gae_forward.5} parent=35 // pred_check_branch
        %420 = sbr.rel (%p418) target = $region40
      $region39: #{gae_forward.5} parent=35 // pred_region
        %s421 = smul.u32 16, %s14
        %p422 = scmp.lt.s32.totalorder %s421, 31
        %s423 = scalar_select %p422, %s421, 31
        %s424 = smul.addr %s423, 4
        %s425 = scalar_lea.vmem %s2, %s424
      $region40: #{gae_forward.5} parent=35 // pred_fallthru
        _
    $region36: #{gae_forward.5} parent=5 // pred_fallthru
      _
  $region6: #{gae_forward.5} parent=0 // loop_footer
    %s12 = sadd.s32 1, %s8
  $region7: #{gae_forward.5} parent=0 // loop_footer_branch
    %7 = sbr.rel target = $region3
  $region8: #{gae_forward.5} parent=0 // loop_exit
    _

// kernel: gae_forward.7
$region0: #{gae_forward.7}
  #allocation0 [shape = 'u32[]', space=smem, size = 0x4, offset = 0x4, fixed_abs, tag = 'smem constant byte address 0x4 - core index']
  #allocation1 [shape = 'u32[144,128]{1,0:T(1,128)}', space=vmem, size = 0x12000, scoped, tag = 'internal scratch']
  %s0 = inlined_call_operand.vmem [shape: bf16[256,128], index: 0, kind: input, shape index: {}]
  %s1 = inlined_call_operand.vmem [shape: f32[128,128], index: 1, kind: input, shape index: {}]
  %s2 = inlined_call_operand.vmem [shape: bf16[256,128], index: 2, kind: output, shape index: {}]
  %s3 = sld [smem:[#allocation0]]
  $region41: #{gae_forward.7} parent=0
    _
  %s5 = ssub.s32 1, %s3
  %s6 = scalar_select 0, %s5, %s3
  loop: start=0, step=1, limit=4
  $region2: #{gae_forward.7} parent=0 // loop_pre_header
    _
  $region3: #{gae_forward.7} parent=0 // loop_header
    %s8 = sphi 0, %s12
    %p9 = scmp.ge.s32.totalorder %s8, 4
    %s18 = sphi 0, %s20
    %s21 = sphi 0, %s18
    %s22 = sphi 0, %s21
    %s38 = sphi 0, %s22
    %s42 = sphi 0, %s42
    %s44 = sphi 0, %s42
    %s45 = sphi 0, %s44
    %s59 = sphi 0, %s45
    %s65 = sphi 0, %s67
    %s68 = sphi 0, %s65
    %s69 = sphi 0, %s68
    %s85 = sphi 0, %s69
  $region4: #{gae_forward.7} parent=0 // loop_header_branch
    %11 = sbr.rel (%p9) target = $region8
  $region5: #{gae_forward.7} parent=0 // loop_body
    %s13 = ssub.s32 %s8, 1
    %s14 = ssub.s32 %s8, 2
    %s15 = sadd.s32 %s8, 1
    %s16 = ssub.s32 %s8, %s15
    %p17 = scmp.eq.s32.totalorder %s16, 0
    %s19 = sadd.s32 %s18, 1
    %s20 = scalar_select %p17, %s18, %s19
    %p23 = pneg %p17
    %p24 = scmp.eq.s32.totalorder %s8, 1
    %p25 = por %p23, %p24
    %p26 = scmp.ne.s32.totalorder %s18, %s21
    %p27 = scmp.eq.s32.totalorder %s8, 0
    %p28 = por %p26, %p27
    %p29 = scmp.ne.s32.totalorder %s18, %s21
    %p30 = scmp.eq.s32.totalorder %s13, 1
    %p31 = por %p29, %p30
    %p32 = scmp.ne.s32.totalorder %s21, %s22
    %p33 = scmp.eq.s32.totalorder %s13, 0
    %p34 = por %p32, %p33
    %p35 = scmp.ne.s32.totalorder %s21, %s22
    %p36 = scmp.eq.s32.totalorder %s14, 1
    %p37 = por %p35, %p36
    %p39 = scmp.ne.s32.totalorder %s22, %s38
    %p40 = scmp.eq.s32.totalorder %s14, 0
    %p41 = por %p39, %p40
    %s43 = sadd.s32 %s42, 1
    %p46 = scmp.eq.s32.totalorder %s8, 1
    %p47 = scmp.ne.s32.totalorder %s42, %s44
    %p48 = scmp.eq.s32.totalorder %s8, 0
    %p49 = por %p47, %p48
    %p50 = scmp.ne.s32.totalorder %s42, %s44
    %p51 = scmp.eq.s32.totalorder %s13, 1
    %p52 = por %p50, %p51
    %p53 = scmp.ne.s32.totalorder %s44, %s45
    %p54 = scmp.eq.s32.totalorder %s13, 0
    %p55 = por %p53, %p54
    %p56 = scmp.ne.s32.totalorder %s44, %s45
    %p57 = scmp.eq.s32.totalorder %s14, 1
    %p58 = por %p56, %p57
    %p60 = scmp.ne.s32.totalorder %s45, %s59
    %p61 = scmp.eq.s32.totalorder %s14, 0
    %p62 = por %p60, %p61
    %s63 = ssub.s32 %s8, %s15
    %p64 = scmp.eq.s32.totalorder %s63, 0
    %s66 = sadd.s32 %s65, 1
    %s67 = scalar_select %p64, %s65, %s66
    %p70 = pneg %p64
    %p71 = scmp.eq.s32.totalorder %s8, 1
    %p72 = por %p70, %p71
    %p73 = scmp.ne.s32.totalorder %s65, %s68
    %p74 = scmp.eq.s32.totalorder %s8, 0
    %p75 = por %p73, %p74
    %p76 = scmp.ne.s32.totalorder %s65, %s68
    %p77 = scmp.eq.s32.totalorder %s13, 1
    %p78 = por %p76, %p77
    %p79 = scmp.ne.s32.totalorder %s68, %s69
    %p80 = scmp.eq.s32.totalorder %s13, 0
    %p81 = por %p79, %p80
    %p82 = scmp.ne.s32.totalorder %s68, %s69
    %p83 = scmp.eq.s32.totalorder %s14, 1
    %p84 = por %p82, %p83
    %p86 = scmp.ne.s32.totalorder %s69, %s85
    %p87 = scmp.eq.s32.totalorder %s14, 0
    %p88 = por %p86, %p87
    %p89 = scmp.le.s32.totalorder 1, %s8
    %p90 = scmp.lt.s32.totalorder %s8, 3
    %p91 = pnand %p89, %p90
    %p92 = pneg %p91
    // Predicated region
    $region9: #{gae_forward.7} parent=5 // pred_check
      _
    $region10: #{gae_forward.7} parent=5 // pred_check_branch
      %94 = sbr.rel (%p91) target = $region12
    $region11: #{gae_forward.7} parent=5 // pred_region
      %s95 = ssub.s32 %s8, 1
      // Predicated region
      $region13: #{gae_forward.7} parent=11 // pred_check
        %p96 = pneg %p55
      $region14: #{gae_forward.7} parent=11 // pred_check_branch
        %98 = sbr.rel (%p96) target = $region16
      $region15: #{gae_forward.7} parent=11 // pred_region
        _
      $region16: #{gae_forward.7} parent=11 // pred_fallthru
        _
    $region12: #{gae_forward.7} parent=5 // pred_fallthru
      _
    %p99 = scmp.lt.s32.totalorder %s8, 2
    // Predicated region
    $region17: #{gae_forward.7} parent=5 // pred_check
      %p100 = pneg %p99
    $region18: #{gae_forward.7} parent=5 // pred_check_branch
      %102 = sbr.rel (%p100) target = $region20
    $region19: #{gae_forward.7} parent=5 // pred_region
      // Predicated region
      $region21: #{gae_forward.7} parent=19 // pred_check
        %p103 = pneg %p28
      $region22: #{gae_forward.7} parent=19 // pred_check_branch
        %105 = sbr.rel (%p103) target = $region24
      $region23: #{gae_forward.7} parent=19 // pred_region
        %s106 = smul.u32 16, %s8
        %p107 = scmp.lt.s32.totalorder %s106, 31
        %s108 = scalar_select %p107, %s106, 31
        %s109 = smul.addr %s108, 4
        %s110 = scalar_lea.vmem %s0, %s109
        %s111 = smul.u32 16, %s8
      $region24: #{gae_forward.7} parent=19 // pred_fallthru
        _
    $region20: #{gae_forward.7} parent=5 // pred_fallthru
      _
    %p112 = scmp.le.s32.totalorder 1, %s8
    %p113 = scmp.lt.s32.totalorder %s8, 3
    %p114 = pnand %p112, %p113
    %p115 = pneg %p114
    // Predicated region
    $region25: #{gae_forward.7} parent=5 // pred_check
      _
    $region26: #{gae_forward.7} parent=5 // pred_check_branch
      %117 = sbr.rel (%p114) target = $region28
    $region27: #{gae_forward.7} parent=5 // pred_region
      %s118 = ssub.s32 %s8, 1
      %s119 = smul.u32 16, %s13
      %p120 = scmp.lt.s32.totalorder %s119, 31
      %s121 = scalar_select %p120, %s119, 31
      %s122 = smul.addr %s121, 4
      %s123 = scalar_lea.vmem %s0, %s122
      %p124 = pneg %p34
      %p125 = pneg %p31
      %p126 = pneg %p55
      %p127 = pneg %p52
      %p128 = pneg %p81
      %p129 = pneg %p78
      %s130 = smul.u32 16, %s13
      %p131 = scmp.lt.s32.totalorder %s130, 31
      %s132 = scalar_select %p131, %s130, 31
      %s133 = smul.addr %s132, 4
      %s134 = scalar_lea.vmem %s2, %s133
      %s135 = smul.u32 16, %s13
      %p136 = scmp.lt.s32.totalorder %s135, 31
      %s137 = scalar_select %p136, %s135, 31
      %s138 = smul.addr %s137, 4
      %s139 = scalar_lea.vmem %s0, %s138
      %s140 = smul.u32 16, %s13
      %s141 = smul.u32 16, %s13
      %p142 = scmp.lt.s32.totalorder %s141, 31
      %s143 = scalar_select %p142, %s141, 31
      %s144 = smul.addr %s143, 4
      %s145 = scalar_lea.vmem %s2, %s144
      %s146 = smul.u32 16, %s13
      %v148 = vld [vmem:[%s139] sm:$0xf]
      %v149 = vld [vmem:[%s139 + $0x4] sm:$0xf]
      %v150 = vld [vmem:[%s139 + $0x8] sm:$0xf]
      %v151 = vld [vmem:[%s139 + $0xc] sm:$0xf]
      %v152 = vld [vmem:[%s139 + $0x10] sm:$0xf]
      %v153 = vld [vmem:[%s139 + $0x14] sm:$0xf]
      %v154 = vld [vmem:[%s139 + $0x18] sm:$0xf]
      %v155 = vld [vmem:[%s139 + $0x1c] sm:$0xf]
      %v156 = vld [vmem:[%s139 + $0x20] sm:$0xf]
      %v157 = vld [vmem:[%s139 + $0x24] sm:$0xf]
      %v158 = vld [vmem:[%s139 + $0x28] sm:$0xf]
      %v159 = vld [vmem:[%s139 + $0x2c] sm:$0xf]
      %v160 = vld [vmem:[%s139 + $0x30] sm:$0xf]
      %v161 = vld [vmem:[%s139 + $0x34] sm:$0xf]
      %v162 = vld [vmem:[%s139 + $0x38] sm:$0xf]
      %v163 = vld [vmem:[%s139 + $0x3c] sm:$0xf]
      %v164 = vld [vmem:[%s1] sm:$0xff]
      %v165 = vld [vmem:[%s1 + $0x8] sm:$0xff]
      %v166 = vld [vmem:[%s1 + $0x10] sm:$0xff]
      %v167 = vld [vmem:[%s1 + $0x18] sm:$0xff]
      %v168 = vld [vmem:[%s1 + $0x20] sm:$0xff]
      %v169 = vld [vmem:[%s1 + $0x28] sm:$0xff]
      %v170 = vld [vmem:[%s1 + $0x30] sm:$0xff]
      %v171 = vld [vmem:[%s1 + $0x38] sm:$0xff]
      %v172 = vld [vmem:[%s1 + $0x40] sm:$0xff]
      %v173 = vld [vmem:[%s1 + $0x48] sm:$0xff]
      %v174 = vld [vmem:[%s1 + $0x50] sm:$0xff]
      %v175 = vld [vmem:[%s1 + $0x58] sm:$0xff]
      %v176 = vld [vmem:[%s1 + $0x60] sm:$0xff]
      %v177 = vld [vmem:[%s1 + $0x68] sm:$0xff]
      %v178 = vld [vmem:[%s1 + $0x70] sm:$0xff]
      %v179 = vld [vmem:[%s1 + $0x78] sm:$0xff]
      %v196 = vunpack.c.l.b16 %v148
      %v197 = vunpack.c.l.b16 %v149
      %v198 = vunpack.c.l.b16 %v150
      %v199 = vunpack.c.l.b16 %v151
      %v200 = vunpack.c.l.b16 %v152
      %v201 = vunpack.c.l.b16 %v153
      %v202 = vunpack.c.l.b16 %v154
      %v203 = vunpack.c.l.b16 %v155
      %v204 = vunpack.c.l.b16 %v156
      %v205 = vunpack.c.l.b16 %v157
      %v206 = vunpack.c.l.b16 %v158
      %v207 = vunpack.c.l.b16 %v159
      %v208 = vunpack.c.l.b16 %v160
      %v209 = vunpack.c.l.b16 %v161
      %v210 = vunpack.c.l.b16 %v162
      %v211 = vunpack.c.l.b16 %v163
      %v212 = vpack.c.b16 %v197, %v196
      %v213 = vpack.c.b16 %v199, %v198
      %v214 = vpack.c.b16 %v201, %v200
      %v215 = vpack.c.b16 %v203, %v202
      %v216 = vpack.c.b16 %v205, %v204
      %v217 = vpack.c.b16 %v207, %v206
      %v218 = vpack.c.b16 %v209, %v208
      %v219 = vpack.c.b16 %v211, %v210
      %228 = vmatprep.subr.mxu0 0.0
      %229 = vmatpush1.msra.mxu0 %v179
      %230 = vmatprep.subr.mxu0 0.0
      %231 = vmatpush1.msra.mxu0 %v178
      %232 = vmatprep.subr.mxu0 0.0
      %233 = vmatpush1.msra.mxu0 %v177
      %234 = vmatprep.subr.mxu0 0.0
      %235 = vmatpush1.msra.mxu0 %v176
      %236 = vmatprep.subr.mxu0 0.0
      %237 = vmatpush1.msra.mxu0 %v175
      %238 = vmatprep.subr.mxu0 0.0
      %239 = vmatpush1.msra.mxu0 %v174
      %240 = vmatprep.subr.mxu0 0.0
      %241 = vmatpush1.msra.mxu0 %v173
      %242 = vmatprep.subr.mxu0 0.0
      %243 = vmatpush1.msra.mxu0 %v172
      %244 = vmatprep.subr.mxu0 0.0
      %245 = vmatpush1.msra.mxu0 %v171
      %246 = vmatprep.subr.mxu0 0.0
      %247 = vmatpush1.msra.mxu0 %v170
      %248 = vmatprep.subr.mxu0 0.0
      %249 = vmatpush1.msra.mxu0 %v169
      %250 = vmatprep.subr.mxu0 0.0
      %251 = vmatpush1.msra.mxu0 %v168
      %252 = vmatprep.subr.mxu0 0.0
      %253 = vmatpush1.msra.mxu0 %v167
      %254 = vmatprep.subr.mxu0 0.0
      %255 = vmatpush1.msra.mxu0 %v166
      %256 = vmatprep.subr.mxu0 0.0
      %257 = vmatpush1.msra.mxu0 %v165
      %258 = vmatprep.subr.mxu0 0.0
      %259 = vmatpush1.msra.mxu0 %v164
      %260 = vmatprep.subr.mxu0 0.0
      %261 = vmatpush2.msra.mxu0 0.0
      %262 = vmatprep.subr.mxu0 0.0
      %263 = vmatpush2.msra.mxu0 0.0
      %264 = vmatprep.subr.mxu0 0.0
      %265 = vmatpush2.msra.mxu0 0.0
      %266 = vmatprep.subr.mxu0 0.0
      %267 = vmatpush2.msra.mxu0 0.0
      %268 = vmatprep.subr.mxu0 0.0
      %269 = vmatpush2.msra.mxu0 0.0
      %270 = vmatprep.subr.mxu0 0.0
      %271 = vmatpush2.msra.mxu0 0.0
      %272 = vmatprep.subr.mxu0 0.0
      %273 = vmatpush2.msra.mxu0 0.0
      %274 = vmatprep.subr.mxu0 0.0
      %275 = vmatpush2.msra.mxu0 0.0
      %276 = vmatprep.subr.mxu0 0.0
      %277 = vmatpush2.msra.mxu0 0.0
      %278 = vmatprep.subr.mxu0 0.0
      %279 = vmatpush2.msra.mxu0 0.0
      %280 = vmatprep.subr.mxu0 0.0
      %281 = vmatpush2.msra.mxu0 0.0
      %282 = vmatprep.subr.mxu0 0.0
      %283 = vmatpush2.msra.mxu0 0.0
      %284 = vmatprep.subr.mxu0 0.0
      %285 = vmatpush2.msra.mxu0 0.0
      %286 = vmatprep.subr.mxu0 0.0
      %287 = vmatpush2.msra.mxu0 0.0
      %288 = vmatprep.subr.mxu0 0.0
      %289 = vmatpush2.msra.mxu0 0.0
      %290 = vmatprep.subr.mxu0 0.0
      %291 = vmatpush2.msra.mxu0 0.0
      %292 = vmatprep.mubr.bf16.mxu0 0
      %293 = vmatmul.mubr.bf16.gmra.mxu0 %v212
      %v294 = vpop.f32.mrf.mxu0
      %v295 = vadd.f32 0.0, %v294
      %v296 = vpop.f32.mrf.mxu0
      %v297 = vpop.f32.mrf.mxu0
      %v298 = vadd.f32 0.0, %v297
      %v299 = vpop.f32.mrf.mxu0
      %300 = vmatprep.mubr.bf16.mxu0 0
      %301 = vmatmul.mubr.bf16.gmra.mxu0 %v213
      %v302 = vpop.f32.mrf.mxu0
      %v303 = vadd.f32 0.0, %v302
      %v304 = vpop.f32.mrf.mxu0
      %v305 = vpop.f32.mrf.mxu0
      %v306 = vadd.f32 0.0, %v305
      %v307 = vpop.f32.mrf.mxu0
      %308 = vmatprep.mubr.bf16.mxu0 0
      %309 = vmatmul.mubr.bf16.gmra.mxu0 %v214
      %v310 = vpop.f32.mrf.mxu0
      %v311 = vadd.f32 0.0, %v310
      %v312 = vpop.f32.mrf.mxu0
      %v313 = vpop.f32.mrf.mxu0
      %v314 = vadd.f32 0.0, %v313
      %v315 = vpop.f32.mrf.mxu0
      %316 = vmatprep.mubr.bf16.mxu0 0
      %317 = vmatmul.mubr.bf16.gmra.mxu0 %v215
      %v318 = vpop.f32.mrf.mxu0
      %v319 = vadd.f32 0.0, %v318
      %v320 = vpop.f32.mrf.mxu0
      %v321 = vpop.f32.mrf.mxu0
      %v322 = vadd.f32 0.0, %v321
      %v323 = vpop.f32.mrf.mxu0
      %324 = vmatprep.mubr.bf16.mxu0 0
      %325 = vmatmul.mubr.bf16.gmra.mxu0 %v216
      %v326 = vpop.f32.mrf.mxu0
      %v327 = vadd.f32 0.0, %v326
      %v328 = vpop.f32.mrf.mxu0
      %v329 = vpop.f32.mrf.mxu0
      %v330 = vadd.f32 0.0, %v329
      %v331 = vpop.f32.mrf.mxu0
      %332 = vmatprep.mubr.bf16.mxu0 0
      %333 = vmatmul.mubr.bf16.gmra.mxu0 %v217
      %v334 = vpop.f32.mrf.mxu0
      %v335 = vadd.f32 0.0, %v334
      %v336 = vpop.f32.mrf.mxu0
      %v337 = vpop.f32.mrf.mxu0
      %v338 = vadd.f32 0.0, %v337
      %v339 = vpop.f32.mrf.mxu0
      %340 = vmatprep.mubr.bf16.mxu0 0
      %341 = vmatmul.mubr.bf16.gmra.mxu0 %v218
      %v342 = vpop.f32.mrf.mxu0
      %v343 = vadd.f32 0.0, %v342
      %v344 = vpop.f32.mrf.mxu0
      %v345 = vpop.f32.mrf.mxu0
      %v346 = vadd.f32 0.0, %v345
      %v347 = vpop.f32.mrf.mxu0
      %348 = vmatprep.mubr.bf16.mxu0 0
      %349 = vmatmul.mubr.bf16.gmra.mxu0 %v219
      %v350 = vpop.f32.mrf.mxu0
      %v351 = vadd.f32 0.0, %v350
      %v352 = vpop.f32.mrf.mxu0
      %v353 = vpop.f32.mrf.mxu0
      %v354 = vadd.f32 0.0, %v353
      %v355 = vpop.f32.mrf.mxu0
      %356 = vdwg.mxu0
      %v357 = vpack.c.bf16 %v298, %v295
      %v358 = vpack.c.bf16 %v306, %v303
      %v359 = vpack.c.bf16 %v314, %v311
      %v360 = vpack.c.bf16 %v322, %v319
      %v361 = vpack.c.bf16 %v330, %v327
      %v362 = vpack.c.bf16 %v338, %v335
      %v363 = vpack.c.bf16 %v346, %v343
      %v364 = vpack.c.bf16 %v354, %v351
      %v373 = vunpack.c.l.b16 %v357
      %v374 = vunpack.c.h.b16 %v357
      %v375 = vunpack.c.l.b16 %v358
      %v376 = vunpack.c.h.b16 %v358
      %v377 = vunpack.c.l.b16 %v359
      %v378 = vunpack.c.h.b16 %v359
      %v379 = vunpack.c.l.b16 %v360
      %v380 = vunpack.c.h.b16 %v360
      %v381 = vunpack.c.l.b16 %v361
      %v382 = vunpack.c.h.b16 %v361
      %v383 = vunpack.c.l.b16 %v362
      %v384 = vunpack.c.h.b16 %v362
      %v385 = vunpack.c.l.b16 %v363
      %v386 = vunpack.c.h.b16 %v363
      %v387 = vunpack.c.l.b16 %v364
      %v388 = vunpack.c.h.b16 %v364
      %v389 = vpack.c.b16 %v373, %v373
      %v390 = vpack.c.b16 %v374, %v374
      %v391 = vpack.c.b16 %v375, %v375
      %v392 = vpack.c.b16 %v376, %v376
      %v393 = vpack.c.b16 %v377, %v377
      %v394 = vpack.c.b16 %v378, %v378
      %v395 = vpack.c.b16 %v379, %v379
      %v396 = vpack.c.b16 %v380, %v380
      %v397 = vpack.c.b16 %v381, %v381
      %v398 = vpack.c.b16 %v382, %v382
      %v399 = vpack.c.b16 %v383, %v383
      %v400 = vpack.c.b16 %v384, %v384
      %v401 = vpack.c.b16 %v385, %v385
      %v402 = vpack.c.b16 %v386, %v386
      %v403 = vpack.c.b16 %v387, %v387
      %v404 = vpack.c.b16 %v388, %v388
      %421 = vst [vmem:[%s145] sm:$0xf] %v389
      %422 = vst [vmem:[%s145 + $0x4] sm:$0xf] %v390
      %423 = vst [vmem:[%s145 + $0x8] sm:$0xf] %v391
      %424 = vst [vmem:[%s145 + $0xc] sm:$0xf] %v392
      %425 = vst [vmem:[%s145 + $0x10] sm:$0xf] %v393
      %426 = vst [vmem:[%s145 + $0x14] sm:$0xf] %v394
      %427 = vst [vmem:[%s145 + $0x18] sm:$0xf] %v395
      %428 = vst [vmem:[%s145 + $0x1c] sm:$0xf] %v396
      %429 = vst [vmem:[%s145 + $0x20] sm:$0xf] %v397
      %430 = vst [vmem:[%s145 + $0x24] sm:$0xf] %v398
      %431 = vst [vmem:[%s145 + $0x28] sm:$0xf] %v399
      %432 = vst [vmem:[%s145 + $0x2c] sm:$0xf] %v400
      %433 = vst [vmem:[%s145 + $0x30] sm:$0xf] %v401
      %434 = vst [vmem:[%s145 + $0x34] sm:$0xf] %v402
      %435 = vst [vmem:[%s145 + $0x38] sm:$0xf] %v403
      %436 = vst [vmem:[%s145 + $0x3c] sm:$0xf] %v404
      %s437 = smul.u32 16, %s13
      %p438 = scmp.lt.s32.totalorder %s437, 31
      %s439 = scalar_select %p438, %s437, 31
      %s440 = smul.addr %s439, 4
      %s441 = scalar_lea.vmem %s2, %s440
      // Predicated region
      $region29: #{gae_forward.7} parent=27 // pred_check
        %p442 = pneg %p78
      $region30: #{gae_forward.7} parent=27 // pred_check_branch
        %444 = sbr.rel (%p442) target = $region32
      $region31: #{gae_forward.7} parent=27 // pred_region
        %s445 = smul.u32 16, %s13
      $region32: #{gae_forward.7} parent=27 // pred_fallthru
        _
    $region28: #{gae_forward.7} parent=5 // pred_fallthru
      _
    %p446 = scmp.le.s32.totalorder 2, %s8
    // Predicated region
    $region33: #{gae_forward.7} parent=5 // pred_check
      %p447 = pneg %p446
    $region34: #{gae_forward.7} parent=5 // pred_check_branch
      %449 = sbr.rel (%p447) target = $region36
    $region35: #{gae_forward.7} parent=5 // pred_region
      %s450 = ssub.s32 %s8, 2
      // Predicated region
      $region37: #{gae_forward.7} parent=35 // pred_check
        %p451 = pneg %p84
      $region38: #{gae_forward.7} parent=35 // pred_check_branch
        %453 = sbr.rel (%p451) target = $region40
      $region39: #{gae_forward.7} parent=35 // pred_region
        %s454 = smul.u32 16, %s14
        %p455 = scmp.lt.s32.totalorder %s454, 31
        %s456 = scalar_select %p455, %s454, 31
        %s457 = smul.addr %s456, 4
        %s458 = scalar_lea.vmem %s2, %s457
      $region40: #{gae_forward.7} parent=35 // pred_fallthru
        _
    $region36: #{gae_forward.7} parent=5 // pred_fallthru
      _
  $region6: #{gae_forward.7} parent=0 // loop_footer
    %s12 = sadd.s32 1, %s8
  $region7: #{gae_forward.7} parent=0 // loop_footer_branch
    %7 = sbr.rel target = $region3
  $region8: #{gae_forward.7} parent=0 // loop_exit
    _

// kernel: gae_forward.6
$region0: #{gae_forward.6}
  #allocation0 [shape = 'u32[]', space=smem, size = 0x4, offset = 0x4, fixed_abs, tag = 'smem constant byte address 0x4 - core index']
  #allocation1 [shape = 'u32[144,128]{1,0:T(1,128)}', space=vmem, size = 0x12000, scoped, tag = 'internal scratch']
  #allocation2 [shape = 'f32[128,128]{1,0:T(8,128)}', space=vmem, size = 0x10000, scoped, tag = 'scratch operand']
  %s0 = inlined_call_operand.vmem [shape: bf16[256,256], index: 0, kind: input, shape index: {}]
  %s1 = inlined_call_operand.vmem [shape: bf16[256,128], index: 1, kind: input, shape index: {}]
  %s2 = inlined_call_operand.vmem [shape: f32[1,128], index: 2, kind: input, shape index: {}]
  %s3 = inlined_call_operand.vmem [shape: bf16[256,128], index: 3, kind: output, shape index: {}]
  %s4 = sld [smem:[#allocation0]]
  $region94: #{gae_forward.6} parent=0
    _
  %s6 = ssub.s32 1, %s4
  %s7 = scalar_select 0, %s6, %s4
  $region1: #{gae_forward.6} parent=0
    #allocation3 [shape = 'u8[65536]{0}', space=vmem, size = 0x10000, scoped, tag = 'input window, operand 0']
    loop: start=0, step=1, limit=6
    $region2: #{gae_forward.6} parent=1 // loop_pre_header
      _
    $region3: #{gae_forward.6} parent=1 // loop_header
      %s9 = sphi 0, %s13
      %p10 = scmp.ge.s32.totalorder %s9, 6
      %s16 = sphi 0, %s28
      %s17 = sphi 0, %s24
      %s18 = sphi 0, %s16
      %s19 = sphi 0, %s17
      %s20 = sphi 0, %s18
      %s21 = sphi 0, %s19
      %s33 = sphi 0, %s35
      %s36 = sphi 0, %s33
      %s37 = sphi 0, %s36
      %s53 = sphi 0, %s37
      %s59 = sphi 0, %s61
      %s62 = sphi 0, %s59
      %s63 = sphi 0, %s62
      %s79 = sphi 0, %s63
      %s83 = sphi 0, %s83
      %s85 = sphi 0, %s83
      %s86 = sphi 0, %s85
      %s100 = sphi 0, %s86
      %s106 = sphi 0, %s108
      %s109 = sphi 0, %s106
      %s110 = sphi 0, %s109
      %s126 = sphi 0, %s110
    $region4: #{gae_forward.6} parent=1 // loop_header_branch
      %12 = sbr.rel (%p10) target = $region8
    $region5: #{gae_forward.6} parent=1 // loop_body
      %s14 = ssub.s32 %s9, 1
      %s15 = ssub.s32 %s9, 2
      %s22 = sadd.s32 1, %s17
      %p23 = scmp.ge.s32.totalorder %s22, 2
      %s24 = scalar_select %p23, 0, %s22
      %s25 = sadd.s32 1, %s16
      %s26 = scalar_select %p23, %s25, %s16
      %p27 = scmp.ge.s32.totalorder %s26, 2
      %s28 = scalar_select %p27, 0, %s26
      %s29 = ssub.s32 %s16, %s28
      %s30 = ssub.s32 %s17, %s24
      %s31 = sor.u32 %s29, %s30
      %p32 = scmp.eq.s32.totalorder %s31, 0
      %s34 = sadd.s32 %s33, 1
      %s35 = scalar_select %p32, %s33, %s34
      %p38 = pneg %p32
      %p39 = scmp.eq.s32.totalorder %s9, 3
      %p40 = por %p38, %p39
      %p41 = scmp.ne.s32.totalorder %s33, %s36
      %p42 = scmp.eq.s32.totalorder %s9, 0
      %p43 = por %p41, %p42
      %p44 = scmp.ne.s32.totalorder %s33, %s36
      %p45 = scmp.eq.s32.totalorder %s14, 3
      %p46 = por %p44, %p45
      %p47 = scmp.ne.s32.totalorder %s36, %s37
      %p48 = scmp.eq.s32.totalorder %s14, 0
      %p49 = por %p47, %p48
      %p50 = scmp.ne.s32.totalorder %s36, %s37
      %p51 = scmp.eq.s32.totalorder %s15, 3
      %p52 = por %p50, %p51
      %p54 = scmp.ne.s32.totalorder %s37, %s53
      %p55 = scmp.eq.s32.totalorder %s15, 0
      %p56 = por %p54, %p55
      %s57 = ssub.s32 %s17, %s24
      %p58 = scmp.eq.s32.totalorder %s57, 0
      %s60 = sadd.s32 %s59, 1
      %s61 = scalar_select %p58, %s59, %s60
      %p64 = pneg %p58
      %p65 = scmp.eq.s32.totalorder %s9, 3
      %p66 = por %p64, %p65
      %p67 = scmp.ne.s32.totalorder %s59, %s62
      %p68 = scmp.eq.s32.totalorder %s9, 0
      %p69 = por %p67, %p68
      %p70 = scmp.ne.s32.totalorder %s59, %s62
      %p71 = scmp.eq.s32.totalorder %s14, 3
      %p72 = por %p70, %p71
      %p73 = scmp.ne.s32.totalorder %s62, %s63
      %p74 = scmp.eq.s32.totalorder %s14, 0
      %p75 = por %p73, %p74
      %p76 = scmp.ne.s32.totalorder %s62, %s63
      %p77 = scmp.eq.s32.totalorder %s15, 3
      %p78 = por %p76, %p77
      %p80 = scmp.ne.s32.totalorder %s63, %s79
      %p81 = scmp.eq.s32.totalorder %s15, 0
      %p82 = por %p80, %p81
      %s84 = sadd.s32 %s83, 1
      %p87 = scmp.eq.s32.totalorder %s9, 3
      %p88 = scmp.ne.s32.totalorder %s83, %s85
      %p89 = scmp.eq.s32.totalorder %s9, 0
      %p90 = por %p88, %p89
      %p91 = scmp.ne.s32.totalorder %s83, %s85
      %p92 = scmp.eq.s32.totalorder %s14, 3
      %p93 = por %p91, %p92
      %p94 = scmp.ne.s32.totalorder %s85, %s86
      %p95 = scmp.eq.s32.totalorder %s14, 0
      %p96 = por %p94, %p95
      %p97 = scmp.ne.s32.totalorder %s85, %s86
      %p98 = scmp.eq.s32.totalorder %s15, 3
      %p99 = por %p97, %p98
      %p101 = scmp.ne.s32.totalorder %s86, %s100
      %p102 = scmp.eq.s32.totalorder %s15, 0
      %p103 = por %p101, %p102
      %s104 = ssub.s32 %s16, %s28
      %p105 = scmp.eq.s32.totalorder %s104, 0
      %s107 = sadd.s32 %s106, 1
      %s108 = scalar_select %p105, %s106, %s107
      %p111 = pneg %p105
      %p112 = scmp.eq.s32.totalorder %s9, 3
      %p113 = por %p111, %p112
      %p114 = scmp.ne.s32.totalorder %s106, %s109
      %p115 = scmp.eq.s32.totalorder %s9, 0
      %p116 = por %p114, %p115
      %p117 = scmp.ne.s32.totalorder %s106, %s109
      %p118 = scmp.eq.s32.totalorder %s14, 3
      %p119 = por %p117, %p118
      %p120 = scmp.ne.s32.totalorder %s109, %s110
      %p121 = scmp.eq.s32.totalorder %s14, 0
      %p122 = por %p120, %p121
      %p123 = scmp.ne.s32.totalorder %s109, %s110
      %p124 = scmp.eq.s32.totalorder %s15, 3
      %p125 = por %p123, %p124
      %p127 = scmp.ne.s32.totalorder %s110, %s126
      %p128 = scmp.eq.s32.totalorder %s15, 0
      %p129 = por %p127, %p128
      %p130 = scmp.le.s32.totalorder 1, %s9
      %p131 = scmp.lt.s32.totalorder %s9, 5
      %p132 = pnand %p130, %p131
      %p133 = pneg %p132
      // Predicated region
      $region9: #{gae_forward.6} parent=5 // pred_check
        _
      $region10: #{gae_forward.6} parent=5 // pred_check_branch
        %135 = sbr.rel (%p132) target = $region12
      $region11: #{gae_forward.6} parent=5 // pred_region
        %s136 = ssub.s32 %s9, 1
        // Predicated region
        $region13: #{gae_forward.6} parent=11 // pred_check
          %p137 = pneg %p96
        $region14: #{gae_forward.6} parent=11 // pred_check_branch
          %139 = sbr.rel (%p137) target = $region16
        $region15: #{gae_forward.6} parent=11 // pred_region
          _
        $region16: #{gae_forward.6} parent=11 // pred_fallthru
          _
      $region12: #{gae_forward.6} parent=5 // pred_fallthru
        _
      %p140 = scmp.lt.s32.totalorder %s9, 4
      // Predicated region
      $region17: #{gae_forward.6} parent=5 // pred_check
        %p141 = pneg %p140
      $region18: #{gae_forward.6} parent=5 // pred_check_branch
        %143 = sbr.rel (%p141) target = $region20
      $region19: #{gae_forward.6} parent=5 // pred_region
        // Predicated region
        $region21: #{gae_forward.6} parent=19 // pred_check
          %p144 = pneg %p43
        $region22: #{gae_forward.6} parent=19 // pred_check_branch
          %146 = sbr.rel (%p144) target = $region24
        $region23: #{gae_forward.6} parent=19 // pred_region
          %s147 = sand.u32 %s33, 1
          %s148 = sand.u32 %s33, 1
          %s149 = smul.addr %s148, 64
          %s150 = scalar_lea.vmem [#allocation3], %s149
          %s151 = smul.u32 16, %s16
          %s152 = smul.addr %s151, 2
          %s153 = sadd.s32 %s17, %s152
          %s154 = smul.addr %s153, 4
          %s155 = scalar_lea.vmem %s0, %s154
          // Predicated region
          $region25: #{gae_forward.6} parent=23 // pred_check
            _
          $region26: #{gae_forward.6} parent=23 // pred_check_branch
            %157 = sbr.rel (0) target = $region28
          $region27: #{gae_forward.6} parent=23 // pred_region
            // Predicated region
            $region29: #{gae_forward.6} parent=27 // pred_check
              _
            $region30: #{gae_forward.6} parent=27 // pred_check_branch
              %159 = sbr.rel target = $region32
            $region31: #{gae_forward.6} parent=27 // pred_region
              // Predicated region
              $region44: #{gae_forward.6} parent=31 // pred_check
                _
              $region45: #{gae_forward.6} parent=31 // pred_check_branch
                %205 = sbr.rel (0) target = $region47
              $region46: #{gae_forward.6} parent=31 // pred_region
                loop: start=0, step=1, limit=1
                $region48: #{gae_forward.6} parent=46 // loop_pre_header
                  _
                $region49: #{gae_forward.6} parent=46 // loop_header
                  %s207 = sphi 0, %s211
                  %p208 = scmp.ge.s32.totalorder %s207, 1
                  %s212 = sphi %s155, %s155
                  %s213 = sphi %s150, %s150
                $region50: #{gae_forward.6} parent=46 // loop_header_branch
                  %210 = sbr.rel (%p208) target = $region54
                $region51: #{gae_forward.6} parent=46 // loop_body
                  _
                $region52: #{gae_forward.6} parent=46 // loop_footer
                  %s211 = sadd.s32 1, %s207
                $region53: #{gae_forward.6} parent=46 // loop_footer_branch
                  %206 = sbr.rel target = $region49
                $region54: #{gae_forward.6} parent=46 // loop_exit
                  _
                %s215 = ssub.s32 16, 1
                loop: start=0, step=1, limit=1
                $region55: #{gae_forward.6} parent=46 // loop_pre_header
                  _
                $region56: #{gae_forward.6} parent=46 // loop_header
                  %s217 = sphi 0, %s221
                  %p218 = scmp.ge.s32.totalorder %s217, 1
                  %s222 = sphi %s155, %s155
                  %s223 = sphi %s150, %s150
                $region57: #{gae_forward.6} parent=46 // loop_header_branch
                  %220 = sbr.rel (%p218) target = $region61
                $region58: #{gae_forward.6} parent=46 // loop_body
                  %v224 = vld [vmem:[%s222] sm:%s215]
                  %225 = vst [vmem:[%s223] sm:%s215] %v224
                  %v226 = vld [vmem:[%s222 + $0x8] sm:%s215]
                  %227 = vst [vmem:[%s223 + $0x4] sm:%s215] %v226
                  %v228 = vld [vmem:[%s222 + $0x10] sm:%s215]
                  %229 = vst [vmem:[%s223 + $0x8] sm:%s215] %v228
                  %v230 = vld [vmem:[%s222 + $0x18] sm:%s215]
                  %231 = vst [vmem:[%s223 + $0xc] sm:%s215] %v230
                  %v232 = vld [vmem:[%s222 + $0x20] sm:%s215]
                  %233 = vst [vmem:[%s223 + $0x10] sm:%s215] %v232
                  %v234 = vld [vmem:[%s222 + $0x28] sm:%s215]
                  %235 = vst [vmem:[%s223 + $0x14] sm:%s215] %v234
                  %v236 = vld [vmem:[%s222 + $0x30] sm:%s215]
                  %237 = vst [vmem:[%s223 + $0x18] sm:%s215] %v236
                  %v238 = vld [vmem:[%s222 + $0x38] sm:%s215]
                  %239 = vst [vmem:[%s223 + $0x1c] sm:%s215] %v238
                  %v240 = vld [vmem:[%s222 + $0x40] sm:%s215]
                  %241 = vst [vmem:[%s223 + $0x20] sm:%s215] %v240
                  %v242 = vld [vmem:[%s222 + $0x48] sm:%s215]
                  %243 = vst [vmem:[%s223 + $0x24] sm:%s215] %v242
                  %v244 = vld [vmem:[%s222 + $0x50] sm:%s215]
                  %245 = vst [vmem:[%s223 + $0x28] sm:%s215] %v244
                  %v246 = vld [vmem:[%s222 + $0x58] sm:%s215]
                  %247 = vst [vmem:[%s223 + $0x2c] sm:%s215] %v246
                  %v248 = vld [vmem:[%s222 + $0x60] sm:%s215]
                  %249 = vst [vmem:[%s223 + $0x30] sm:%s215] %v248
                  %v250 = vld [vmem:[%s222 + $0x68] sm:%s215]
                  %251 = vst [vmem:[%s223 + $0x34] sm:%s215] %v250
                  %v252 = vld [vmem:[%s222 + $0x70] sm:%s215]
                  %253 = vst [vmem:[%s223 + $0x38] sm:%s215] %v252
                  %v254 = vld [vmem:[%s222 + $0x78] sm:%s215]
                  %255 = vst [vmem:[%s223 + $0x3c] sm:%s215] %v254
                $region59: #{gae_forward.6} parent=46 // loop_footer
                  %s221 = sadd.s32 1, %s217
                $region60: #{gae_forward.6} parent=46 // loop_footer_branch
                  %216 = sbr.rel target = $region56
                $region61: #{gae_forward.6} parent=46 // loop_exit
                  _
              $region47: #{gae_forward.6} parent=31 // pred_fallthru
                _
            $region32: #{gae_forward.6} parent=27 // pred_fallthru
              _
            // Predicated region
            $region33: #{gae_forward.6} parent=27 // pred_check
              _
            $region34: #{gae_forward.6} parent=27 // pred_check_branch
              %161 = sbr.rel (0) target = $region36
            $region35: #{gae_forward.6} parent=27 // pred_region
              %s163 = ssub.s32 16, 1
              loop: start=0, step=1, limit=1
              $region37: #{gae_forward.6} parent=35 // loop_pre_header
                _
              $region38: #{gae_forward.6} parent=35 // loop_header
                %s165 = sphi 0, %s169
                %p166 = scmp.ge.s32.totalorder %s165, 1
                %s170 = sphi %s155, %s155
                %s171 = sphi %s150, %s150
              $region39: #{gae_forward.6} parent=35 // loop_header_branch
                %168 = sbr.rel (%p166) target = $region43
              $region40: #{gae_forward.6} parent=35 // loop_body
                %v172 = vld [vmem:[%s170] sm:%s163]
                %173 = vst [vmem:[%s171] sm:%s163] %v172
                %v174 = vld [vmem:[%s170 + $0x8] sm:%s163]
                %175 = vst [vmem:[%s171 + $0x4] sm:%s163] %v174
                %v176 = vld [vmem:[%s170 + $0x10] sm:%s163]
                %177 = vst [vmem:[%s171 + $0x8] sm:%s163] %v176
                %v178 = vld [vmem:[%s170 + $0x18] sm:%s163]
                %179 = vst [vmem:[%s171 + $0xc] sm:%s163] %v178
                %v180 = vld [vmem:[%s170 + $0x20] sm:%s163]
                %181 = vst [vmem:[%s171 + $0x10] sm:%s163] %v180
                %v182 = vld [vmem:[%s170 + $0x28] sm:%s163]
                %183 = vst [vmem:[%s171 + $0x14] sm:%s163] %v182
                %v184 = vld [vmem:[%s170 + $0x30] sm:%s163]
                %185 = vst [vmem:[%s171 + $0x18] sm:%s163] %v184
                %v186 = vld [vmem:[%s170 + $0x38] sm:%s163]
                %187 = vst [vmem:[%s171 + $0x1c] sm:%s163] %v186
                %v188 = vld [vmem:[%s170 + $0x40] sm:%s163]
                %189 = vst [vmem:[%s171 + $0x20] sm:%s163] %v188
                %v190 = vld [vmem:[%s170 + $0x48] sm:%s163]
                %191 = vst [vmem:[%s171 + $0x24] sm:%s163] %v190
                %v192 = vld [vmem:[%s170 + $0x50] sm:%s163]
                %193 = vst [vmem:[%s171 + $0x28] sm:%s163] %v192
                %v194 = vld [vmem:[%s170 + $0x58] sm:%s163]
                %195 = vst [vmem:[%s171 + $0x2c] sm:%s163] %v194
                %v196 = vld [vmem:[%s170 + $0x60] sm:%s163]
                %197 = vst [vmem:[%s171 + $0x30] sm:%s163] %v196
                %v198 = vld [vmem:[%s170 + $0x68] sm:%s163]
                %199 = vst [vmem:[%s171 + $0x34] sm:%s163] %v198
                %v200 = vld [vmem:[%s170 + $0x70] sm:%s163]
                %201 = vst [vmem:[%s171 + $0x38] sm:%s163] %v200
                %v202 = vld [vmem:[%s170 + $0x78] sm:%s163]
                %203 = vst [vmem:[%s171 + $0x3c] sm:%s163] %v202
              $region41: #{gae_forward.6} parent=35 // loop_footer
                %s169 = sadd.s32 1, %s165
              $region42: #{gae_forward.6} parent=35 // loop_footer_branch
                %164 = sbr.rel target = $region38
              $region43: #{gae_forward.6} parent=35 // loop_exit
                _
            $region36: #{gae_forward.6} parent=27 // pred_fallthru
              _
          $region28: #{gae_forward.6} parent=23 // pred_fallthru
            _
          %256 = vnop
        $region24: #{gae_forward.6} parent=19 // pred_fallthru
          _
        // Predicated region
        $region62: #{gae_forward.6} parent=19 // pred_check
          %p257 = pneg %p69
        $region63: #{gae_forward.6} parent=19 // pred_check_branch
          %259 = sbr.rel (%p257) target = $region65
        $region64: #{gae_forward.6} parent=19 // pred_region
          %s260 = smul.u32 16, %s17
          %p261 = scmp.lt.s32.totalorder %s260, 31
          %s262 = scalar_select %p261, %s260, 31
          %s263 = smul.addr %s262, 4
          %s264 = scalar_lea.vmem %s1, %s263
          %s265 = smul.u32 16, %s17
        $region65: #{gae_forward.6} parent=19 // pred_fallthru
          _
      $region20: #{gae_forward.6} parent=5 // pred_fallthru
        _
      %p266 = scmp.le.s32.totalorder 1, %s9
      %p267 = scmp.lt.s32.totalorder %s9, 5
      %p268 = pnand %p266, %p267
      %p269 = pneg %p268
      // Predicated region
      $region66: #{gae_forward.6} parent=5 // pred_check
        _
      $region67: #{gae_forward.6} parent=5 // pred_check_branch
        %271 = sbr.rel (%p268) target = $region69
      $region68: #{gae_forward.6} parent=5 // pred_region
        %s272 = ssub.s32 %s9, 1
        %s273 = sand.u32 %s36, 1
        %s274 = sand.u32 %s36, 1
        %s275 = smul.addr %s274, 64
        %s276 = scalar_lea.vmem [#allocation3], %s275
        // Predicated region
        $region70: #{gae_forward.6} parent=68 // pred_check
          %p277 = pneg %p49
        $region71: #{gae_forward.6} parent=68 // pred_check_branch
          %279 = sbr.rel (%p277) target = $region73
        $region72: #{gae_forward.6} parent=68 // pred_region
          _
        $region73: #{gae_forward.6} parent=68 // pred_fallthru
          _
        %s280 = sand.u32 %s36, 1
        %s281 = sand.u32 %s36, 1
        %s282 = smul.addr %s281, 64
        %s283 = scalar_lea.vmem [#allocation3], %s282
        %p284 = pneg %p49
        %p285 = pneg %p46
        %s286 = smul.u32 16, %s19
        %p287 = scmp.lt.s32.totalorder %s286, 31
        %s288 = scalar_select %p287, %s286, 31
        %s289 = smul.addr %s288, 4
        %s290 = scalar_lea.vmem %s1, %s289
        %p291 = pneg %p75
        %p292 = pneg %p72
        %p293 = pneg %p96
        %p294 = pneg %p93
        %p295 = pneg %p122
        %p296 = pneg %p119
        %s297 = smul.u32 16, %s18
        %p298 = scmp.lt.s32.totalorder %s297, 31
        %s299 = scalar_select %p298, %s297, 31
        %s300 = smul.addr %s299, 4
        %s301 = scalar_lea.vmem %s3, %s300
        %s302 = smul.u32 16, %s18
        %s303 = smul.u32 16, %s19
        %p304 = scmp.lt.s32.totalorder %s303, 31
        %s305 = scalar_select %p304, %s303, 31
        %s306 = smul.addr %s305, 4
        %s307 = scalar_lea.vmem %s1, %s306
        %s308 = smul.u32 16, %s19
        %s309 = smul.u32 16, %s18
        %p310 = scmp.lt.s32.totalorder %s309, 31
        %s311 = scalar_select %p310, %s309, 31
        %s312 = smul.addr %s311, 4
        %s313 = scalar_lea.vmem %s3, %s312
        %s314 = smul.u32 16, %s18
        %p316 = scmp.eq.s32.totalorder %s19, 0
        // Predicated region
        $region74: #{gae_forward.6} parent=68 // pred_check
          %p317 = pneg %p316
        $region75: #{gae_forward.6} parent=68 // pred_check_branch
          %319 = sbr.rel (%p317) target = $region77
        $region76: #{gae_forward.6} parent=68 // pred_region
          %320 = vst [vmem:[#allocation2] sm:$0xff] 0.0
          %321 = vst [vmem:[#allocation2 + $0x8] sm:$0xff] 0.0
          %322 = vst [vmem:[#allocation2 + $0x10] sm:$0xff] 0.0
          %323 = vst [vmem:[#allocation2 + $0x18] sm:$0xff] 0.0
          %324 = vst [vmem:[#allocation2 + $0x20] sm:$0xff] 0.0
          %325 = vst [vmem:[#allocation2 + $0x28] sm:$0xff] 0.0
          %326 = vst [vmem:[#allocation2 + $0x30] sm:$0xff] 0.0
          %327 = vst [vmem:[#allocation2 + $0x38] sm:$0xff] 0.0
          %328 = vst [vmem:[#allocation2 + $0x40] sm:$0xff] 0.0
          %329 = vst [vmem:[#allocation2 + $0x48] sm:$0xff] 0.0
          %330 = vst [vmem:[#allocation2 + $0x50] sm:$0xff] 0.0
          %331 = vst [vmem:[#allocation2 + $0x58] sm:$0xff] 0.0
          %332 = vst [vmem:[#allocation2 + $0x60] sm:$0xff] 0.0
          %333 = vst [vmem:[#allocation2 + $0x68] sm:$0xff] 0.0
          %334 = vst [vmem:[#allocation2 + $0x70] sm:$0xff] 0.0
          %335 = vst [vmem:[#allocation2 + $0x78] sm:$0xff] 0.0
        $region77: #{gae_forward.6} parent=68 // pred_fallthru
          _
        %v336 = vld [vmem:[#allocation2] sm:$0xff]
        %v337 = vld [vmem:[#allocation2 + $0x8] sm:$0xff]
        %v338 = vld [vmem:[#allocation2 + $0x10] sm:$0xff]
        %v339 = vld [vmem:[#allocation2 + $0x18] sm:$0xff]
        %v340 = vld [vmem:[#allocation2 + $0x20] sm:$0xff]
        %v341 = vld [vmem:[#allocation2 + $0x28] sm:$0xff]
        %v342 = vld [vmem:[#allocation2 + $0x30] sm:$0xff]
        %v343 = vld [vmem:[#allocation2 + $0x38] sm:$0xff]
        %v344 = vld [vmem:[#allocation2 + $0x40] sm:$0xff]
        %v345 = vld [vmem:[#allocation2 + $0x48] sm:$0xff]
        %v346 = vld [vmem:[#allocation2 + $0x50] sm:$0xff]
        %v347 = vld [vmem:[#allocation2 + $0x58] sm:$0xff]
        %v348 = vld [vmem:[#allocation2 + $0x60] sm:$0xff]
        %v349 = vld [vmem:[#allocation2 + $0x68] sm:$0xff]
        %v350 = vld [vmem:[#allocation2 + $0x70] sm:$0xff]
        %v351 = vld [vmem:[#allocation2 + $0x78] sm:$0xff]
        %v352 = vld [vmem:[%s276] sm:$0xf]
        %v353 = vld [vmem:[%s276 + $0x4] sm:$0xf]
        %v354 = vld [vmem:[%s276 + $0x8] sm:$0xf]
        %v355 = vld [vmem:[%s276 + $0xc] sm:$0xf]
        %v356 = vld [vmem:[%s276 + $0x10] sm:$0xf]
        %v357 = vld [vmem:[%s276 + $0x14] sm:$0xf]
        %v358 = vld [vmem:[%s276 + $0x18] sm:$0xf]
        %v359 = vld [vmem:[%s276 + $0x1c] sm:$0xf]
        %v360 = vld [vmem:[%s276 + $0x20] sm:$0xf]
        %v361 = vld [vmem:[%s276 + $0x24] sm:$0xf]
        %v362 = vld [vmem:[%s276 + $0x28] sm:$0xf]
        %v363 = vld [vmem:[%s276 + $0x2c] sm:$0xf]
        %v364 = vld [vmem:[%s276 + $0x30] sm:$0xf]
        %v365 = vld [vmem:[%s276 + $0x34] sm:$0xf]
        %v366 = vld [vmem:[%s276 + $0x38] sm:$0xf]
        %v367 = vld [vmem:[%s276 + $0x3c] sm:$0xf]
        %v368 = vld [vmem:[%s307] sm:$0xf]
        %v369 = vld [vmem:[%s307 + $0x4] sm:$0xf]
        %v370 = vld [vmem:[%s307 + $0x8] sm:$0xf]
        %v371 = vld [vmem:[%s307 + $0xc] sm:$0xf]
        %v372 = vld [vmem:[%s307 + $0x10] sm:$0xf]
        %v373 = vld [vmem:[%s307 + $0x14] sm:$0xf]
        %v374 = vld [vmem:[%s307 + $0x18] sm:$0xf]
        %v375 = vld [vmem:[%s307 + $0x1c] sm:$0xf]
        %v376 = vld [vmem:[%s307 + $0x20] sm:$0xf]
        %v377 = vld [vmem:[%s307 + $0x24] sm:$0xf]
        %v378 = vld [vmem:[%s307 + $0x28] sm:$0xf]
        %v379 = vld [vmem:[%s307 + $0x2c] sm:$0xf]
        %v380 = vld [vmem:[%s307 + $0x30] sm:$0xf]
        %v381 = vld [vmem:[%s307 + $0x34] sm:$0xf]
        %v382 = vld [vmem:[%s307 + $0x38] sm:$0xf]
        %v383 = vld [vmem:[%s307 + $0x3c] sm:$0xf]
        %v400 = vunpack.c.l.b16 %v352
        %v401 = vunpack.c.l.b16 %v353
        %v402 = vunpack.c.l.b16 %v354
        %v403 = vunpack.c.l.b16 %v355
        %v404 = vunpack.c.l.b16 %v356
        %v405 = vunpack.c.l.b16 %v357
        %v406 = vunpack.c.l.b16 %v358
        %v407 = vunpack.c.l.b16 %v359
        %v408 = vunpack.c.l.b16 %v360
        %v409 = vunpack.c.l.b16 %v361
        %v410 = vunpack.c.l.b16 %v362
        %v411 = vunpack.c.l.b16 %v363
        %v412 = vunpack.c.l.b16 %v364
        %v413 = vunpack.c.l.b16 %v365
        %v414 = vunpack.c.l.b16 %v366
        %v415 = vunpack.c.l.b16 %v367
        %v416 = vpack.c.b16 %v401, %v400
        %v417 = vpack.c.b16 %v403, %v402
        %v418 = vpack.c.b16 %v405, %v404
        %v419 = vpack.c.b16 %v407, %v406
        %v420 = vpack.c.b16 %v409, %v408
        %v421 = vpack.c.b16 %v411, %v410
        %v422 = vpack.c.b16 %v413, %v412
        %v423 = vpack.c.b16 %v415, %v414
        %v448 = vunpack.c.l.b16 %v368
        %v449 = vunpack.c.l.b16 %v369
        %v450 = vunpack.c.l.b16 %v370
        %v451 = vunpack.c.l.b16 %v371
        %v452 = vunpack.c.l.b16 %v372
        %v453 = vunpack.c.l.b16 %v373
        %v454 = vunpack.c.l.b16 %v374
        %v455 = vunpack.c.l.b16 %v375
        %v456 = vunpack.c.l.b16 %v376
        %v457 = vunpack.c.l.b16 %v377
        %v458 = vunpack.c.l.b16 %v378
        %v459 = vunpack.c.l.b16 %v379
        %v460 = vunpack.c.l.b16 %v380
        %v461 = vunpack.c.l.b16 %v381
        %v462 = vunpack.c.l.b16 %v382
        %v463 = vunpack.c.l.b16 %v383
        %v464 = vpack.c.b16 %v449, %v448
        %v465 = vpack.c.b16 %v451, %v450
        %v466 = vpack.c.b16 %v453, %v452
        %v467 = vpack.c.b16 %v455, %v454
        %v468 = vpack.c.b16 %v457, %v456
        %v469 = vpack.c.b16 %v459, %v458
        %v470 = vpack.c.b16 %v461, %v460
        %v471 = vpack.c.b16 %v463, %v462
        %480 = vmatprep.subr.bf16.mxu0 0
        %481 = vmatpush1.bf16.msra.mxu0 %v471
        %482 = vmatprep.subr.bf16.mxu0 0
        %483 = vmatpush1.bf16.msra.mxu0 %v470
        %484 = vmatprep.subr.bf16.mxu0 0
        %485 = vmatpush1.bf16.msra.mxu0 %v469
        %486 = vmatprep.subr.bf16.mxu0 0
        %487 = vmatpush1.bf16.msra.mxu0 %v468
        %488 = vmatprep.subr.bf16.mxu0 0
        %489 = vmatpush1.bf16.msra.mxu0 %v467
        %490 = vmatprep.subr.bf16.mxu0 0
        %491 = vmatpush1.bf16.msra.mxu0 %v466
        %492 = vmatprep.subr.bf16.mxu0 0
        %493 = vmatpush1.bf16.msra.mxu0 %v465
        %494 = vmatprep.subr.bf16.mxu0 0
        %495 = vmatpush1.bf16.msra.mxu0 %v464
        %496 = vmatprep.subr.bf16.mxu0 0
        %497 = vmatpush2.bf16.msra.mxu0 0
        %498 = vmatprep.subr.bf16.mxu0 0
        %499 = vmatpush2.bf16.msra.mxu0 0
        %500 = vmatprep.subr.bf16.mxu0 0
        %501 = vmatpush2.bf16.msra.mxu0 0
        %502 = vmatprep.subr.bf16.mxu0 0
        %503 = vmatpush2.bf16.msra.mxu0 0
        %504 = vmatprep.subr.bf16.mxu0 0
        %505 = vmatpush2.bf16.msra.mxu0 0
        %506 = vmatprep.subr.bf16.mxu0 0
        %507 = vmatpush2.bf16.msra.mxu0 0
        %508 = vmatprep.subr.bf16.mxu0 0
        %509 = vmatpush2.bf16.msra.mxu0 0
        %510 = vmatprep.subr.bf16.mxu0 0
        %511 = vmatpush2.bf16.msra.mxu0 0
        %512 = vmatprep.mubr.bf16.mxu0 0
        %513 = vmatmul.mubr.bf16.gmra.mxu0 %v416
        %v514 = vpop.f32.mrf.mxu0
        %v515 = vadd.f32 0.0, %v514
        %v516 = vpop.f32.mrf.mxu0
        %v517 = vpop.f32.mrf.mxu0
        %v518 = vadd.f32 0.0, %v517
        %v519 = vpop.f32.mrf.mxu0
        %520 = vmatprep.mubr.bf16.mxu0 0
        %521 = vmatmul.mubr.bf16.gmra.mxu0 %v417
        %v522 = vpop.f32.mrf.mxu0
        %v523 = vadd.f32 0.0, %v522
        %v524 = vpop.f32.mrf.mxu0
        %v525 = vpop.f32.mrf.mxu0
        %v526 = vadd.f32 0.0, %v525
        %v527 = vpop.f32.mrf.mxu0
        %528 = vmatprep.mubr.bf16.mxu0 0
        %529 = vmatmul.mubr.bf16.gmra.mxu0 %v418
        %v530 = vpop.f32.mrf.mxu0
        %v531 = vadd.f32 0.0, %v530
        %v532 = vpop.f32.mrf.mxu0
        %v533 = vpop.f32.mrf.mxu0
        %v534 = vadd.f32 0.0, %v533
        %v535 = vpop.f32.mrf.mxu0
        %536 = vmatprep.mubr.bf16.mxu0 0
        %537 = vmatmul.mubr.bf16.gmra.mxu0 %v419
        %v538 = vpop.f32.mrf.mxu0
        %v539 = vadd.f32 0.0, %v538
        %v540 = vpop.f32.mrf.mxu0
        %v541 = vpop.f32.mrf.mxu0
        %v542 = vadd.f32 0.0, %v541
        %v543 = vpop.f32.mrf.mxu0
        %544 = vmatprep.mubr.bf16.mxu0 0
        %545 = vmatmul.mubr.bf16.gmra.mxu0 %v420
        %v546 = vpop.f32.mrf.mxu0
        %v547 = vadd.f32 0.0, %v546
        %v548 = vpop.f32.mrf.mxu0
        %v549 = vpop.f32.mrf.mxu0
        %v550 = vadd.f32 0.0, %v549
        %v551 = vpop.f32.mrf.mxu0
        %552 = vmatprep.mubr.bf16.mxu0 0
        %553 = vmatmul.mubr.bf16.gmra.mxu0 %v421
        %v554 = vpop.f32.mrf.mxu0
        %v555 = vadd.f32 0.0, %v554
        %v556 = vpop.f32.mrf.mxu0
        %v557 = vpop.f32.mrf.mxu0
        %v558 = vadd.f32 0.0, %v557
        %v559 = vpop.f32.mrf.mxu0
        %560 = vmatprep.mubr.bf16.mxu0 0
        %561 = vmatmul.mubr.bf16.gmra.mxu0 %v422
        %v562 = vpop.f32.mrf.mxu0
        %v563 = vadd.f32 0.0, %v562
        %v564 = vpop.f32.mrf.mxu0
        %v565 = vpop.f32.mrf.mxu0
        %v566 = vadd.f32 0.0, %v565
        %v567 = vpop.f32.mrf.mxu0
        %568 = vmatprep.mubr.bf16.mxu0 0
        %569 = vmatmul.mubr.bf16.gmra.mxu0 %v423
        %v570 = vpop.f32.mrf.mxu0
        %v571 = vadd.f32 0.0, %v570
        %v572 = vpop.f32.mrf.mxu0
        %v573 = vpop.f32.mrf.mxu0
        %v574 = vadd.f32 0.0, %v573
        %v575 = vpop.f32.mrf.mxu0
        %576 = vdwg.mxu0
        %v577 = vadd.f32 %v336, %v515
        %v578 = vadd.f32 %v337, %v518
        %v579 = vadd.f32 %v338, %v523
        %v580 = vadd.f32 %v339, %v526
        %v581 = vadd.f32 %v340, %v531
        %v582 = vadd.f32 %v341, %v534
        %v583 = vadd.f32 %v342, %v539
        %v584 = vadd.f32 %v343, %v542
        %v585 = vadd.f32 %v344, %v547
        %v586 = vadd.f32 %v345, %v550
        %v587 = vadd.f32 %v346, %v555
        %v588 = vadd.f32 %v347, %v558
        %v589 = vadd.f32 %v348, %v563
        %v590 = vadd.f32 %v349, %v566
        %v591 = vadd.f32 %v350, %v571
        %v592 = vadd.f32 %v351, %v574
        %593 = vst [vmem:[#allocation2] sm:$0xff] %v577
        %594 = vst [vmem:[#allocation2 + $0x8] sm:$0xff] %v578
        %595 = vst [vmem:[#allocation2 + $0x10] sm:$0xff] %v579
        %596 = vst [vmem:[#allocation2 + $0x18] sm:$0xff] %v580
        %597 = vst [vmem:[#allocation2 + $0x20] sm:$0xff] %v581
        %598 = vst [vmem:[#allocation2 + $0x28] sm:$0xff] %v582
        %599 = vst [vmem:[#allocation2 + $0x30] sm:$0xff] %v583
        %600 = vst [vmem:[#allocation2 + $0x38] sm:$0xff] %v584
        %601 = vst [vmem:[#allocation2 + $0x40] sm:$0xff] %v585
        %602 = vst [vmem:[#allocation2 + $0x48] sm:$0xff] %v586
        %603 = vst [vmem:[#allocation2 + $0x50] sm:$0xff] %v587
        %604 = vst [vmem:[#allocation2 + $0x58] sm:$0xff] %v588
        %605 = vst [vmem:[#allocation2 + $0x60] sm:$0xff] %v589
        %606 = vst [vmem:[#allocation2 + $0x68] sm:$0xff] %v590
        %607 = vst [vmem:[#allocation2 + $0x70] sm:$0xff] %v591
        %608 = vst [vmem:[#allocation2 + $0x78] sm:$0xff] %v592
        %p609 = scmp.eq.s32.totalorder %s19, 1
        // Predicated region
        $region78: #{gae_forward.6} parent=68 // pred_check
          %p610 = pneg %p609
        $region79: #{gae_forward.6} parent=68 // pred_check_branch
          %612 = sbr.rel (%p610) target = $region81
        $region80: #{gae_forward.6} parent=68 // pred_region
          %v613 = vld [vmem:[#allocation2] sm:$0xff]
          %v614 = vld [vmem:[#allocation2 + $0x8] sm:$0xff]
          %v615 = vld [vmem:[#allocation2 + $0x10] sm:$0xff]
          %v616 = vld [vmem:[#allocation2 + $0x18] sm:$0xff]
          %v617 = vld [vmem:[#allocation2 + $0x20] sm:$0xff]
          %v618 = vld [vmem:[#allocation2 + $0x28] sm:$0xff]
          %v619 = vld [vmem:[#allocation2 + $0x30] sm:$0xff]
          %v620 = vld [vmem:[#allocation2 + $0x38] sm:$0xff]
          %v621 = vld [vmem:[#allocation2 + $0x40] sm:$0xff]
          %v622 = vld [vmem:[#allocation2 + $0x48] sm:$0xff]
          %v623 = vld [vmem:[#allocation2 + $0x50] sm:$0xff]
          %v624 = vld [vmem:[#allocation2 + $0x58] sm:$0xff]
          %v625 = vld [vmem:[#allocation2 + $0x60] sm:$0xff]
          %v626 = vld [vmem:[#allocation2 + $0x68] sm:$0xff]
          %v627 = vld [vmem:[#allocation2 + $0x70] sm:$0xff]
          %v628 = vld [vmem:[#allocation2 + $0x78] sm:$0xff]
          %v629 = vld [vmem:[%s2] sm:$0x1]
          %v631 = vlaneseq
          %v632 = vshrl.u32 %v631, 7
          %v633 = vsub.s32 0, %v632
          %v634 = vrot.slane %v629, %v633
          %v636 = vadd.f32 %v613, %v634
          %v637 = vadd.f32 %v614, %v634
          %v638 = vadd.f32 %v615, %v634
          %v639 = vadd.f32 %v616, %v634
          %v640 = vadd.f32 %v617, %v634
          %v641 = vadd.f32 %v618, %v634
          %v642 = vadd.f32 %v619, %v634
          %v643 = vadd.f32 %v620, %v634
          %v644 = vadd.f32 %v621, %v634
          %v645 = vadd.f32 %v622, %v634
          %v646 = vadd.f32 %v623, %v634
          %v647 = vadd.f32 %v624, %v634
          %v648 = vadd.f32 %v625, %v634
          %v649 = vadd.f32 %v626, %v634
          %v650 = vadd.f32 %v627, %v634
          %v651 = vadd.f32 %v628, %v634
          %v652 = vmax.f32 %v636, 0.0
          %v653 = vmax.f32 %v637, 0.0
          %v654 = vmax.f32 %v638, 0.0
          %v655 = vmax.f32 %v639, 0.0
          %v656 = vmax.f32 %v640, 0.0
          %v657 = vmax.f32 %v641, 0.0
          %v658 = vmax.f32 %v642, 0.0
          %v659 = vmax.f32 %v643, 0.0
          %v660 = vmax.f32 %v644, 0.0
          %v661 = vmax.f32 %v645, 0.0
          %v662 = vmax.f32 %v646, 0.0
          %v663 = vmax.f32 %v647, 0.0
          %v664 = vmax.f32 %v648, 0.0
          %v665 = vmax.f32 %v649, 0.0
          %v666 = vmax.f32 %v650, 0.0
          %v667 = vmax.f32 %v651, 0.0
          %v668 = vpack.c.bf16 %v653, %v652
          %v669 = vpack.c.bf16 %v655, %v654
          %v670 = vpack.c.bf16 %v657, %v656
          %v671 = vpack.c.bf16 %v659, %v658
          %v672 = vpack.c.bf16 %v661, %v660
          %v673 = vpack.c.bf16 %v663, %v662
          %v674 = vpack.c.bf16 %v665, %v664
          %v675 = vpack.c.bf16 %v667, %v666
          %v684 = vunpack.c.l.b16 %v668
          %v685 = vunpack.c.h.b16 %v668
          %v686 = vunpack.c.l.b16 %v669
          %v687 = vunpack.c.h.b16 %v669
          %v688 = vunpack.c.l.b16 %v670
          %v689 = vunpack.c.h.b16 %v670
          %v690 = vunpack.c.l.b16 %v671
          %v691 = vunpack.c.h.b16 %v671
          %v692 = vunpack.c.l.b16 %v672
          %v693 = vunpack.c.h.b16 %v672
          %v694 = vunpack.c.l.b16 %v673
          %v695 = vunpack.c.h.b16 %v673
          %v696 = vunpack.c.l.b16 %v674
          %v697 = vunpack.c.h.b16 %v674
          %v698 = vunpack.c.l.b16 %v675
          %v699 = vunpack.c.h.b16 %v675
          %v700 = vpack.c.b16 %v684, %v684
          %v701 = vpack.c.b16 %v685, %v685
          %v702 = vpack.c.b16 %v686, %v686
          %v703 = vpack.c.b16 %v687, %v687
          %v704 = vpack.c.b16 %v688, %v688
          %v705 = vpack.c.b16 %v689, %v689
          %v706 = vpack.c.b16 %v690, %v690
          %v707 = vpack.c.b16 %v691, %v691
          %v708 = vpack.c.b16 %v692, %v692
          %v709 = vpack.c.b16 %v693, %v693
          %v710 = vpack.c.b16 %v694, %v694
          %v711 = vpack.c.b16 %v695, %v695
          %v712 = vpack.c.b16 %v696, %v696
          %v713 = vpack.c.b16 %v697, %v697
          %v714 = vpack.c.b16 %v698, %v698
          %v715 = vpack.c.b16 %v699, %v699
          %732 = vst [vmem:[%s313] sm:$0xf] %v700
          %733 = vst [vmem:[%s313 + $0x4] sm:$0xf] %v701
          %734 = vst [vmem:[%s313 + $0x8] sm:$0xf] %v702
          %735 = vst [vmem:[%s313 + $0xc] sm:$0xf] %v703
          %736 = vst [vmem:[%s313 + $0x10] sm:$0xf] %v704
          %737 = vst [vmem:[%s313 + $0x14] sm:$0xf] %v705
          %738 = vst [vmem:[%s313 + $0x18] sm:$0xf] %v706
          %739 = vst [vmem:[%s313 + $0x1c] sm:$0xf] %v707
          %740 = vst [vmem:[%s313 + $0x20] sm:$0xf] %v708
          %741 = vst [vmem:[%s313 + $0x24] sm:$0xf] %v709
          %742 = vst [vmem:[%s313 + $0x28] sm:$0xf] %v710
          %743 = vst [vmem:[%s313 + $0x2c] sm:$0xf] %v711
          %744 = vst [vmem:[%s313 + $0x30] sm:$0xf] %v712
          %745 = vst [vmem:[%s313 + $0x34] sm:$0xf] %v713
          %746 = vst [vmem:[%s313 + $0x38] sm:$0xf] %v714
          %747 = vst [vmem:[%s313 + $0x3c] sm:$0xf] %v715
        $region81: #{gae_forward.6} parent=68 // pred_fallthru
          _
        %s748 = smul.u32 16, %s18
        %p749 = scmp.lt.s32.totalorder %s748, 31
        %s750 = scalar_select %p749, %s748, 31
        %s751 = smul.addr %s750, 4
        %s752 = scalar_lea.vmem %s3, %s751
        // Predicated region
        $region82: #{gae_forward.6} parent=68 // pred_check
          %p753 = pneg %p119
        $region83: #{gae_forward.6} parent=68 // pred_check_branch
          %755 = sbr.rel (%p753) target = $region85
        $region84: #{gae_forward.6} parent=68 // pred_region
          %s756 = smul.u32 16, %s18
        $region85: #{gae_forward.6} parent=68 // pred_fallthru
          _
      $region69: #{gae_forward.6} parent=5 // pred_fallthru
        _
      %p757 = scmp.le.s32.totalorder 2, %s9
      // Predicated region
      $region86: #{gae_forward.6} parent=5 // pred_check
        %p758 = pneg %p757
      $region87: #{gae_forward.6} parent=5 // pred_check_branch
        %760 = sbr.rel (%p758) target = $region89
      $region88: #{gae_forward.6} parent=5 // pred_region
        %s761 = ssub.s32 %s9, 2
        // Predicated region
        $region90: #{gae_forward.6} parent=88 // pred_check
          %p762 = pneg %p125
        $region91: #{gae_forward.6} parent=88 // pred_check_branch
          %764 = sbr.rel (%p762) target = $region93
        $region92: #{gae_forward.6} parent=88 // pred_region
          %s765 = smul.u32 16, %s20
          %p766 = scmp.lt.s32.totalorder %s765, 31
          %s767 = scalar_select %p766, %s765, 31
          %s768 = smul.addr %s767, 4
          %s769 = scalar_lea.vmem %s3, %s768
        $region93: #{gae_forward.6} parent=88 // pred_fallthru
          _
      $region89: #{gae_forward.6} parent=5 // pred_fallthru
        _
    $region6: #{gae_forward.6} parent=1 // loop_footer
      %s13 = sadd.s32 1, %s9
    $region7: #{gae_forward.6} parent=1 // loop_footer_branch
      %8 = sbr.rel target = $region3
    $region8: #{gae_forward.6} parent=1 // loop_exit
      _

// kernel: gae_forward.8
$region0: #{gae_forward.8}
  #allocation0 [shape = 'u32[]', space=smem, size = 0x4, offset = 0x4, fixed_abs, tag = 'smem constant byte address 0x4 - core index']
  #allocation1 [shape = 'u32[144,128]{1,0:T(1,128)}', space=vmem, size = 0x12000, scoped, tag = 'internal scratch']
  #allocation2 [shape = 'f32[128,128]{1,0:T(8,128)}', space=vmem, size = 0x10000, scoped, tag = 'scratch operand']
  %s0 = inlined_call_operand.vmem [shape: bf16[256,256], index: 0, kind: input, shape index: {}]
  %s1 = inlined_call_operand.vmem [shape: bf16[256,128], index: 1, kind: input, shape index: {}]
  %s2 = inlined_call_operand.vmem [shape: f32[1,128], index: 2, kind: input, shape index: {}]
  %s3 = inlined_call_operand.vmem [shape: f32[256,128], index: 3, kind: output, shape index: {}]
  %s4 = sld [smem:[#allocation0]]
  $region94: #{gae_forward.8} parent=0
    _
  %s6 = ssub.s32 1, %s4
  %s7 = scalar_select 0, %s6, %s4
  $region1: #{gae_forward.8} parent=0
    #allocation3 [shape = 'u8[65536]{0}', space=vmem, size = 0x10000, scoped, tag = 'input window, operand 0']
    loop: start=0, step=1, limit=6
    $region2: #{gae_forward.8} parent=1 // loop_pre_header
      _
    $region3: #{gae_forward.8} parent=1 // loop_header
      %s9 = sphi 0, %s13
      %p10 = scmp.ge.s32.totalorder %s9, 6
      %s16 = sphi 0, %s28
      %s17 = sphi 0, %s24
      %s18 = sphi 0, %s16
      %s19 = sphi 0, %s17
      %s20 = sphi 0, %s18
      %s21 = sphi 0, %s19
      %s33 = sphi 0, %s35
      %s36 = sphi 0, %s33
      %s37 = sphi 0, %s36
      %s53 = sphi 0, %s37
      %s59 = sphi 0, %s61
      %s62 = sphi 0, %s59
      %s63 = sphi 0, %s62
      %s79 = sphi 0, %s63
      %s83 = sphi 0, %s83
      %s85 = sphi 0, %s83
      %s86 = sphi 0, %s85
      %s100 = sphi 0, %s86
      %s106 = sphi 0, %s108
      %s109 = sphi 0, %s106
      %s110 = sphi 0, %s109
      %s126 = sphi 0, %s110
    $region4: #{gae_forward.8} parent=1 // loop_header_branch
      %12 = sbr.rel (%p10) target = $region8
    $region5: #{gae_forward.8} parent=1 // loop_body
      %s14 = ssub.s32 %s9, 1
      %s15 = ssub.s32 %s9, 2
      %s22 = sadd.s32 1, %s17
      %p23 = scmp.ge.s32.totalorder %s22, 2
      %s24 = scalar_select %p23, 0, %s22
      %s25 = sadd.s32 1, %s16
      %s26 = scalar_select %p23, %s25, %s16
      %p27 = scmp.ge.s32.totalorder %s26, 2
      %s28 = scalar_select %p27, 0, %s26
      %s29 = ssub.s32 %s16, %s28
      %s30 = ssub.s32 %s17, %s24
      %s31 = sor.u32 %s29, %s30
      %p32 = scmp.eq.s32.totalorder %s31, 0
      %s34 = sadd.s32 %s33, 1
      %s35 = scalar_select %p32, %s33, %s34
      %p38 = pneg %p32
      %p39 = scmp.eq.s32.totalorder %s9, 3
      %p40 = por %p38, %p39
      %p41 = scmp.ne.s32.totalorder %s33, %s36
      %p42 = scmp.eq.s32.totalorder %s9, 0
      %p43 = por %p41, %p42
      %p44 = scmp.ne.s32.totalorder %s33, %s36
      %p45 = scmp.eq.s32.totalorder %s14, 3
      %p46 = por %p44, %p45
      %p47 = scmp.ne.s32.totalorder %s36, %s37
      %p48 = scmp.eq.s32.totalorder %s14, 0
      %p49 = por %p47, %p48
      %p50 = scmp.ne.s32.totalorder %s36, %s37
      %p51 = scmp.eq.s32.totalorder %s15, 3
      %p52 = por %p50, %p51
      %p54 = scmp.ne.s32.totalorder %s37, %s53
      %p55 = scmp.eq.s32.totalorder %s15, 0
      %p56 = por %p54, %p55
      %s57 = ssub.s32 %s17, %s24
      %p58 = scmp.eq.s32.totalorder %s57, 0
      %s60 = sadd.s32 %s59, 1
      %s61 = scalar_select %p58, %s59, %s60
      %p64 = pneg %p58
      %p65 = scmp.eq.s32.totalorder %s9, 3
      %p66 = por %p64, %p65
      %p67 = scmp.ne.s32.totalorder %s59, %s62
      %p68 = scmp.eq.s32.totalorder %s9, 0
      %p69 = por %p67, %p68
      %p70 = scmp.ne.s32.totalorder %s59, %s62
      %p71 = scmp.eq.s32.totalorder %s14, 3
      %p72 = por %p70, %p71
      %p73 = scmp.ne.s32.totalorder %s62, %s63
      %p74 = scmp.eq.s32.totalorder %s14, 0
      %p75 = por %p73, %p74
      %p76 = scmp.ne.s32.totalorder %s62, %s63
      %p77 = scmp.eq.s32.totalorder %s15, 3
      %p78 = por %p76, %p77
      %p80 = scmp.ne.s32.totalorder %s63, %s79
      %p81 = scmp.eq.s32.totalorder %s15, 0
      %p82 = por %p80, %p81
      %s84 = sadd.s32 %s83, 1
      %p87 = scmp.eq.s32.totalorder %s9, 3
      %p88 = scmp.ne.s32.totalorder %s83, %s85
      %p89 = scmp.eq.s32.totalorder %s9, 0
      %p90 = por %p88, %p89
      %p91 = scmp.ne.s32.totalorder %s83, %s85
      %p92 = scmp.eq.s32.totalorder %s14, 3
      %p93 = por %p91, %p92
      %p94 = scmp.ne.s32.totalorder %s85, %s86
      %p95 = scmp.eq.s32.totalorder %s14, 0
      %p96 = por %p94, %p95
      %p97 = scmp.ne.s32.totalorder %s85, %s86
      %p98 = scmp.eq.s32.totalorder %s15, 3
      %p99 = por %p97, %p98
      %p101 = scmp.ne.s32.totalorder %s86, %s100
      %p102 = scmp.eq.s32.totalorder %s15, 0
      %p103 = por %p101, %p102
      %s104 = ssub.s32 %s16, %s28
      %p105 = scmp.eq.s32.totalorder %s104, 0
      %s107 = sadd.s32 %s106, 1
      %s108 = scalar_select %p105, %s106, %s107
      %p111 = pneg %p105
      %p112 = scmp.eq.s32.totalorder %s9, 3
      %p113 = por %p111, %p112
      %p114 = scmp.ne.s32.totalorder %s106, %s109
      %p115 = scmp.eq.s32.totalorder %s9, 0
      %p116 = por %p114, %p115
      %p117 = scmp.ne.s32.totalorder %s106, %s109
      %p118 = scmp.eq.s32.totalorder %s14, 3
      %p119 = por %p117, %p118
      %p120 = scmp.ne.s32.totalorder %s109, %s110
      %p121 = scmp.eq.s32.totalorder %s14, 0
      %p122 = por %p120, %p121
      %p123 = scmp.ne.s32.totalorder %s109, %s110
      %p124 = scmp.eq.s32.totalorder %s15, 3
      %p125 = por %p123, %p124
      %p127 = scmp.ne.s32.totalorder %s110, %s126
      %p128 = scmp.eq.s32.totalorder %s15, 0
      %p129 = por %p127, %p128
      %p130 = scmp.le.s32.totalorder 1, %s9
      %p131 = scmp.lt.s32.totalorder %s9, 5
      %p132 = pnand %p130, %p131
      %p133 = pneg %p132
      // Predicated region
      $region9: #{gae_forward.8} parent=5 // pred_check
        _
      $region10: #{gae_forward.8} parent=5 // pred_check_branch
        %135 = sbr.rel (%p132) target = $region12
      $region11: #{gae_forward.8} parent=5 // pred_region
        %s136 = ssub.s32 %s9, 1
        // Predicated region
        $region13: #{gae_forward.8} parent=11 // pred_check
          %p137 = pneg %p96
        $region14: #{gae_forward.8} parent=11 // pred_check_branch
          %139 = sbr.rel (%p137) target = $region16
        $region15: #{gae_forward.8} parent=11 // pred_region
          _
        $region16: #{gae_forward.8} parent=11 // pred_fallthru
          _
      $region12: #{gae_forward.8} parent=5 // pred_fallthru
        _
      %p140 = scmp.lt.s32.totalorder %s9, 4
      // Predicated region
      $region17: #{gae_forward.8} parent=5 // pred_check
        %p141 = pneg %p140
      $region18: #{gae_forward.8} parent=5 // pred_check_branch
        %143 = sbr.rel (%p141) target = $region20
      $region19: #{gae_forward.8} parent=5 // pred_region
        // Predicated region
        $region21: #{gae_forward.8} parent=19 // pred_check
          %p144 = pneg %p43
        $region22: #{gae_forward.8} parent=19 // pred_check_branch
          %146 = sbr.rel (%p144) target = $region24
        $region23: #{gae_forward.8} parent=19 // pred_region
          %s147 = sand.u32 %s33, 1
          %s148 = sand.u32 %s33, 1
          %s149 = smul.addr %s148, 64
          %s150 = scalar_lea.vmem [#allocation3], %s149
          %s151 = smul.u32 16, %s16
          %s152 = smul.addr %s151, 2
          %s153 = sadd.s32 %s17, %s152
          %s154 = smul.addr %s153, 4
          %s155 = scalar_lea.vmem %s0, %s154
          // Predicated region
          $region25: #{gae_forward.8} parent=23 // pred_check
            _
          $region26: #{gae_forward.8} parent=23 // pred_check_branch
            %157 = sbr.rel (0) target = $region28
          $region27: #{gae_forward.8} parent=23 // pred_region
            // Predicated region
            $region29: #{gae_forward.8} parent=27 // pred_check
              _
            $region30: #{gae_forward.8} parent=27 // pred_check_branch
              %159 = sbr.rel target = $region32
            $region31: #{gae_forward.8} parent=27 // pred_region
              // Predicated region
              $region44: #{gae_forward.8} parent=31 // pred_check
                _
              $region45: #{gae_forward.8} parent=31 // pred_check_branch
                %205 = sbr.rel (0) target = $region47
              $region46: #{gae_forward.8} parent=31 // pred_region
                loop: start=0, step=1, limit=1
                $region48: #{gae_forward.8} parent=46 // loop_pre_header
                  _
                $region49: #{gae_forward.8} parent=46 // loop_header
                  %s207 = sphi 0, %s211
                  %p208 = scmp.ge.s32.totalorder %s207, 1
                  %s212 = sphi %s155, %s155
                  %s213 = sphi %s150, %s150
                $region50: #{gae_forward.8} parent=46 // loop_header_branch
                  %210 = sbr.rel (%p208) target = $region54
                $region51: #{gae_forward.8} parent=46 // loop_body
                  _
                $region52: #{gae_forward.8} parent=46 // loop_footer
                  %s211 = sadd.s32 1, %s207
                $region53: #{gae_forward.8} parent=46 // loop_footer_branch
                  %206 = sbr.rel target = $region49
                $region54: #{gae_forward.8} parent=46 // loop_exit
                  _
                %s215 = ssub.s32 16, 1
                loop: start=0, step=1, limit=1
                $region55: #{gae_forward.8} parent=46 // loop_pre_header
                  _
                $region56: #{gae_forward.8} parent=46 // loop_header
                  %s217 = sphi 0, %s221
                  %p218 = scmp.ge.s32.totalorder %s217, 1
                  %s222 = sphi %s155, %s155
                  %s223 = sphi %s150, %s150
                $region57: #{gae_forward.8} parent=46 // loop_header_branch
                  %220 = sbr.rel (%p218) target = $region61
                $region58: #{gae_forward.8} parent=46 // loop_body
                  %v224 = vld [vmem:[%s222] sm:%s215]
                  %225 = vst [vmem:[%s223] sm:%s215] %v224
                  %v226 = vld [vmem:[%s222 + $0x8] sm:%s215]
                  %227 = vst [vmem:[%s223 + $0x4] sm:%s215] %v226
                  %v228 = vld [vmem:[%s222 + $0x10] sm:%s215]
                  %229 = vst [vmem:[%s223 + $0x8] sm:%s215] %v228
                  %v230 = vld [vmem:[%s222 + $0x18] sm:%s215]
                  %231 = vst [vmem:[%s223 + $0xc] sm:%s215] %v230
                  %v232 = vld [vmem:[%s222 + $0x20] sm:%s215]
                  %233 = vst [vmem:[%s223 + $0x10] sm:%s215] %v232
                  %v234 = vld [vmem:[%s222 + $0x28] sm:%s215]
                  %235 = vst [vmem:[%s223 + $0x14] sm:%s215] %v234
                  %v236 = vld [vmem:[%s222 + $0x30] sm:%s215]
                  %237 = vst [vmem:[%s223 + $0x18] sm:%s215] %v236
                  %v238 = vld [vmem:[%s222 + $0x38] sm:%s215]
                  %239 = vst [vmem:[%s223 + $0x1c] sm:%s215] %v238
                  %v240 = vld [vmem:[%s222 + $0x40] sm:%s215]
                  %241 = vst [vmem:[%s223 + $0x20] sm:%s215] %v240
                  %v242 = vld [vmem:[%s222 + $0x48] sm:%s215]
                  %243 = vst [vmem:[%s223 + $0x24] sm:%s215] %v242
                  %v244 = vld [vmem:[%s222 + $0x50] sm:%s215]
                  %245 = vst [vmem:[%s223 + $0x28] sm:%s215] %v244
                  %v246 = vld [vmem:[%s222 + $0x58] sm:%s215]
                  %247 = vst [vmem:[%s223 + $0x2c] sm:%s215] %v246
                  %v248 = vld [vmem:[%s222 + $0x60] sm:%s215]
                  %249 = vst [vmem:[%s223 + $0x30] sm:%s215] %v248
                  %v250 = vld [vmem:[%s222 + $0x68] sm:%s215]
                  %251 = vst [vmem:[%s223 + $0x34] sm:%s215] %v250
                  %v252 = vld [vmem:[%s222 + $0x70] sm:%s215]
                  %253 = vst [vmem:[%s223 + $0x38] sm:%s215] %v252
                  %v254 = vld [vmem:[%s222 + $0x78] sm:%s215]
                  %255 = vst [vmem:[%s223 + $0x3c] sm:%s215] %v254
                $region59: #{gae_forward.8} parent=46 // loop_footer
                  %s221 = sadd.s32 1, %s217
                $region60: #{gae_forward.8} parent=46 // loop_footer_branch
                  %216 = sbr.rel target = $region56
                $region61: #{gae_forward.8} parent=46 // loop_exit
                  _
              $region47: #{gae_forward.8} parent=31 // pred_fallthru
                _
            $region32: #{gae_forward.8} parent=27 // pred_fallthru
              _
            // Predicated region
            $region33: #{gae_forward.8} parent=27 // pred_check
              _
            $region34: #{gae_forward.8} parent=27 // pred_check_branch
              %161 = sbr.rel (0) target = $region36
            $region35: #{gae_forward.8} parent=27 // pred_region
              %s163 = ssub.s32 16, 1
              loop: start=0, step=1, limit=1
              $region37: #{gae_forward.8} parent=35 // loop_pre_header
                _
              $region38: #{gae_forward.8} parent=35 // loop_header
                %s165 = sphi 0, %s169
                %p166 = scmp.ge.s32.totalorder %s165, 1
                %s170 = sphi %s155, %s155
                %s171 = sphi %s150, %s150
              $region39: #{gae_forward.8} parent=35 // loop_header_branch
                %168 = sbr.rel (%p166) target = $region43
              $region40: #{gae_forward.8} parent=35 // loop_body
                %v172 = vld [vmem:[%s170] sm:%s163]
                %173 = vst [vmem:[%s171] sm:%s163] %v172
                %v174 = vld [vmem:[%s170 + $0x8] sm:%s163]
                %175 = vst [vmem:[%s171 + $0x4] sm:%s163] %v174
                %v176 = vld [vmem:[%s170 + $0x10] sm:%s163]
                %177 = vst [vmem:[%s171 + $0x8] sm:%s163] %v176
                %v178 = vld [vmem:[%s170 + $0x18] sm:%s163]
                %179 = vst [vmem:[%s171 + $0xc] sm:%s163] %v178
                %v180 = vld [vmem:[%s170 + $0x20] sm:%s163]
                %181 = vst [vmem:[%s171 + $0x10] sm:%s163] %v180
                %v182 = vld [vmem:[%s170 + $0x28] sm:%s163]
                %183 = vst [vmem:[%s171 + $0x14] sm:%s163] %v182
                %v184 = vld [vmem:[%s170 + $0x30] sm:%s163]
                %185 = vst [vmem:[%s171 + $0x18] sm:%s163] %v184
                %v186 = vld [vmem:[%s170 + $0x38] sm:%s163]
                %187 = vst [vmem:[%s171 + $0x1c] sm:%s163] %v186
                %v188 = vld [vmem:[%s170 + $0x40] sm:%s163]
                %189 = vst [vmem:[%s171 + $0x20] sm:%s163] %v188
                %v190 = vld [vmem:[%s170 + $0x48] sm:%s163]
                %191 = vst [vmem:[%s171 + $0x24] sm:%s163] %v190
                %v192 = vld [vmem:[%s170 + $0x50] sm:%s163]
                %193 = vst [vmem:[%s171 + $0x28] sm:%s163] %v192
                %v194 = vld [vmem:[%s170 + $0x58] sm:%s163]
                %195 = vst [vmem:[%s171 + $0x2c] sm:%s163] %v194
                %v196 = vld [vmem:[%s170 + $0x60] sm:%s163]
                %197 = vst [vmem:[%s171 + $0x30] sm:%s163] %v196
                %v198 = vld [vmem:[%s170 + $0x68] sm:%s163]
                %199 = vst [vmem:[%s171 + $0x34] sm:%s163] %v198
                %v200 = vld [vmem:[%s170 + $0x70] sm:%s163]
                %201 = vst [vmem:[%s171 + $0x38] sm:%s163] %v200
                %v202 = vld [vmem:[%s170 + $0x78] sm:%s163]
                %203 = vst [vmem:[%s171 + $0x3c] sm:%s163] %v202
              $region41: #{gae_forward.8} parent=35 // loop_footer
                %s169 = sadd.s32 1, %s165
              $region42: #{gae_forward.8} parent=35 // loop_footer_branch
                %164 = sbr.rel target = $region38
              $region43: #{gae_forward.8} parent=35 // loop_exit
                _
            $region36: #{gae_forward.8} parent=27 // pred_fallthru
              _
          $region28: #{gae_forward.8} parent=23 // pred_fallthru
            _
          %256 = vnop
        $region24: #{gae_forward.8} parent=19 // pred_fallthru
          _
        // Predicated region
        $region62: #{gae_forward.8} parent=19 // pred_check
          %p257 = pneg %p69
        $region63: #{gae_forward.8} parent=19 // pred_check_branch
          %259 = sbr.rel (%p257) target = $region65
        $region64: #{gae_forward.8} parent=19 // pred_region
          %s260 = smul.u32 16, %s17
          %p261 = scmp.lt.s32.totalorder %s260, 31
          %s262 = scalar_select %p261, %s260, 31
          %s263 = smul.addr %s262, 4
          %s264 = scalar_lea.vmem %s1, %s263
          %s265 = smul.u32 16, %s17
        $region65: #{gae_forward.8} parent=19 // pred_fallthru
          _
      $region20: #{gae_forward.8} parent=5 // pred_fallthru
        _
      %p266 = scmp.le.s32.totalorder 1, %s9
      %p267 = scmp.lt.s32.totalorder %s9, 5
      %p268 = pnand %p266, %p267
      %p269 = pneg %p268
      // Predicated region
      $region66: #{gae_forward.8} parent=5 // pred_check
        _
      $region67: #{gae_forward.8} parent=5 // pred_check_branch
        %271 = sbr.rel (%p268) target = $region69
      $region68: #{gae_forward.8} parent=5 // pred_region
        %s272 = ssub.s32 %s9, 1
        %s273 = sand.u32 %s36, 1
        %s274 = sand.u32 %s36, 1
        %s275 = smul.addr %s274, 64
        %s276 = scalar_lea.vmem [#allocation3], %s275
        // Predicated region
        $region70: #{gae_forward.8} parent=68 // pred_check
          %p277 = pneg %p49
        $region71: #{gae_forward.8} parent=68 // pred_check_branch
          %279 = sbr.rel (%p277) target = $region73
        $region72: #{gae_forward.8} parent=68 // pred_region
          _
        $region73: #{gae_forward.8} parent=68 // pred_fallthru
          _
        %s280 = sand.u32 %s36, 1
        %s281 = sand.u32 %s36, 1
        %s282 = smul.addr %s281, 64
        %s283 = scalar_lea.vmem [#allocation3], %s282
        %p284 = pneg %p49
        %p285 = pneg %p46
        %s286 = smul.u32 16, %s19
        %p287 = scmp.lt.s32.totalorder %s286, 31
        %s288 = scalar_select %p287, %s286, 31
        %s289 = smul.addr %s288, 4
        %s290 = scalar_lea.vmem %s1, %s289
        %p291 = pneg %p75
        %p292 = pneg %p72
        %p293 = pneg %p96
        %p294 = pneg %p93
        %p295 = pneg %p122
        %p296 = pneg %p119
        %s297 = smul.u32 16, %s18
        %p298 = scmp.lt.s32.totalorder %s297, 31
        %s299 = scalar_select %p298, %s297, 31
        %s300 = smul.addr %s299, 8
        %s301 = scalar_lea.vmem %s3, %s300
        %s302 = smul.u32 16, %s18
        %s303 = smul.u32 16, %s19
        %p304 = scmp.lt.s32.totalorder %s303, 31
        %s305 = scalar_select %p304, %s303, 31
        %s306 = smul.addr %s305, 4
        %s307 = scalar_lea.vmem %s1, %s306
        %s308 = smul.u32 16, %s19
        %s309 = smul.u32 16, %s18
        %p310 = scmp.lt.s32.totalorder %s309, 31
        %s311 = scalar_select %p310, %s309, 31
        %s312 = smul.addr %s311, 8
        %s313 = scalar_lea.vmem %s3, %s312
        %s314 = smul.u32 16, %s18
        %p316 = scmp.eq.s32.totalorder %s19, 0
        // Predicated region
        $region74: #{gae_forward.8} parent=68 // pred_check
          %p317 = pneg %p316
        $region75: #{gae_forward.8} parent=68 // pred_check_branch
          %319 = sbr.rel (%p317) target = $region77
        $region76: #{gae_forward.8} parent=68 // pred_region
          %320 = vst [vmem:[#allocation2] sm:$0xff] 0.0
          %321 = vst [vmem:[#allocation2 + $0x8] sm:$0xff] 0.0
          %322 = vst [vmem:[#allocation2 + $0x10] sm:$0xff] 0.0
          %323 = vst [vmem:[#allocation2 + $0x18] sm:$0xff] 0.0
          %324 = vst [vmem:[#allocation2 + $0x20] sm:$0xff] 0.0
          %325 = vst [vmem:[#allocation2 + $0x28] sm:$0xff] 0.0
          %326 = vst [vmem:[#allocation2 + $0x30] sm:$0xff] 0.0
          %327 = vst [vmem:[#allocation2 + $0x38] sm:$0xff] 0.0
          %328 = vst [vmem:[#allocation2 + $0x40] sm:$0xff] 0.0
          %329 = vst [vmem:[#allocation2 + $0x48] sm:$0xff] 0.0
          %330 = vst [vmem:[#allocation2 + $0x50] sm:$0xff] 0.0
          %331 = vst [vmem:[#allocation2 + $0x58] sm:$0xff] 0.0
          %332 = vst [vmem:[#allocation2 + $0x60] sm:$0xff] 0.0
          %333 = vst [vmem:[#allocation2 + $0x68] sm:$0xff] 0.0
          %334 = vst [vmem:[#allocation2 + $0x70] sm:$0xff] 0.0
          %335 = vst [vmem:[#allocation2 + $0x78] sm:$0xff] 0.0
        $region77: #{gae_forward.8} parent=68 // pred_fallthru
          _
        %v336 = vld [vmem:[#allocation2] sm:$0xff]
        %v337 = vld [vmem:[#allocation2 + $0x8] sm:$0xff]
        %v338 = vld [vmem:[#allocation2 + $0x10] sm:$0xff]
        %v339 = vld [vmem:[#allocation2 + $0x18] sm:$0xff]
        %v340 = vld [vmem:[#allocation2 + $0x20] sm:$0xff]
        %v341 = vld [vmem:[#allocation2 + $0x28] sm:$0xff]
        %v342 = vld [vmem:[#allocation2 + $0x30] sm:$0xff]
        %v343 = vld [vmem:[#allocation2 + $0x38] sm:$0xff]
        %v344 = vld [vmem:[#allocation2 + $0x40] sm:$0xff]
        %v345 = vld [vmem:[#allocation2 + $0x48] sm:$0xff]
        %v346 = vld [vmem:[#allocation2 + $0x50] sm:$0xff]
        %v347 = vld [vmem:[#allocation2 + $0x58] sm:$0xff]
        %v348 = vld [vmem:[#allocation2 + $0x60] sm:$0xff]
        %v349 = vld [vmem:[#allocation2 + $0x68] sm:$0xff]
        %v350 = vld [vmem:[#allocation2 + $0x70] sm:$0xff]
        %v351 = vld [vmem:[#allocation2 + $0x78] sm:$0xff]
        %v352 = vld [vmem:[%s276] sm:$0xf]
        %v353 = vld [vmem:[%s276 + $0x4] sm:$0xf]
        %v354 = vld [vmem:[%s276 + $0x8] sm:$0xf]
        %v355 = vld [vmem:[%s276 + $0xc] sm:$0xf]
        %v356 = vld [vmem:[%s276 + $0x10] sm:$0xf]
        %v357 = vld [vmem:[%s276 + $0x14] sm:$0xf]
        %v358 = vld [vmem:[%s276 + $0x18] sm:$0xf]
        %v359 = vld [vmem:[%s276 + $0x1c] sm:$0xf]
        %v360 = vld [vmem:[%s276 + $0x20] sm:$0xf]
        %v361 = vld [vmem:[%s276 + $0x24] sm:$0xf]
        %v362 = vld [vmem:[%s276 + $0x28] sm:$0xf]
        %v363 = vld [vmem:[%s276 + $0x2c] sm:$0xf]
        %v364 = vld [vmem:[%s276 + $0x30] sm:$0xf]
        %v365 = vld [vmem:[%s276 + $0x34] sm:$0xf]
        %v366 = vld [vmem:[%s276 + $0x38] sm:$0xf]
        %v367 = vld [vmem:[%s276 + $0x3c] sm:$0xf]
        %v368 = vld [vmem:[%s307] sm:$0xf]
        %v369 = vld [vmem:[%s307 + $0x4] sm:$0xf]
        %v370 = vld [vmem:[%s307 + $0x8] sm:$0xf]
        %v371 = vld [vmem:[%s307 + $0xc] sm:$0xf]
        %v372 = vld [vmem:[%s307 + $0x10] sm:$0xf]
        %v373 = vld [vmem:[%s307 + $0x14] sm:$0xf]
        %v374 = vld [vmem:[%s307 + $0x18] sm:$0xf]
        %v375 = vld [vmem:[%s307 + $0x1c] sm:$0xf]
        %v376 = vld [vmem:[%s307 + $0x20] sm:$0xf]
        %v377 = vld [vmem:[%s307 + $0x24] sm:$0xf]
        %v378 = vld [vmem:[%s307 + $0x28] sm:$0xf]
        %v379 = vld [vmem:[%s307 + $0x2c] sm:$0xf]
        %v380 = vld [vmem:[%s307 + $0x30] sm:$0xf]
        %v381 = vld [vmem:[%s307 + $0x34] sm:$0xf]
        %v382 = vld [vmem:[%s307 + $0x38] sm:$0xf]
        %v383 = vld [vmem:[%s307 + $0x3c] sm:$0xf]
        %v400 = vunpack.c.l.b16 %v352
        %v401 = vunpack.c.l.b16 %v353
        %v402 = vunpack.c.l.b16 %v354
        %v403 = vunpack.c.l.b16 %v355
        %v404 = vunpack.c.l.b16 %v356
        %v405 = vunpack.c.l.b16 %v357
        %v406 = vunpack.c.l.b16 %v358
        %v407 = vunpack.c.l.b16 %v359
        %v408 = vunpack.c.l.b16 %v360
        %v409 = vunpack.c.l.b16 %v361
        %v410 = vunpack.c.l.b16 %v362
        %v411 = vunpack.c.l.b16 %v363
        %v412 = vunpack.c.l.b16 %v364
        %v413 = vunpack.c.l.b16 %v365
        %v414 = vunpack.c.l.b16 %v366
        %v415 = vunpack.c.l.b16 %v367
        %v416 = vpack.c.b16 %v401, %v400
        %v417 = vpack.c.b16 %v403, %v402
        %v418 = vpack.c.b16 %v405, %v404
        %v419 = vpack.c.b16 %v407, %v406
        %v420 = vpack.c.b16 %v409, %v408
        %v421 = vpack.c.b16 %v411, %v410
        %v422 = vpack.c.b16 %v413, %v412
        %v423 = vpack.c.b16 %v415, %v414
        %v448 = vunpack.c.l.b16 %v368
        %v449 = vunpack.c.l.b16 %v369
        %v450 = vunpack.c.l.b16 %v370
        %v451 = vunpack.c.l.b16 %v371
        %v452 = vunpack.c.l.b16 %v372
        %v453 = vunpack.c.l.b16 %v373
        %v454 = vunpack.c.l.b16 %v374
        %v455 = vunpack.c.l.b16 %v375
        %v456 = vunpack.c.l.b16 %v376
        %v457 = vunpack.c.l.b16 %v377
        %v458 = vunpack.c.l.b16 %v378
        %v459 = vunpack.c.l.b16 %v379
        %v460 = vunpack.c.l.b16 %v380
        %v461 = vunpack.c.l.b16 %v381
        %v462 = vunpack.c.l.b16 %v382
        %v463 = vunpack.c.l.b16 %v383
        %v464 = vpack.c.b16 %v449, %v448
        %v465 = vpack.c.b16 %v451, %v450
        %v466 = vpack.c.b16 %v453, %v452
        %v467 = vpack.c.b16 %v455, %v454
        %v468 = vpack.c.b16 %v457, %v456
        %v469 = vpack.c.b16 %v459, %v458
        %v470 = vpack.c.b16 %v461, %v460
        %v471 = vpack.c.b16 %v463, %v462
        %480 = vmatprep.subr.bf16.mxu0 0
        %481 = vmatpush1.bf16.msra.mxu0 %v471
        %482 = vmatprep.subr.bf16.mxu0 0
        %483 = vmatpush1.bf16.msra.mxu0 %v470
        %484 = vmatprep.subr.bf16.mxu0 0
        %485 = vmatpush1.bf16.msra.mxu0 %v469
        %486 = vmatprep.subr.bf16.mxu0 0
        %487 = vmatpush1.bf16.msra.mxu0 %v468
        %488 = vmatprep.subr.bf16.mxu0 0
        %489 = vmatpush1.bf16.msra.mxu0 %v467
        %490 = vmatprep.subr.bf16.mxu0 0
        %491 = vmatpush1.bf16.msra.mxu0 %v466
        %492 = vmatprep.subr.bf16.mxu0 0
        %493 = vmatpush1.bf16.msra.mxu0 %v465
        %494 = vmatprep.subr.bf16.mxu0 0
        %495 = vmatpush1.bf16.msra.mxu0 %v464
        %496 = vmatprep.subr.bf16.mxu0 0
        %497 = vmatpush2.bf16.msra.mxu0 0
        %498 = vmatprep.subr.bf16.mxu0 0
        %499 = vmatpush2.bf16.msra.mxu0 0
        %500 = vmatprep.subr.bf16.mxu0 0
        %501 = vmatpush2.bf16.msra.mxu0 0
        %502 = vmatprep.subr.bf16.mxu0 0
        %503 = vmatpush2.bf16.msra.mxu0 0
        %504 = vmatprep.subr.bf16.mxu0 0
        %505 = vmatpush2.bf16.msra.mxu0 0
        %506 = vmatprep.subr.bf16.mxu0 0
        %507 = vmatpush2.bf16.msra.mxu0 0
        %508 = vmatprep.subr.bf16.mxu0 0
        %509 = vmatpush2.bf16.msra.mxu0 0
        %510 = vmatprep.subr.bf16.mxu0 0
        %511 = vmatpush2.bf16.msra.mxu0 0
        %512 = vmatprep.mubr.bf16.mxu0 0
        %513 = vmatmul.mubr.bf16.gmra.mxu0 %v416
        %v514 = vpop.f32.mrf.mxu0
        %v515 = vadd.f32 0.0, %v514
        %v516 = vpop.f32.mrf.mxu0
        %v517 = vpop.f32.mrf.mxu0
        %v518 = vadd.f32 0.0, %v517
        %v519 = vpop.f32.mrf.mxu0
        %520 = vmatprep.mubr.bf16.mxu0 0
        %521 = vmatmul.mubr.bf16.gmra.mxu0 %v417
        %v522 = vpop.f32.mrf.mxu0
        %v523 = vadd.f32 0.0, %v522
        %v524 = vpop.f32.mrf.mxu0
        %v525 = vpop.f32.mrf.mxu0
        %v526 = vadd.f32 0.0, %v525
        %v527 = vpop.f32.mrf.mxu0
        %528 = vmatprep.mubr.bf16.mxu0 0
        %529 = vmatmul.mubr.bf16.gmra.mxu0 %v418
        %v530 = vpop.f32.mrf.mxu0
        %v531 = vadd.f32 0.0, %v530
        %v532 = vpop.f32.mrf.mxu0
        %v533 = vpop.f32.mrf.mxu0
        %v534 = vadd.f32 0.0, %v533
        %v535 = vpop.f32.mrf.mxu0
        %536 = vmatprep.mubr.bf16.mxu0 0
        %537 = vmatmul.mubr.bf16.gmra.mxu0 %v419
        %v538 = vpop.f32.mrf.mxu0
        %v539 = vadd.f32 0.0, %v538
        %v540 = vpop.f32.mrf.mxu0
        %v541 = vpop.f32.mrf.mxu0
        %v542 = vadd.f32 0.0, %v541
        %v543 = vpop.f32.mrf.mxu0
        %544 = vmatprep.mubr.bf16.mxu0 0
        %545 = vmatmul.mubr.bf16.gmra.mxu0 %v420
        %v546 = vpop.f32.mrf.mxu0
        %v547 = vadd.f32 0.0, %v546
        %v548 = vpop.f32.mrf.mxu0
        %v549 = vpop.f32.mrf.mxu0
        %v550 = vadd.f32 0.0, %v549
        %v551 = vpop.f32.mrf.mxu0
        %552 = vmatprep.mubr.bf16.mxu0 0
        %553 = vmatmul.mubr.bf16.gmra.mxu0 %v421
        %v554 = vpop.f32.mrf.mxu0
        %v555 = vadd.f32 0.0, %v554
        %v556 = vpop.f32.mrf.mxu0
        %v557 = vpop.f32.mrf.mxu0
        %v558 = vadd.f32 0.0, %v557
        %v559 = vpop.f32.mrf.mxu0
        %560 = vmatprep.mubr.bf16.mxu0 0
        %561 = vmatmul.mubr.bf16.gmra.mxu0 %v422
        %v562 = vpop.f32.mrf.mxu0
        %v563 = vadd.f32 0.0, %v562
        %v564 = vpop.f32.mrf.mxu0
        %v565 = vpop.f32.mrf.mxu0
        %v566 = vadd.f32 0.0, %v565
        %v567 = vpop.f32.mrf.mxu0
        %568 = vmatprep.mubr.bf16.mxu0 0
        %569 = vmatmul.mubr.bf16.gmra.mxu0 %v423
        %v570 = vpop.f32.mrf.mxu0
        %v571 = vadd.f32 0.0, %v570
        %v572 = vpop.f32.mrf.mxu0
        %v573 = vpop.f32.mrf.mxu0
        %v574 = vadd.f32 0.0, %v573
        %v575 = vpop.f32.mrf.mxu0
        %576 = vdwg.mxu0
        %v577 = vadd.f32 %v336, %v515
        %v578 = vadd.f32 %v337, %v518
        %v579 = vadd.f32 %v338, %v523
        %v580 = vadd.f32 %v339, %v526
        %v581 = vadd.f32 %v340, %v531
        %v582 = vadd.f32 %v341, %v534
        %v583 = vadd.f32 %v342, %v539
        %v584 = vadd.f32 %v343, %v542
        %v585 = vadd.f32 %v344, %v547
        %v586 = vadd.f32 %v345, %v550
        %v587 = vadd.f32 %v346, %v555
        %v588 = vadd.f32 %v347, %v558
        %v589 = vadd.f32 %v348, %v563
        %v590 = vadd.f32 %v349, %v566
        %v591 = vadd.f32 %v350, %v571
        %v592 = vadd.f32 %v351, %v574
        %593 = vst [vmem:[#allocation2] sm:$0xff] %v577
        %594 = vst [vmem:[#allocation2 + $0x8] sm:$0xff] %v578
        %595 = vst [vmem:[#allocation2 + $0x10] sm:$0xff] %v579
        %596 = vst [vmem:[#allocation2 + $0x18] sm:$0xff] %v580
        %597 = vst [vmem:[#allocation2 + $0x20] sm:$0xff] %v581
        %598 = vst [vmem:[#allocation2 + $0x28] sm:$0xff] %v582
        %599 = vst [vmem:[#allocation2 + $0x30] sm:$0xff] %v583
        %600 = vst [vmem:[#allocation2 + $0x38] sm:$0xff] %v584
        %601 = vst [vmem:[#allocation2 + $0x40] sm:$0xff] %v585
        %602 = vst [vmem:[#allocation2 + $0x48] sm:$0xff] %v586
        %603 = vst [vmem:[#allocation2 + $0x50] sm:$0xff] %v587
        %604 = vst [vmem:[#allocation2 + $0x58] sm:$0xff] %v588
        %605 = vst [vmem:[#allocation2 + $0x60] sm:$0xff] %v589
        %606 = vst [vmem:[#allocation2 + $0x68] sm:$0xff] %v590
        %607 = vst [vmem:[#allocation2 + $0x70] sm:$0xff] %v591
        %608 = vst [vmem:[#allocation2 + $0x78] sm:$0xff] %v592
        %p609 = scmp.eq.s32.totalorder %s19, 1
        // Predicated region
        $region78: #{gae_forward.8} parent=68 // pred_check
          %p610 = pneg %p609
        $region79: #{gae_forward.8} parent=68 // pred_check_branch
          %612 = sbr.rel (%p610) target = $region81
        $region80: #{gae_forward.8} parent=68 // pred_region
          %v613 = vld [vmem:[#allocation2] sm:$0xff]
          %v614 = vld [vmem:[#allocation2 + $0x8] sm:$0xff]
          %v615 = vld [vmem:[#allocation2 + $0x10] sm:$0xff]
          %v616 = vld [vmem:[#allocation2 + $0x18] sm:$0xff]
          %v617 = vld [vmem:[#allocation2 + $0x20] sm:$0xff]
          %v618 = vld [vmem:[#allocation2 + $0x28] sm:$0xff]
          %v619 = vld [vmem:[#allocation2 + $0x30] sm:$0xff]
          %v620 = vld [vmem:[#allocation2 + $0x38] sm:$0xff]
          %v621 = vld [vmem:[#allocation2 + $0x40] sm:$0xff]
          %v622 = vld [vmem:[#allocation2 + $0x48] sm:$0xff]
          %v623 = vld [vmem:[#allocation2 + $0x50] sm:$0xff]
          %v624 = vld [vmem:[#allocation2 + $0x58] sm:$0xff]
          %v625 = vld [vmem:[#allocation2 + $0x60] sm:$0xff]
          %v626 = vld [vmem:[#allocation2 + $0x68] sm:$0xff]
          %v627 = vld [vmem:[#allocation2 + $0x70] sm:$0xff]
          %v628 = vld [vmem:[#allocation2 + $0x78] sm:$0xff]
          %v629 = vld [vmem:[%s2] sm:$0x1]
          %v631 = vlaneseq
          %v632 = vshrl.u32 %v631, 7
          %v633 = vsub.s32 0, %v632
          %v634 = vrot.slane %v629, %v633
          %v636 = vadd.f32 %v613, %v634
          %v637 = vadd.f32 %v614, %v634
          %v638 = vadd.f32 %v615, %v634
          %v639 = vadd.f32 %v616, %v634
          %v640 = vadd.f32 %v617, %v634
          %v641 = vadd.f32 %v618, %v634
          %v642 = vadd.f32 %v619, %v634
          %v643 = vadd.f32 %v620, %v634
          %v644 = vadd.f32 %v621, %v634
          %v645 = vadd.f32 %v622, %v634
          %v646 = vadd.f32 %v623, %v634
          %v647 = vadd.f32 %v624, %v634
          %v648 = vadd.f32 %v625, %v634
          %v649 = vadd.f32 %v626, %v634
          %v650 = vadd.f32 %v627, %v634
          %v651 = vadd.f32 %v628, %v634
          %v652 = vmax.f32 %v636, 0.0
          %v653 = vmax.f32 %v637, 0.0
          %v654 = vmax.f32 %v638, 0.0
          %v655 = vmax.f32 %v639, 0.0
          %v656 = vmax.f32 %v640, 0.0
          %v657 = vmax.f32 %v641, 0.0
          %v658 = vmax.f32 %v642, 0.0
          %v659 = vmax.f32 %v643, 0.0
          %v660 = vmax.f32 %v644, 0.0
          %v661 = vmax.f32 %v645, 0.0
          %v662 = vmax.f32 %v646, 0.0
          %v663 = vmax.f32 %v647, 0.0
          %v664 = vmax.f32 %v648, 0.0
          %v665 = vmax.f32 %v649, 0.0
          %v666 = vmax.f32 %v650, 0.0
          %v667 = vmax.f32 %v651, 0.0
          %668 = vst [vmem:[%s313] sm:$0xff] %v652
          %669 = vst [vmem:[%s313 + $0x8] sm:$0xff] %v653
          %670 = vst [vmem:[%s313 + $0x10] sm:$0xff] %v654
          %671 = vst [vmem:[%s313 + $0x18] sm:$0xff] %v655
          %672 = vst [vmem:[%s313 + $0x20] sm:$0xff] %v656
          %673 = vst [vmem:[%s313 + $0x28] sm:$0xff] %v657
          %674 = vst [vmem:[%s313 + $0x30] sm:$0xff] %v658
          %675 = vst [vmem:[%s313 + $0x38] sm:$0xff] %v659
          %676 = vst [vmem:[%s313 + $0x40] sm:$0xff] %v660
          %677 = vst [vmem:[%s313 + $0x48] sm:$0xff] %v661
          %678 = vst [vmem:[%s313 + $0x50] sm:$0xff] %v662
          %679 = vst [vmem:[%s313 + $0x58] sm:$0xff] %v663
          %680 = vst [vmem:[%s313 + $0x60] sm:$0xff] %v664
          %681 = vst [vmem:[%s313 + $0x68] sm:$0xff] %v665
          %682 = vst [vmem:[%s313 + $0x70] sm:$0xff] %v666
          %683 = vst [vmem:[%s313 + $0x78] sm:$0xff] %v667
        $region81: #{gae_forward.8} parent=68 // pred_fallthru
          _
        %s684 = smul.u32 16, %s18
        %p685 = scmp.lt.s32.totalorder %s684, 31
        %s686 = scalar_select %p685, %s684, 31
        %s687 = smul.addr %s686, 8
        %s688 = scalar_lea.vmem %s3, %s687
        // Predicated region
        $region82: #{gae_forward.8} parent=68 // pred_check
          %p689 = pneg %p119
        $region83: #{gae_forward.8} parent=68 // pred_check_branch
          %691 = sbr.rel (%p689) target = $region85
        $region84: #{gae_forward.8} parent=68 // pred_region
          %s692 = smul.u32 16, %s18
        $region85: #{gae_forward.8} parent=68 // pred_fallthru
          _
      $region69: #{gae_forward.8} parent=5 // pred_fallthru
        _
      %p693 = scmp.le.s32.totalorder 2, %s9
      // Predicated region
      $region86: #{gae_forward.8} parent=5 // pred_check
        %p694 = pneg %p693
      $region87: #{gae_forward.8} parent=5 // pred_check_branch
        %696 = sbr.rel (%p694) target = $region89
      $region88: #{gae_forward.8} parent=5 // pred_region
        %s697 = ssub.s32 %s9, 2
        // Predicated region
        $region90: #{gae_forward.8} parent=88 // pred_check
          %p698 = pneg %p125
        $region91: #{gae_forward.8} parent=88 // pred_check_branch
          %700 = sbr.rel (%p698) target = $region93
        $region92: #{gae_forward.8} parent=88 // pred_region
          %s701 = smul.u32 16, %s20
          %p702 = scmp.lt.s32.totalorder %s701, 31
          %s703 = scalar_select %p702, %s701, 31
          %s704 = smul.addr %s703, 8
          %s705 = scalar_lea.vmem %s3, %s704
        $region93: #{gae_forward.8} parent=88 // pred_fallthru
          _
      $region89: #{gae_forward.8} parent=5 // pred_fallthru
        _
    $region6: #{gae_forward.8} parent=1 // loop_footer
      %s13 = sadd.s32 1, %s9
    $region7: #{gae_forward.8} parent=1 // loop_footer_branch
      %8 = sbr.rel target = $region3
    $region8: #{gae_forward.8} parent=1 // loop_exit
      _

// kernel: gae_forward.9
$region0: #{gae_forward.9}
  #allocation0 [shape = 'u32[]', space=smem, size = 0x4, offset = 0x4, fixed_abs, tag = 'smem constant byte address 0x4 - core index']
  #allocation1 [shape = 'u32[144,128]{1,0:T(1,128)}', space=vmem, size = 0x12000, scoped, tag = 'internal scratch']
  %s0 = inlined_call_operand.vmem [shape: bf16[256,128], index: 0, kind: input, shape index: {}, may-alias: {0,1}]
  %s1 = inlined_call_operand.vmem [shape: bf16[256,128], index: 1, kind: input, shape index: {}, may-alias: {0,1}]
  %s2 = inlined_call_operand.vmem [shape: f32[256,256], index: 2, kind: output, shape index: {}]
  %s3 = sld [smem:[#allocation0]]
  $region75: #{gae_forward.9} parent=0
    _
  %s5 = ssub.s32 1, %s3
  %s6 = scalar_select 0, %s5, %s3
  $region1: #{gae_forward.9} parent=0
    #allocation2 [shape = 'u8[131072]{0}', space=vmem, size = 0x20000, scoped, tag = 'output window, operand 0']
    loop: start=0, step=1, limit=6
    $region2: #{gae_forward.9} parent=1 // loop_pre_header
      _
    $region3: #{gae_forward.9} parent=1 // loop_header
      %s8 = sphi 0, %s12
      %p9 = scmp.ge.s32.totalorder %s8, 6
      %s15 = sphi 0, %s27
      %s16 = sphi 0, %s23
      %s17 = sphi 0, %s15
      %s18 = sphi 0, %s16
      %s19 = sphi 0, %s17
      %s20 = sphi 0, %s18
      %s30 = sphi 0, %s32
      %s33 = sphi 0, %s30
      %s34 = sphi 0, %s33
      %s50 = sphi 0, %s34
      %s56 = sphi 0, %s58
      %s59 = sphi 0, %s56
      %s60 = sphi 0, %s59
      %s76 = sphi 0, %s60
      %s84 = sphi 0, %s86
      %s87 = sphi 0, %s84
      %s88 = sphi 0, %s87
      %s104 = sphi 0, %s88
    $region4: #{gae_forward.9} parent=1 // loop_header_branch
      %11 = sbr.rel (%p9) target = $region8
    $region5: #{gae_forward.9} parent=1 // loop_body
      %s13 = ssub.s32 %s8, 1
      %s14 = ssub.s32 %s8, 2
      %s21 = sadd.s32 1, %s16
      %p22 = scmp.ge.s32.totalorder %s21, 2
      %s23 = scalar_select %p22, 0, %s21
      %s24 = sadd.s32 1, %s15
      %s25 = scalar_select %p22, %s24, %s15
      %p26 = scmp.ge.s32.totalorder %s25, 2
      %s27 = scalar_select %p26, 0, %s25
      %s28 = ssub.s32 %s15, %s27
      %p29 = scmp.eq.s32.totalorder %s28, 0
      %s31 = sadd.s32 %s30, 1
      %s32 = scalar_select %p29, %s30, %s31
      %p35 = pneg %p29
      %p36 = scmp.eq.s32.totalorder %s8, 3
      %p37 = por %p35, %p36
      %p38 = scmp.ne.s32.totalorder %s30, %s33
      %p39 = scmp.eq.s32.totalorder %s8, 0
      %p40 = por %p38, %p39
      %p41 = scmp.ne.s32.totalorder %s30, %s33
      %p42 = scmp.eq.s32.totalorder %s13, 3
      %p43 = por %p41, %p42
      %p44 = scmp.ne.s32.totalorder %s33, %s34
      %p45 = scmp.eq.s32.totalorder %s13, 0
      %p46 = por %p44, %p45
      %p47 = scmp.ne.s32.totalorder %s33, %s34
      %p48 = scmp.eq.s32.totalorder %s14, 3
      %p49 = por %p47, %p48
      %p51 = scmp.ne.s32.totalorder %s34, %s50
      %p52 = scmp.eq.s32.totalorder %s14, 0
      %p53 = por %p51, %p52
      %s54 = ssub.s32 %s16, %s23
      %p55 = scmp.eq.s32.totalorder %s54, 0
      %s57 = sadd.s32 %s56, 1
      %s58 = scalar_select %p55, %s56, %s57
      %p61 = pneg %p55
      %p62 = scmp.eq.s32.totalorder %s8, 3
      %p63 = por %p61, %p62
      %p64 = scmp.ne.s32.totalorder %s56, %s59
      %p65 = scmp.eq.s32.totalorder %s8, 0
      %p66 = por %p64, %p65
      %p67 = scmp.ne.s32.totalorder %s56, %s59
      %p68 = scmp.eq.s32.totalorder %s13, 3
      %p69 = por %p67, %p68
      %p70 = scmp.ne.s32.totalorder %s59, %s60
      %p71 = scmp.eq.s32.totalorder %s13, 0
      %p72 = por %p70, %p71
      %p73 = scmp.ne.s32.totalorder %s59, %s60
      %p74 = scmp.eq.s32.totalorder %s14, 3
      %p75 = por %p73, %p74
      %p77 = scmp.ne.s32.totalorder %s60, %s76
      %p78 = scmp.eq.s32.totalorder %s14, 0
      %p79 = por %p77, %p78
      %s80 = ssub.s32 %s15, %s27
      %s81 = ssub.s32 %s16, %s23
      %s82 = sor.u32 %s80, %s81
      %p83 = scmp.eq.s32.totalorder %s82, 0
      %s85 = sadd.s32 %s84, 1
      %s86 = scalar_select %p83, %s84, %s85
      %p89 = pneg %p83
      %p90 = scmp.eq.s32.totalorder %s8, 3
      %p91 = por %p89, %p90
      %p92 = scmp.ne.s32.totalorder %s84, %s87
      %p93 = scmp.eq.s32.totalorder %s8, 0
      %p94 = por %p92, %p93
      %p95 = scmp.ne.s32.totalorder %s84, %s87
      %p96 = scmp.eq.s32.totalorder %s13, 3
      %p97 = por %p95, %p96
      %p98 = scmp.ne.s32.totalorder %s87, %s88
      %p99 = scmp.eq.s32.totalorder %s13, 0
      %p100 = por %p98, %p99
      %p101 = scmp.ne.s32.totalorder %s87, %s88
      %p102 = scmp.eq.s32.totalorder %s14, 3
      %p103 = por %p101, %p102
      %p105 = scmp.ne.s32.totalorder %s88, %s104
      %p106 = scmp.eq.s32.totalorder %s14, 0
      %p107 = por %p105, %p106
      %p108 = scmp.le.s32.totalorder 1, %s8
      %p109 = scmp.lt.s32.totalorder %s8, 5
      %p110 = pnand %p108, %p109
      %p111 = pneg %p110
      // Predicated region
      $region9: #{gae_forward.9} parent=5 // pred_check
        _
      $region10: #{gae_forward.9} parent=5 // pred_check_branch
        %113 = sbr.rel (%p110) target = $region12
      $region11: #{gae_forward.9} parent=5 // pred_region
        %s114 = ssub.s32 %s8, 1
      $region12: #{gae_forward.9} parent=5 // pred_fallthru
        _
      %p115 = scmp.lt.s32.totalorder %s8, 4
      // Predicated region
      $region13: #{gae_forward.9} parent=5 // pred_check
        %p116 = pneg %p115
      $region14: #{gae_forward.9} parent=5 // pred_check_branch
        %118 = sbr.rel (%p116) target = $region16
      $region15: #{gae_forward.9} parent=5 // pred_region
        // Predicated region
        $region17: #{gae_forward.9} parent=15 // pred_check
          %p119 = pneg %p40
        $region18: #{gae_forward.9} parent=15 // pred_check_branch
          %121 = sbr.rel (%p119) target = $region20
        $region19: #{gae_forward.9} parent=15 // pred_region
          %s122 = smul.u32 16, %s15
          %p123 = scmp.lt.s32.totalorder %s122, 31
          %s124 = scalar_select %p123, %s122, 31
          %s125 = smul.addr %s124, 4
          %s126 = scalar_lea.vmem %s0, %s125
          %s127 = smul.u32 16, %s15
        $region20: #{gae_forward.9} parent=15 // pred_fallthru
          _
        // Predicated region
        $region21: #{gae_forward.9} parent=15 // pred_check
          %p128 = pneg %p66
        $region22: #{gae_forward.9} parent=15 // pred_check_branch
          %130 = sbr.rel (%p128) target = $region24
        $region23: #{gae_forward.9} parent=15 // pred_region
          %s131 = smul.u32 16, %s16
          %p132 = scmp.lt.s32.totalorder %s131, 31
          %s133 = scalar_select %p132, %s131, 31
          %s134 = smul.addr %s133, 4
          %s135 = scalar_lea.vmem %s1, %s134
          %s136 = smul.u32 16, %s16
        $region24: #{gae_forward.9} parent=15 // pred_fallthru
          _
      $region16: #{gae_forward.9} parent=5 // pred_fallthru
        _
      %p137 = scmp.le.s32.totalorder 1, %s8
      %p138 = scmp.lt.s32.totalorder %s8, 5
      %p139 = pnand %p137, %p138
      %p140 = pneg %p139
      // Predicated region
      $region25: #{gae_forward.9} parent=5 // pred_check
        _
      $region26: #{gae_forward.9} parent=5 // pred_check_branch
        %142 = sbr.rel (%p139) target = $region28
      $region27: #{gae_forward.9} parent=5 // pred_region
        %s143 = ssub.s32 %s8, 1
        %s144 = smul.u32 16, %s17
        %p145 = scmp.lt.s32.totalorder %s144, 31
        %s146 = scalar_select %p145, %s144, 31
        %s147 = smul.addr %s146, 4
        %s148 = scalar_lea.vmem %s0, %s147
        %p149 = pneg %p46
        %p150 = pneg %p43
        %s151 = smul.u32 16, %s18
        %p152 = scmp.lt.s32.totalorder %s151, 31
        %s153 = scalar_select %p152, %s151, 31
        %s154 = smul.addr %s153, 4
        %s155 = scalar_lea.vmem %s1, %s154
        %p156 = pneg %p72
        %p157 = pneg %p69
        %p158 = pneg %p100
        %p159 = pneg %p97
        %s160 = sand.u32 %s87, 1
        %s161 = sand.u32 %s87, 1
        %s162 = smul.addr %s161, 128
        %s163 = scalar_lea.vmem [#allocation2], %s162
        %s164 = smul.u32 16, %s17
        %p165 = scmp.lt.s32.totalorder %s164, 31
        %s166 = scalar_select %p165, %s164, 31
        %s167 = smul.addr %s166, 4
        %s168 = scalar_lea.vmem %s0, %s167
        %s169 = smul.u32 16, %s17
        %s170 = smul.u32 16, %s18
        %p171 = scmp.lt.s32.totalorder %s170, 31
        %s172 = scalar_select %p171, %s170, 31
        %s173 = smul.addr %s172, 4
        %s174 = scalar_lea.vmem %s1, %s173
        %s175 = smul.u32 16, %s18
        %s176 = smul.u32 16, %s17
        %v178 = vld [vmem:[%s168] sm:$0xf]
        %v179 = vld [vmem:[%s168 + $0x4] sm:$0xf]
        %v180 = vld [vmem:[%s168 + $0x8] sm:$0xf]
        %v181 = vld [vmem:[%s168 + $0xc] sm:$0xf]
        %v182 = vld [vmem:[%s168 + $0x10] sm:$0xf]
        %v183 = vld [vmem:[%s168 + $0x14] sm:$0xf]
        %v184 = vld [vmem:[%s168 + $0x18] sm:$0xf]
        %v185 = vld [vmem:[%s168 + $0x1c] sm:$0xf]
        %v186 = vld [vmem:[%s168 + $0x20] sm:$0xf]
        %v187 = vld [vmem:[%s168 + $0x24] sm:$0xf]
        %v188 = vld [vmem:[%s168 + $0x28] sm:$0xf]
        %v189 = vld [vmem:[%s168 + $0x2c] sm:$0xf]
        %v190 = vld [vmem:[%s168 + $0x30] sm:$0xf]
        %v191 = vld [vmem:[%s168 + $0x34] sm:$0xf]
        %v192 = vld [vmem:[%s168 + $0x38] sm:$0xf]
        %v193 = vld [vmem:[%s168 + $0x3c] sm:$0xf]
        %v194 = vld [vmem:[%s174] sm:$0xf]
        %v195 = vld [vmem:[%s174 + $0x4] sm:$0xf]
        %v196 = vld [vmem:[%s174 + $0x8] sm:$0xf]
        %v197 = vld [vmem:[%s174 + $0xc] sm:$0xf]
        %v198 = vld [vmem:[%s174 + $0x10] sm:$0xf]
        %v199 = vld [vmem:[%s174 + $0x14] sm:$0xf]
        %v200 = vld [vmem:[%s174 + $0x18] sm:$0xf]
        %v201 = vld [vmem:[%s174 + $0x1c] sm:$0xf]
        %v202 = vld [vmem:[%s174 + $0x20] sm:$0xf]
        %v203 = vld [vmem:[%s174 + $0x24] sm:$0xf]
        %v204 = vld [vmem:[%s174 + $0x28] sm:$0xf]
        %v205 = vld [vmem:[%s174 + $0x2c] sm:$0xf]
        %v206 = vld [vmem:[%s174 + $0x30] sm:$0xf]
        %v207 = vld [vmem:[%s174 + $0x34] sm:$0xf]
        %v208 = vld [vmem:[%s174 + $0x38] sm:$0xf]
        %v209 = vld [vmem:[%s174 + $0x3c] sm:$0xf]
        %v226 = vunpack.c.l.b16 %v178
        %v227 = vunpack.c.l.b16 %v179
        %v228 = vunpack.c.l.b16 %v180
        %v229 = vunpack.c.l.b16 %v181
        %v230 = vunpack.c.l.b16 %v182
        %v231 = vunpack.c.l.b16 %v183
        %v232 = vunpack.c.l.b16 %v184
        %v233 = vunpack.c.l.b16 %v185
        %v234 = vunpack.c.l.b16 %v186
        %v235 = vunpack.c.l.b16 %v187
        %v236 = vunpack.c.l.b16 %v188
        %v237 = vunpack.c.l.b16 %v189
        %v238 = vunpack.c.l.b16 %v190
        %v239 = vunpack.c.l.b16 %v191
        %v240 = vunpack.c.l.b16 %v192
        %v241 = vunpack.c.l.b16 %v193
        %v242 = vpack.c.b16 %v227, %v226
        %v243 = vpack.c.b16 %v229, %v228
        %v244 = vpack.c.b16 %v231, %v230
        %v245 = vpack.c.b16 %v233, %v232
        %v246 = vpack.c.b16 %v235, %v234
        %v247 = vpack.c.b16 %v237, %v236
        %v248 = vpack.c.b16 %v239, %v238
        %v249 = vpack.c.b16 %v241, %v240
        %v274 = vunpack.c.l.b16 %v194
        %v275 = vunpack.c.l.b16 %v195
        %v276 = vunpack.c.l.b16 %v196
        %v277 = vunpack.c.l.b16 %v197
        %v278 = vunpack.c.l.b16 %v198
        %v279 = vunpack.c.l.b16 %v199
        %v280 = vunpack.c.l.b16 %v200
        %v281 = vunpack.c.l.b16 %v201
        %v282 = vunpack.c.l.b16 %v202
        %v283 = vunpack.c.l.b16 %v203
        %v284 = vunpack.c.l.b16 %v204
        %v285 = vunpack.c.l.b16 %v205
        %v286 = vunpack.c.l.b16 %v206
        %v287 = vunpack.c.l.b16 %v207
        %v288 = vunpack.c.l.b16 %v208
        %v289 = vunpack.c.l.b16 %v209
        %v290 = vpack.c.b16 %v275, %v274
        %v291 = vpack.c.b16 %v277, %v276
        %v292 = vpack.c.b16 %v279, %v278
        %v293 = vpack.c.b16 %v281, %v280
        %v294 = vpack.c.b16 %v283, %v282
        %v295 = vpack.c.b16 %v285, %v284
        %v296 = vpack.c.b16 %v287, %v286
        %v297 = vpack.c.b16 %v289, %v288
        %306 = vmatprep.subr.bf16.mxu0 0
        %307 = vmatpush1.bf16.xpose.msra.mxu0 %v297
        %308 = vmatprep.subr.bf16.mxu0 0
        %309 = vmatpush1.bf16.xpose.msra.mxu0 %v296
        %310 = vmatprep.subr.bf16.mxu0 0
        %311 = vmatpush1.bf16.xpose.msra.mxu0 %v295
        %312 = vmatprep.subr.bf16.mxu0 0
        %313 = vmatpush1.bf16.xpose.msra.mxu0 %v294
        %314 = vmatprep.subr.bf16.mxu0 0
        %315 = vmatpush1.bf16.xpose.msra.mxu0 %v293
        %316 = vmatprep.subr.bf16.mxu0 0
        %317 = vmatpush1.bf16.xpose.msra.mxu0 %v292
        %318 = vmatprep.subr.bf16.mxu0 0
        %319 = vmatpush1.bf16.xpose.msra.mxu0 %v291
        %320 = vmatprep.subr.bf16.mxu0 0
        %321 = vmatpush1.bf16.xpose.msra.mxu0 %v290
        %322 = vmatprep.subr.bf16.mxu0 0
        %323 = vmatpush2.bf16.xpose.msra.mxu0 0
        %324 = vmatprep.subr.bf16.mxu0 0
        %325 = vmatpush2.bf16.xpose.msra.mxu0 0
        %326 = vmatprep.subr.bf16.mxu0 0
        %327 = vmatpush2.bf16.xpose.msra.mxu0 0
        %328 = vmatprep.subr.bf16.mxu0 0
        %329 = vmatpush2.bf16.xpose.msra.mxu0 0
        %330 = vmatprep.subr.bf16.mxu0 0
        %331 = vmatpush2.bf16.xpose.msra.mxu0 0
        %332 = vmatprep.subr.bf16.mxu0 0
        %333 = vmatpush2.bf16.xpose.msra.mxu0 0
        %334 = vmatprep.subr.bf16.mxu0 0
        %335 = vmatpush2.bf16.xpose.msra.mxu0 0
        %336 = vmatprep.subr.bf16.mxu0 0
        %337 = vmatpush2.bf16.xpose.msra.mxu0 0
        %338 = vmatprep.mubr.bf16.mxu0 0
        %339 = vmatmul.mubr.bf16.gmra.mxu0 %v242
        %v340 = vpop.f32.mrf.mxu0
        %v341 = vadd.f32 0.0, %v340
        %v342 = vpop.f32.mrf.mxu0
        %v343 = vpop.f32.mrf.mxu0
        %v344 = vadd.f32 0.0, %v343
        %v345 = vpop.f32.mrf.mxu0
        %346 = vmatprep.mubr.bf16.mxu0 0
        %347 = vmatmul.mubr.bf16.gmra.mxu0 %v243
        %v348 = vpop.f32.mrf.mxu0
        %v349 = vadd.f32 0.0, %v348
        %v350 = vpop.f32.mrf.mxu0
        %v351 = vpop.f32.mrf.mxu0
        %v352 = vadd.f32 0.0, %v351
        %v353 = vpop.f32.mrf.mxu0
        %354 = vmatprep.mubr.bf16.mxu0 0
        %355 = vmatmul.mubr.bf16.gmra.mxu0 %v244
        %v356 = vpop.f32.mrf.mxu0
        %v357 = vadd.f32 0.0, %v356
        %v358 = vpop.f32.mrf.mxu0
        %v359 = vpop.f32.mrf.mxu0
        %v360 = vadd.f32 0.0, %v359
        %v361 = vpop.f32.mrf.mxu0
        %362 = vmatprep.mubr.bf16.mxu0 0
        %363 = vmatmul.mubr.bf16.gmra.mxu0 %v245
        %v364 = vpop.f32.mrf.mxu0
        %v365 = vadd.f32 0.0, %v364
        %v366 = vpop.f32.mrf.mxu0
        %v367 = vpop.f32.mrf.mxu0
        %v368 = vadd.f32 0.0, %v367
        %v369 = vpop.f32.mrf.mxu0
        %370 = vmatprep.mubr.bf16.mxu0 0
        %371 = vmatmul.mubr.bf16.gmra.mxu0 %v246
        %v372 = vpop.f32.mrf.mxu0
        %v373 = vadd.f32 0.0, %v372
        %v374 = vpop.f32.mrf.mxu0
        %v375 = vpop.f32.mrf.mxu0
        %v376 = vadd.f32 0.0, %v375
        %v377 = vpop.f32.mrf.mxu0
        %378 = vmatprep.mubr.bf16.mxu0 0
        %379 = vmatmul.mubr.bf16.gmra.mxu0 %v247
        %v380 = vpop.f32.mrf.mxu0
        %v381 = vadd.f32 0.0, %v380
        %v382 = vpop.f32.mrf.mxu0
        %v383 = vpop.f32.mrf.mxu0
        %v384 = vadd.f32 0.0, %v383
        %v385 = vpop.f32.mrf.mxu0
        %386 = vmatprep.mubr.bf16.mxu0 0
        %387 = vmatmul.mubr.bf16.gmra.mxu0 %v248
        %v388 = vpop.f32.mrf.mxu0
        %v389 = vadd.f32 0.0, %v388
        %v390 = vpop.f32.mrf.mxu0
        %v391 = vpop.f32.mrf.mxu0
        %v392 = vadd.f32 0.0, %v391
        %v393 = vpop.f32.mrf.mxu0
        %394 = vmatprep.mubr.bf16.mxu0 0
        %395 = vmatmul.mubr.bf16.gmra.mxu0 %v249
        %v396 = vpop.f32.mrf.mxu0
        %v397 = vadd.f32 0.0, %v396
        %v398 = vpop.f32.mrf.mxu0
        %v399 = vpop.f32.mrf.mxu0
        %v400 = vadd.f32 0.0, %v399
        %v401 = vpop.f32.mrf.mxu0
        %402 = vdwg.mxu0
        %v403 = vxor.u32 %v341, 2147483648
        %v404 = vxor.u32 %v344, 2147483648
        %v405 = vxor.u32 %v349, 2147483648
        %v406 = vxor.u32 %v352, 2147483648
        %v407 = vxor.u32 %v357, 2147483648
        %v408 = vxor.u32 %v360, 2147483648
        %v409 = vxor.u32 %v365, 2147483648
        %v410 = vxor.u32 %v368, 2147483648
        %v411 = vxor.u32 %v373, 2147483648
        %v412 = vxor.u32 %v376, 2147483648
        %v413 = vxor.u32 %v381, 2147483648
        %v414 = vxor.u32 %v384, 2147483648
        %v415 = vxor.u32 %v389, 2147483648
        %v416 = vxor.u32 %v392, 2147483648
        %v417 = vxor.u32 %v397, 2147483648
        %v418 = vxor.u32 %v400, 2147483648
        %v419 = vmul.f32 %v403, 1.442695
        %v420 = vpow.pop %v419
        %v421 = vmul.f32 %v404, 1.442695
        %v422 = vpow.pop %v421
        %v423 = vmul.f32 %v405, 1.442695
        %v424 = vpow.pop %v423
        %v425 = vmul.f32 %v406, 1.442695
        %v426 = vpow.pop %v425
        %v427 = vmul.f32 %v407, 1.442695
        %v428 = vpow.pop %v427
        %v429 = vmul.f32 %v408, 1.442695
        %v430 = vpow.pop %v429
        %v431 = vmul.f32 %v409, 1.442695
        %v432 = vpow.pop %v431
        %v433 = vmul.f32 %v410, 1.442695
        %v434 = vpow.pop %v433
        %v435 = vmul.f32 %v411, 1.442695
        %v436 = vpow.pop %v435
        %v437 = vmul.f32 %v412, 1.442695
        %v438 = vpow.pop %v437
        %v439 = vmul.f32 %v413, 1.442695
        %v440 = vpow.pop %v439
        %v441 = vmul.f32 %v414, 1.442695
        %v442 = vpow.pop %v441
        %v443 = vmul.f32 %v415, 1.442695
        %v444 = vpow.pop %v443
        %v445 = vmul.f32 %v416, 1.442695
        %v446 = vpow.pop %v445
        %v447 = vmul.f32 %v417, 1.442695
        %v448 = vpow.pop %v447
        %v449 = vmul.f32 %v418, 1.442695
        %v450 = vpow.pop %v449
        %v451 = vadd.f32 %v420, 1.0
        %v452 = vadd.f32 %v422, 1.0
        %v453 = vadd.f32 %v424, 1.0
        %v454 = vadd.f32 %v426, 1.0
        %v455 = vadd.f32 %v428, 1.0
        %v456 = vadd.f32 %v430, 1.0
        %v457 = vadd.f32 %v432, 1.0
        %v458 = vadd.f32 %v434, 1.0
        %v459 = vadd.f32 %v436, 1.0
        %v460 = vadd.f32 %v438, 1.0
        %v461 = vadd.f32 %v440, 1.0
        %v462 = vadd.f32 %v442, 1.0
        %v463 = vadd.f32 %v444, 1.0
        %v464 = vadd.f32 %v446, 1.0
        %v465 = vadd.f32 %v448, 1.0
        %v466 = vadd.f32 %v450, 1.0
        %v467 = vrcp.pop %v451
        %v468 = vmul.f32 1.0, %v467
        %v469 = vrcp.pop %v452
        %v470 = vmul.f32 1.0, %v469
        %v471 = vrcp.pop %v453
        %v472 = vmul.f32 1.0, %v471
        %v473 = vrcp.pop %v454
        %v474 = vmul.f32 1.0, %v473
        %v475 = vrcp.pop %v455
        %v476 = vmul.f32 1.0, %v475
        %v477 = vrcp.pop %v456
        %v478 = vmul.f32 1.0, %v477
        %v479 = vrcp.pop %v457
        %v480 = vmul.f32 1.0, %v479
        %v481 = vrcp.pop %v458
        %v482 = vmul.f32 1.0, %v481
        %v483 = vrcp.pop %v459
        %v484 = vmul.f32 1.0, %v483
        %v485 = vrcp.pop %v460
        %v486 = vmul.f32 1.0, %v485
        %v487 = vrcp.pop %v461
        %v488 = vmul.f32 1.0, %v487
        %v489 = vrcp.pop %v462
        %v490 = vmul.f32 1.0, %v489
        %v491 = vrcp.pop %v463
        %v492 = vmul.f32 1.0, %v491
        %v493 = vrcp.pop %v464
        %v494 = vmul.f32 1.0, %v493
        %v495 = vrcp.pop %v465
        %v496 = vmul.f32 1.0, %v495
        %v497 = vrcp.pop %v466
        %v498 = vmul.f32 1.0, %v497
        %499 = vst [vmem:[%s163] sm:$0xff] %v468
        %500 = vst [vmem:[%s163 + $0x8] sm:$0xff] %v470
        %501 = vst [vmem:[%s163 + $0x10] sm:$0xff] %v472
        %502 = vst [vmem:[%s163 + $0x18] sm:$0xff] %v474
        %503 = vst [vmem:[%s163 + $0x20] sm:$0xff] %v476
        %504 = vst [vmem:[%s163 + $0x28] sm:$0xff] %v478
        %505 = vst [vmem:[%s163 + $0x30] sm:$0xff] %v480
        %506 = vst [vmem:[%s163 + $0x38] sm:$0xff] %v482
        %507 = vst [vmem:[%s163 + $0x40] sm:$0xff] %v484
        %508 = vst [vmem:[%s163 + $0x48] sm:$0xff] %v486
        %509 = vst [vmem:[%s163 + $0x50] sm:$0xff] %v488
        %510 = vst [vmem:[%s163 + $0x58] sm:$0xff] %v490
        %511 = vst [vmem:[%s163 + $0x60] sm:$0xff] %v492
        %512 = vst [vmem:[%s163 + $0x68] sm:$0xff] %v494
        %513 = vst [vmem:[%s163 + $0x70] sm:$0xff] %v496
        %514 = vst [vmem:[%s163 + $0x78] sm:$0xff] %v498
        %s515 = sand.u32 %s87, 1
        %s516 = sand.u32 %s87, 1
        %s517 = smul.addr %s516, 128
        %s518 = scalar_lea.vmem [#allocation2], %s517
        // Predicated region
        $region29: #{gae_forward.9} parent=27 // pred_check
          %p519 = pneg %p97
        $region30: #{gae_forward.9} parent=27 // pred_check_branch
          %521 = sbr.rel (%p519) target = $region32
        $region31: #{gae_forward.9} parent=27 // pred_region
          %s522 = smul.u32 16, %s17
          %s523 = smul.addr %s522, 2
          %s524 = sadd.s32 %s18, %s523
          %s525 = smul.addr %s524, 8
          %s526 = scalar_lea.vmem %s2, %s525
          // Predicated region
          $region33: #{gae_forward.9} parent=31 // pred_check
            _
          $region34: #{gae_forward.9} parent=31 // pred_check_branch
            %528 = sbr.rel (0) target = $region36
          $region35: #{gae_forward.9} parent=31 // pred_region
            // Predicated region
            $region37: #{gae_forward.9} parent=35 // pred_check
              _
            $region38: #{gae_forward.9} parent=35 // pred_check_branch
              %530 = sbr.rel (0) target = $region40
            $region39: #{gae_forward.9} parent=35 // pred_region
              // Predicated region
              $region52: #{gae_forward.9} parent=39 // pred_check
                _
              $region53: #{gae_forward.9} parent=39 // pred_check_branch
                %576 = sbr.rel (0) target = $region55
              $region54: #{gae_forward.9} parent=39 // pred_region
                loop: start=0, step=1, limit=1
                $region56: #{gae_forward.9} parent=54 // loop_pre_header
                  _
                $region57: #{gae_forward.9} parent=54 // loop_header
                  %s578 = sphi 0, %s582
                  %p579 = scmp.ge.s32.totalorder %s578, 1
                  %s583 = sphi %s518, %s518
                  %s584 = sphi %s526, %s526
                $region58: #{gae_forward.9} parent=54 // loop_header_branch
                  %581 = sbr.rel (%p579) target = $region62
                $region59: #{gae_forward.9} parent=54 // loop_body
                  %v585 = vld [vmem:[%s583] sm:$0xff]
                  %586 = vst [vmem:[%s584] sm:$0xff] %v585
                  %v587 = vld [vmem:[%s583 + $0x8] sm:$0xff]
                  %588 = vst [vmem:[%s584 + $0x10] sm:$0xff] %v587
                  %v589 = vld [vmem:[%s583 + $0x10] sm:$0xff]
                  %590 = vst [vmem:[%s584 + $0x20] sm:$0xff] %v589
                  %v591 = vld [vmem:[%s583 + $0x18] sm:$0xff]
                  %592 = vst [vmem:[%s584 + $0x30] sm:$0xff] %v591
                  %v593 = vld [vmem:[%s583 + $0x20] sm:$0xff]
                  %594 = vst [vmem:[%s584 + $0x40] sm:$0xff] %v593
                  %v595 = vld [vmem:[%s583 + $0x28] sm:$0xff]
                  %596 = vst [vmem:[%s584 + $0x50] sm:$0xff] %v595
                  %v597 = vld [vmem:[%s583 + $0x30] sm:$0xff]
                  %598 = vst [vmem:[%s584 + $0x60] sm:$0xff] %v597
                  %v599 = vld [vmem:[%s583 + $0x38] sm:$0xff]
                  %600 = vst [vmem:[%s584 + $0x70] sm:$0xff] %v599
                  %v601 = vld [vmem:[%s583 + $0x40] sm:$0xff]
                  %602 = vst [vmem:[%s584 + $0x80] sm:$0xff] %v601
                  %v603 = vld [vmem:[%s583 + $0x48] sm:$0xff]
                  %604 = vst [vmem:[%s584 + $0x90] sm:$0xff] %v603
                  %v605 = vld [vmem:[%s583 + $0x50] sm:$0xff]
                  %606 = vst [vmem:[%s584 + $0xa0] sm:$0xff] %v605
                  %v607 = vld [vmem:[%s583 + $0x58] sm:$0xff]
                  %608 = vst [vmem:[%s584 + $0xb0] sm:$0xff] %v607
                  %v609 = vld [vmem:[%s583 + $0x60] sm:$0xff]
                  %610 = vst [vmem:[%s584 + $0xc0] sm:$0xff] %v609
                  %v611 = vld [vmem:[%s583 + $0x68] sm:$0xff]
                  %612 = vst [vmem:[%s584 + $0xd0] sm:$0xff] %v611
                  %v613 = vld [vmem:[%s583 + $0x70] sm:$0xff]
                  %614 = vst [vmem:[%s584 + $0xe0] sm:$0xff] %v613
                  %v615 = vld [vmem:[%s583 + $0x78] sm:$0xff]
                  %616 = vst [vmem:[%s584 + $0xf0] sm:$0xff] %v615
                $region60: #{gae_forward.9} parent=54 // loop_footer
                  %s582 = sadd.s32 1, %s578
                $region61: #{gae_forward.9} parent=54 // loop_footer_branch
                  %577 = sbr.rel target = $region57
                $region62: #{gae_forward.9} parent=54 // loop_exit
                  _
              $region55: #{gae_forward.9} parent=39 // pred_fallthru
                _
              // Predicated region
              $region63: #{gae_forward.9} parent=39 // pred_check
                _
              $region64: #{gae_forward.9} parent=39 // pred_check_branch
                %618 = sbr.rel target = $region66
              $region65: #{gae_forward.9} parent=39 // pred_region
                _
              $region66: #{gae_forward.9} parent=39 // pred_fallthru
                _
            $region40: #{gae_forward.9} parent=35 // pred_fallthru
              _
            // Predicated region
            $region41: #{gae_forward.9} parent=35 // pred_check
              _
            $region42: #{gae_forward.9} parent=35 // pred_check_branch
              %532 = sbr.rel target = $region44
            $region43: #{gae_forward.9} parent=35 // pred_region
              %s534 = ssub.s32 256, 1
              loop: start=0, step=1, limit=1
              $region45: #{gae_forward.9} parent=43 // loop_pre_header
                _
              $region46: #{gae_forward.9} parent=43 // loop_header
                %s536 = sphi 0, %s540
                %p537 = scmp.ge.s32.totalorder %s536, 1
                %s541 = sphi %s518, %s518
                %s542 = sphi %s526, %s526
              $region47: #{gae_forward.9} parent=43 // loop_header_branch
                %539 = sbr.rel (%p537) target = $region51
              $region48: #{gae_forward.9} parent=43 // loop_body
                %v543 = vld [vmem:[%s541] sm:%s534]
                %544 = vst [vmem:[%s542] sm:%s534] %v543
                %v545 = vld [vmem:[%s541 + $0x8] sm:%s534]
                %546 = vst [vmem:[%s542 + $0x10] sm:%s534] %v545
                %v547 = vld [vmem:[%s541 + $0x10] sm:%s534]
                %548 = vst [vmem:[%s542 + $0x20] sm:%s534] %v547
                %v549 = vld [vmem:[%s541 + $0x18] sm:%s534]
                %550 = vst [vmem:[%s542 + $0x30] sm:%s534] %v549
                %v551 = vld [vmem:[%s541 + $0x20] sm:%s534]
                %552 = vst [vmem:[%s542 + $0x40] sm:%s534] %v551
                %v553 = vld [vmem:[%s541 + $0x28] sm:%s534]
                %554 = vst [vmem:[%s542 + $0x50] sm:%s534] %v553
                %v555 = vld [vmem:[%s541 + $0x30] sm:%s534]
                %556 = vst [vmem:[%s542 + $0x60] sm:%s534] %v555
                %v557 = vld [vmem:[%s541 + $0x38] sm:%s534]
                %558 = vst [vmem:[%s542 + $0x70] sm:%s534] %v557
                %v559 = vld [vmem:[%s541 + $0x40] sm:%s534]
                %560 = vst [vmem:[%s542 + $0x80] sm:%s534] %v559
                %v561 = vld [vmem:[%s541 + $0x48] sm:%s534]
                %562 = vst [vmem:[%s542 + $0x90] sm:%s534] %v561
                %v563 = vld [vmem:[%s541 + $0x50] sm:%s534]
                %564 = vst [vmem:[%s542 + $0xa0] sm:%s534] %v563
                %v565 = vld [vmem:[%s541 + $0x58] sm:%s534]
                %566 = vst [vmem:[%s542 + $0xb0] sm:%s534] %v565
                %v567 = vld [vmem:[%s541 + $0x60] sm:%s534]
                %568 = vst [vmem:[%s542 + $0xc0] sm:%s534] %v567
                %v569 = vld [vmem:[%s541 + $0x68] sm:%s534]
                %570 = vst [vmem:[%s542 + $0xd0] sm:%s534] %v569
                %v571 = vld [vmem:[%s541 + $0x70] sm:%s534]
                %572 = vst [vmem:[%s542 + $0xe0] sm:%s534] %v571
                %v573 = vld [vmem:[%s541 + $0x78] sm:%s534]
                %574 = vst [vmem:[%s542 + $0xf0] sm:%s534] %v573
              $region49: #{gae_forward.9} parent=43 // loop_footer
                %s540 = sadd.s32 1, %s536
              $region50: #{gae_forward.9} parent=43 // loop_footer_branch
                %535 = sbr.rel target = $region46
              $region51: #{gae_forward.9} parent=43 // loop_exit
                _
            $region44: #{gae_forward.9} parent=35 // pred_fallthru
              _
          $region36: #{gae_forward.9} parent=31 // pred_fallthru
            _
          %619 = vnop
        $region32: #{gae_forward.9} parent=27 // pred_fallthru
          _
      $region28: #{gae_forward.9} parent=5 // pred_fallthru
        _
      %p620 = scmp.le.s32.totalorder 2, %s8
      // Predicated region
      $region67: #{gae_forward.9} parent=5 // pred_check
        %p621 = pneg %p620
      $region68: #{gae_forward.9} parent=5 // pred_check_branch
        %623 = sbr.rel (%p621) target = $region70
      $region69: #{gae_forward.9} parent=5 // pred_region
        %s624 = ssub.s32 %s8, 2
        // Predicated region
        $region71: #{gae_forward.9} parent=69 // pred_check
          %p625 = pneg %p103
        $region72: #{gae_forward.9} parent=69 // pred_check_branch
          %627 = sbr.rel (%p625) target = $region74
        $region73: #{gae_forward.9} parent=69 // pred_region
          %s628 = sand.u32 %s88, 1
          %s629 = sand.u32 %s88, 1
          %s630 = smul.addr %s629, 128
          %s631 = scalar_lea.vmem [#allocation2], %s630
        $region74: #{gae_forward.9} parent=69 // pred_fallthru
          _
      $region70: #{gae_forward.9} parent=5 // pred_fallthru
        _
    $region6: #{gae_forward.9} parent=1 // loop_footer
      %s12 = sadd.s32 1, %s8
    $region7: #{gae_forward.9} parent=1 // loop_footer_branch
      %7 = sbr.rel target = $region3
    $region8: #{gae_forward.9} parent=1 // loop_exit
      _

</llo_original>
